<compile_context>
chip_gen: v6e
topology: v6e:2x2x1
jax: 0.10.0
libtpu: 0.0.40
codegen_flags: <defaults>
</compile_context>

<pallas_src>
import functools

import jax
import jax.numpy as jnp
from jax import lax
from jax.experimental import pallas as pl
from jax.experimental.pallas import tpu as pltpu

LANE = 128


def _round_up(x, m):
    return (x + m - 1) // m * m


def _vmem_capacity_bytes():
    """Best-effort per-core VMEM capacity with a conservative fallback."""
    try:
        info = pltpu.get_tpu_info()
        for name in ("vmem_capacity_bytes", "vmem_size_bytes", "vmem_bytes"):
            v = getattr(info, name, None)
            if v:
                return int(v)
    except Exception:
        pass
    return 64 * 1024 * 1024          # v7x per-TensorCore size (smallest gen)


# ----------------------------- Pallas kernel --------------------------------
def bilstm_kernel(x_ref,      # (T, tile_n, E)  embedded words, time-major
                  wih_ref,    # (E, 4*Gp)       fused [fwd|bwd] W_ih^T, gate-type major
                  whh_ref,    # (Gp, 4*Gp)      fused W_hh^T acting on [h_f | h_b | 0]
                  b_ref,      # (1, 4*Gp)       fused b_ih + b_hh
                  o_ref,      # (tile_n, Gp)    final state [h_f | h_b | 0]
                  g_ref,      # VMEM (T, tile_n, 4*Gp) scratch: input-projected gates
                  *, hidden):
    T, n, E = x_ref.shape
    G4 = wih_ref.shape[1]
    Gp = G4 // 4
    H = hidden

    wih = wih_ref[...]
    whh = whh_ref[...]
    bias = b_ref[...]

    # Lane l is a forward-direction lane iff (l mod Gp) < H.  Built as an OR of
    # 4 static range checks (no vector integer mod needed).
    lane = lax.broadcasted_iota(jnp.int32, (1, G4), 1)
    is_fwd = lane < H
    for k in range(1, 4):
        is_fwd = is_fwd | ((lane >= k * Gp) & (lane < k * Gp + H))

    # --- hoisted fused input projection (both directions, one weight) --------
    # Slot t holds fwd gates of x[t] and bwd gates of x[T-1-t]; done in
    # (t, T-1-t) pairs so each x[t] is projected exactly once and the serial
    # recurrence below reads a single contiguous slab per step.
    for t in range((T + 1) // 2):
        u = T - 1 - t
        pa = jnp.dot(x_ref[t], wih, preferred_element_type=jnp.float32) + bias
        if u == t:
            g_ref[t] = pa
        else:
            pb = jnp.dot(x_ref[u], wih, preferred_element_type=jnp.float32) + bias
            g_ref[t] = jnp.where(is_fwd, pa, pb)
            g_ref[u] = jnp.where(is_fwd, pb, pa)

    # --- fused bidirectional recurrence (serial critical path) ---------------
    def step(t, carry):
        h, c = carry                                               # (n, Gp) each
        gates = g_ref[t] + jnp.dot(h, whh, preferred_element_type=jnp.float32)
        # PyTorch gate order [i | f | g | o]; every slice is Gp-wide, 128-aligned.
        i_g = jax.nn.sigmoid(gates[:, 0 * Gp:1 * Gp])
        f_g = jax.nn.sigmoid(gates[:, 1 * Gp:2 * Gp])
        g_g = jnp.tanh(gates[:, 2 * Gp:3 * Gp])
        o_g = jax.nn.sigmoid(gates[:, 3 * Gp:4 * Gp])
        c = f_g * c + i_g * g_g
        h = o_g * jnp.tanh(c)
        return h, c

    z = jnp.zeros((n, Gp), jnp.float32)
    # Fully unroll short sentences; cap unroll for long ones (instruction mem).
    h, _ = lax.fori_loop(0, T, step, (z, z), unroll=True if T <= 16 else 8)

    # Lane-dense (tile_n, Gp) store; real columns [:2H] extracted in the wrapper.
    o_ref[...] = h


# ------------------------------- wrapper -------------------------------------
@functools.partial(jax.jit, static_argnames=("batch_size",))
def lstm_sentence_encoder_parallel(word_ids, emb_table, params, *, batch_size):
    """word_ids: (batch, n_sent, sen_len) int32.
    Returns (batch, n_sent, 2 * sen_emb_size) float32."""
    B, S, T = word_ids.shape
    E = emb_table.shape[1]
    H = params["whh_f"].shape[1]
    N = B * S
    Gp = _round_up(2 * H, LANE)     # per-gate-type block: [fwd H | bwd H | pad]
    G4 = 4 * Gp

    # Embedding gather directly into time-major (T, N, E): transpose the tiny
    # int ids, NOT the embedded activation.
    ids_tm = word_ids.transpose(2, 0, 1).reshape(T * N)
    words = jnp.take(emb_table, ids_tm, axis=0).reshape(T, N, E).astype(jnp.float32)

    # --- generation-aware N tiling --------------------------------------------
    vmem_cap = _vmem_capacity_bytes()
    budget = min(24 * 1024 * 1024, vmem_cap // 4)
    per_row = (T * G4 * 4           # gate scratch
               + 2 * T * E * 4      # x double buffer
               + 2 * Gp * 4         # out double buffer
               + 8 * G4 * 4)        # headroom for step temporaries
    tile_n = max(8, min(512, (budget // per_row) // 8 * 8))
    tile_n = min(tile_n, _round_up(N, 8))
    if N >= 16:                     # keep >= 2 grid steps so both v7x TCs work
        tile_n = min(tile_n, max(8, _round_up((N + 1) // 2, 8)))
    N_pad = _round_up(N, tile_n)
    if N_pad != N:
        words = jnp.pad(words, ((0, 0), (0, N_pad - N), (0, 0)))

    # --- build fused, lane-aligned weights -------------------------------------
    # PyTorch layout: W (4H, D) with gate blocks [i|f|g|o] stacked on rows.
    # Kernel layout: 4 gate-type blocks of Gp lanes, each = [fwd(H) | bwd(H) | 0].
    # Padded lanes have zero weight/bias -> i=f=o=0.5, g=0, c stays 0, h stays 0.
    def build_wih(wf, wb):          # -> (E, 4*Gp)
        wf4 = wf.reshape(4, H, E).astype(jnp.float32)
        wb4 = wb.reshape(4, H, E).astype(jnp.float32)
        w = jnp.zeros((4, Gp, E), jnp.float32)
        w = w.at[:, :H, :].set(wf4).at[:, H:2 * H, :].set(wb4)
        return w.reshape(G4, E).T

    def build_whh(wf, wb):          # -> (Gp, 4*Gp); input lanes = [h_f | h_b | 0]
        wf4 = wf.reshape(4, H, H).astype(jnp.float32)
        wb4 = wb.reshape(4, H, H).astype(jnp.float32)
        w = jnp.zeros((4, Gp, Gp), jnp.float32)       # [gate, out_lane, in_lane]
        w = w.at[:, :H, :H].set(wf4).at[:, H:2 * H, H:2 * H].set(wb4)
        return w.transpose(2, 0, 1).reshape(Gp, G4)

    def build_bias():               # -> (1, 4*Gp)
        bf = (params["bih_f"] + params["bhh_f"]).reshape(4, H).astype(jnp.float32)
        bb = (params["bih_b"] + params["bhh_b"]).reshape(4, H).astype(jnp.float32)
        b = jnp.zeros((4, Gp), jnp.float32)
        b = b.at[:, :H].set(bf).at[:, H:2 * H].set(bb)
        return b.reshape(1, G4)

    wih = build_wih(params["wih_f"], params["wih_b"])
    whh = build_whh(params["whh_f"], params["whh_b"])
    bias = build_bias()

    # --- VMEM limit from the actual footprint ----------------------------------
    footprint = (2 * T * tile_n * E * 4          # x double buffer
                 + T * tile_n * G4 * 4           # gate scratch
                 + 2 * tile_n * Gp * 4           # out double buffer
                 + 2 * (E + Gp + 1) * G4 * 4     # weight / bias double buffers
                 + 8 * tile_n * G4 * 4)          # step temporaries headroom
    vmem_limit = max(16 * 1024 * 1024,
                     min(int(footprint * 1.5) + (4 << 20),
                         int(vmem_cap * 0.9)))

    grid = (N_pad // tile_n,)
    hn = pl.pallas_call(
        functools.partial(bilstm_kernel, hidden=H),
        out_shape=jax.ShapeDtypeStruct((N_pad, Gp), jnp.float32),
        grid=grid,
        in_specs=[
            pl.BlockSpec((T, tile_n, E), lambda i: (0, i, 0)),   # x (tiled on N)
            pl.BlockSpec((E, G4), lambda i: (0, 0)),             # W_ih fused
            pl.BlockSpec((Gp, G4), lambda i: (0, 0)),            # W_hh fused
            pl.BlockSpec((1, G4), lambda i: (0, 0)),             # bias fused
        ],
        out_specs=pl.BlockSpec((tile_n, Gp), lambda i: (i, 0)),
        scratch_shapes=[pltpu.VMEM((T, tile_n, G4), jnp.float32)],
        compiler_params=pltpu.CompilerParams(
            dimension_semantics=("parallel",),
            vmem_limit_bytes=vmem_limit),
    )(words, wih, whh, bias)

    # Drop batch padding / pad lanes; columns [:2H] are [h_n_fwd | h_n_bwd].
    out = hn[:N, :2 * H]
    # .reshape(config.batch_size, -1, self.sen_emb_size) with sen_emb_size = 2H
    return out.reshape(batch_size, -1, 2 * H)


# --------------------------- pure-JAX reference -------------------------------
def _reference(word_ids, emb_table, params):
    B, S, T = word_ids.shape
    E = emb_table.shape[1]
    H = params["whh_f"].shape[1]
    N = B * S
    words = jnp.take(emb_table, word_ids.reshape(-1), axis=0).reshape(N, T, E)

    def run_dir(x_seq, wih, whh, bih, bhh):
        def step(carry, x_t):
            h, c = carry
            gates = x_t @ wih.T + bih + h @ whh.T + bhh
            i = jax.nn.sigmoid(gates[:, 0 * H:1 * H])
            f = jax.nn.sigmoid(gates[:, 1 * H:2 * H])
            g = jnp.tanh(gates[:, 2 * H:3 * H])
            o = jax.nn.sigmoid(gates[:, 3 * H:4 * H])
            c = f * c + i * g
            h = o * jnp.tanh(c)
            return (h, c), None

        init = (jnp.zeros((N, H)), jnp.zeros((N, H)))
        (h, _), _ = lax.scan(step, init, jnp.swapaxes(x_seq, 0, 1))
        return h

    hf = run_dir(words, params["wih_f"], params["whh_f"],
                 params["bih_f"], params["bhh_f"])
    hb = run_dir(words[:, ::-1, :], params["wih_b"], params["whh_b"],
                 params["bih_b"], params["bhh_b"])
    return jnp.concatenate([hf, hb], axis=1).reshape(B, -1, 2 * H)


# --------------------------------- main ---------------------------------------
if __name__ == "__main__":
    # config (small, consistent with the module's forward)
    batch_size = 2
    n_sentences = 4
    sen_len = 8            # config.sen_len
    word_emb_size = 32     # config.word_emb_size
    sen_emb_size = 32      # config.sen_emb_size (H); bidirectional => output 2H
    vocab = 16             # padding_idx = vocab - 1

    key = jax.random.PRNGKey(0)
    keys = jax.random.split(key, 10)

    # deterministic parameter init (shapes from nn.Embedding / nn.LSTM)
    emb_table = jax.random.normal(keys[0], (vocab, word_emb_size), jnp.float32) * 0.1
    emb_table = emb_table.at[vocab - 1].set(0.0)   # padding_idx row zeroed

    H, E = sen_emb_size, word_emb_size
    params = {
        "wih_f": jax.random.normal(keys[1], (4 * H, E), jnp.float32) * 0.1,
        "whh_f": jax.random.normal(keys[2], (4 * H, H), jnp.float32) * 0.1,
        "bih_f": jax.random.normal(keys[3], (4 * H,), jnp.float32) * 0.1,
        "bhh_f": jax.random.normal(keys[4], (4 * H,), jnp.float32) * 0.1,
        "wih_b": jax.random.normal(keys[5], (4 * H, E), jnp.float32) * 0.1,
        "whh_b": jax.random.normal(keys[6], (4 * H, H), jnp.float32) * 0.1,
        "bih_b": jax.random.normal(keys[7], (4 * H,), jnp.float32) * 0.1,
        "bhh_b": jax.random.normal(keys[8], (4 * H,), jnp.float32) * 0.1,
    }

    word_ids = jax.random.randint(
        keys[9], (batch_size, n_sentences, sen_len), 0, vocab, dtype=jnp.int32)

    out = lstm_sentence_encoder_parallel(
        word_ids, emb_table, params, batch_size=batch_size)
    out = jax.block_until_ready(out)

    assert out.shape == (batch_size, n_sentences, 2 * sen_emb_size), out.shape

    ref = jax.block_until_ready(_reference(word_ids, emb_table, params))
    assert jnp.allclose(out, ref, atol=5e-5, rtol=5e-5), "mismatch vs JAX reference"

    print("KERNEL_OK")
</pallas_src>

<mosaic_0001>
module attributes {stable_mosaic.version = 11 : i64} {
  func.func @bilstm_kernel(%arg0: i32, %arg1: memref<8x8x32xf32, #tpu.memory_space<vmem>>, %arg2: memref<32x512xf32, #tpu.memory_space<vmem>>, %arg3: memref<128x512xf32, #tpu.memory_space<vmem>>, %arg4: memref<1x512xf32, #tpu.memory_space<vmem>>, %arg5: memref<8x128xf32, #tpu.memory_space<vmem>>, %arg6: memref<8x8x512xf32, #tpu.memory_space<vmem>>) attributes {dimension_semantics = [#tpu.dimension_semantics<parallel>], iteration_bounds = array<i64: 1>, scalar_prefetch = 0 : i64, scratch_operands = 1 : i64, tpu.core_type = #tpu.core_type<tc>, window_params = [{transform_indices = @transform_0, window_bounds = array<i64: 8, 8, 32>}, {pipeline_mode = #tpu.pipeline_mode<synchronous>, transform_indices = @transform_1, window_bounds = array<i64: 32, 512>}, {pipeline_mode = #tpu.pipeline_mode<synchronous>, transform_indices = @transform_2, window_bounds = array<i64: 128, 512>}, {pipeline_mode = #tpu.pipeline_mode<synchronous>, transform_indices = @transform_3, window_bounds = array<i64: 1, 512>}, {transform_indices = @transform_4, window_bounds = array<i64: 8, 128>}]} {
    %c0 = arith.constant 0 : index
    %c0_0 = arith.constant 0 : index
    %0 = vector.load %arg2[%c0, %c0_0] : memref<32x512xf32, #tpu.memory_space<vmem>>, vector<32x512xf32>
    %c0_1 = arith.constant 0 : index
    %c0_2 = arith.constant 0 : index
    %1 = vector.load %arg3[%c0_1, %c0_2] : memref<128x512xf32, #tpu.memory_space<vmem>>, vector<128x512xf32>
    %c0_3 = arith.constant 0 : index
    %c0_4 = arith.constant 0 : index
    %2 = vector.load %arg4[%c0_3, %c0_4] : memref<1x512xf32, #tpu.memory_space<vmem>>, vector<1x512xf32>
    %3 = tpu.iota {dimensions = array<i32: 1>} : vector<1x512xi32>
    %c32_i32 = arith.constant 32 : i32
    %4 = vector.broadcast %c32_i32 : i32 to vector<1x512xi32>
    %5 = arith.cmpi slt, %3, %4 : vector<1x512xi32>
    %c128_i32 = arith.constant 128 : i32
    %6 = vector.broadcast %c128_i32 : i32 to vector<1x512xi32>
    %7 = arith.cmpi sge, %3, %6 : vector<1x512xi32>
    %c160_i32 = arith.constant 160 : i32
    %8 = vector.broadcast %c160_i32 : i32 to vector<1x512xi32>
    %9 = arith.cmpi slt, %3, %8 : vector<1x512xi32>
    %10 = arith.andi %7, %9 : vector<1x512xi1>
    %11 = arith.ori %5, %10 : vector<1x512xi1>
    %c256_i32 = arith.constant 256 : i32
    %12 = vector.broadcast %c256_i32 : i32 to vector<1x512xi32>
    %13 = arith.cmpi sge, %3, %12 : vector<1x512xi32>
    %c288_i32 = arith.constant 288 : i32
    %14 = vector.broadcast %c288_i32 : i32 to vector<1x512xi32>
    %15 = arith.cmpi slt, %3, %14 : vector<1x512xi32>
    %16 = arith.andi %13, %15 : vector<1x512xi1>
    %17 = arith.ori %11, %16 : vector<1x512xi1>
    %c384_i32 = arith.constant 384 : i32
    %18 = vector.broadcast %c384_i32 : i32 to vector<1x512xi32>
    %19 = arith.cmpi sge, %3, %18 : vector<1x512xi32>
    %c416_i32 = arith.constant 416 : i32
    %20 = vector.broadcast %c416_i32 : i32 to vector<1x512xi32>
    %21 = arith.cmpi slt, %3, %20 : vector<1x512xi32>
    %22 = arith.andi %19, %21 : vector<1x512xi1>
    %23 = arith.ori %17, %22 : vector<1x512xi1>
    %c0_5 = arith.constant 0 : index
    %c0_6 = arith.constant 0 : index
    %c0_7 = arith.constant 0 : index
    %24 = vector.load %arg1[%c0_5, %c0_6, %c0_7] : memref<8x8x32xf32, #tpu.memory_space<vmem>>, vector<1x8x32xf32>
    %25 = vector.shape_cast %24 : vector<1x8x32xf32> to vector<8x32xf32>
    %cst = arith.constant dense<0.000000e+00> : vector<8x512xf32>
    %26 = tpu.matmul %25, %0, %cst {dimension_numbers = #tpu.dot_dimension_numbers<[1], [0], [0], [1], [0, 0, 1, 1], [], []>} : vector<8x32xf32>, vector<32x512xf32>, vector<8x512xf32> -> vector<8x512xf32>
    %27 = vector.broadcast %2 : vector<1x512xf32> to vector<8x512xf32>
    %28 = arith.addf %26, %27 : vector<8x512xf32>
    %c7 = arith.constant 7 : index
    %c0_8 = arith.constant 0 : index
    %c0_9 = arith.constant 0 : index
    %29 = vector.load %arg1[%c7, %c0_8, %c0_9] : memref<8x8x32xf32, #tpu.memory_space<vmem>>, vector<1x8x32xf32>
    %30 = vector.shape_cast %29 : vector<1x8x32xf32> to vector<8x32xf32>
    %cst_10 = arith.constant dense<0.000000e+00> : vector<8x512xf32>
    %31 = tpu.matmul %30, %0, %cst_10 {dimension_numbers = #tpu.dot_dimension_numbers<[1], [0], [0], [1], [0, 0, 1, 1], [], []>} : vector<8x32xf32>, vector<32x512xf32>, vector<8x512xf32> -> vector<8x512xf32>
    %32 = vector.broadcast %2 : vector<1x512xf32> to vector<8x512xf32>
    %33 = arith.addf %31, %32 : vector<8x512xf32>
    %34 = vector.shape_cast %23 : vector<1x512xi1> to vector<1x512xi1>
    %35 = vector.broadcast %34 : vector<1x512xi1> to vector<8x512xi1>
    %36 = arith.select %35, %28, %33 : vector<8x512xi1>, vector<8x512xf32>
    %c0_11 = arith.constant 0 : index
    %c0_12 = arith.constant 0 : index
    %c0_13 = arith.constant 0 : index
    %37 = vector.load %arg6[%c0_11, %c0_12, %c0_13] : memref<8x8x512xf32, #tpu.memory_space<vmem>>, vector<1x8x512xf32>
    %38 = vector.shape_cast %37 : vector<1x8x512xf32> to vector<8x512xf32>
    %39 = vector.shape_cast %36 : vector<8x512xf32> to vector<1x8x512xf32>
    tpu.vector_store %arg6[%c0_11, %c0_12, %c0_13], %39 {strides = array<i32>} : memref<8x8x512xf32, #tpu.memory_space<vmem>>, vector<1x8x512xf32>,
    %40 = vector.shape_cast %23 : vector<1x512xi1> to vector<1x512xi1>
    %41 = vector.broadcast %40 : vector<1x512xi1> to vector<8x512xi1>
    %42 = arith.select %41, %33, %28 : vector<8x512xi1>, vector<8x512xf32>
    %c7_14 = arith.constant 7 : index
    %c0_15 = arith.constant 0 : index
    %c0_16 = arith.constant 0 : index
    %43 = vector.load %arg6[%c7_14, %c0_15, %c0_16] : memref<8x8x512xf32, #tpu.memory_space<vmem>>, vector<1x8x512xf32>
    %44 = vector.shape_cast %43 : vector<1x8x512xf32> to vector<8x512xf32>
    %45 = vector.shape_cast %42 : vector<8x512xf32> to vector<1x8x512xf32>
    tpu.vector_store %arg6[%c7_14, %c0_15, %c0_16], %45 {strides = array<i32>} : memref<8x8x512xf32, #tpu.memory_space<vmem>>, vector<1x8x512xf32>,
    %c1 = arith.constant 1 : index
    %c0_17 = arith.constant 0 : index
    %c0_18 = arith.constant 0 : index
    %46 = vector.load %arg1[%c1, %c0_17, %c0_18] : memref<8x8x32xf32, #tpu.memory_space<vmem>>, vector<1x8x32xf32>
    %47 = vector.shape_cast %46 : vector<1x8x32xf32> to vector<8x32xf32>
    %cst_19 = arith.constant dense<0.000000e+00> : vector<8x512xf32>
    %48 = tpu.matmul %47, %0, %cst_19 {dimension_numbers = #tpu.dot_dimension_numbers<[1], [0], [0], [1], [0, 0, 1, 1], [], []>} : vector<8x32xf32>, vector<32x512xf32>, vector<8x512xf32> -> vector<8x512xf32>
    %49 = vector.broadcast %2 : vector<1x512xf32> to vector<8x512xf32>
    %50 = arith.addf %48, %49 : vector<8x512xf32>
    %c6 = arith.constant 6 : index
    %c0_20 = arith.constant 0 : index
    %c0_21 = arith.constant 0 : index
    %51 = vector.load %arg1[%c6, %c0_20, %c0_21] : memref<8x8x32xf32, #tpu.memory_space<vmem>>, vector<1x8x32xf32>
    %52 = vector.shape_cast %51 : vector<1x8x32xf32> to vector<8x32xf32>
    %cst_22 = arith.constant dense<0.000000e+00> : vector<8x512xf32>
    %53 = tpu.matmul %52, %0, %cst_22 {dimension_numbers = #tpu.dot_dimension_numbers<[1], [0], [0], [1], [0, 0, 1, 1], [], []>} : vector<8x32xf32>, vector<32x512xf32>, vector<8x512xf32> -> vector<8x512xf32>
    %54 = vector.broadcast %2 : vector<1x512xf32> to vector<8x512xf32>
    %55 = arith.addf %53, %54 : vector<8x512xf32>
    %56 = vector.shape_cast %23 : vector<1x512xi1> to vector<1x512xi1>
    %57 = vector.broadcast %56 : vector<1x512xi1> to vector<8x512xi1>
    %58 = arith.select %57, %50, %55 : vector<8x512xi1>, vector<8x512xf32>
    %c1_23 = arith.constant 1 : index
    %c0_24 = arith.constant 0 : index
    %c0_25 = arith.constant 0 : index
    %59 = vector.load %arg6[%c1_23, %c0_24, %c0_25] : memref<8x8x512xf32, #tpu.memory_space<vmem>>, vector<1x8x512xf32>
    %60 = vector.shape_cast %59 : vector<1x8x512xf32> to vector<8x512xf32>
    %61 = vector.shape_cast %58 : vector<8x512xf32> to vector<1x8x512xf32>
    tpu.vector_store %arg6[%c1_23, %c0_24, %c0_25], %61 {strides = array<i32>} : memref<8x8x512xf32, #tpu.memory_space<vmem>>, vector<1x8x512xf32>,
    %62 = vector.shape_cast %23 : vector<1x512xi1> to vector<1x512xi1>
    %63 = vector.broadcast %62 : vector<1x512xi1> to vector<8x512xi1>
    %64 = arith.select %63, %55, %50 : vector<8x512xi1>, vector<8x512xf32>
    %c6_26 = arith.constant 6 : index
    %c0_27 = arith.constant 0 : index
    %c0_28 = arith.constant 0 : index
    %65 = vector.load %arg6[%c6_26, %c0_27, %c0_28] : memref<8x8x512xf32, #tpu.memory_space<vmem>>, vector<1x8x512xf32>
    %66 = vector.shape_cast %65 : vector<1x8x512xf32> to vector<8x512xf32>
    %67 = vector.shape_cast %64 : vector<8x512xf32> to vector<1x8x512xf32>
    tpu.vector_store %arg6[%c6_26, %c0_27, %c0_28], %67 {strides = array<i32>} : memref<8x8x512xf32, #tpu.memory_space<vmem>>, vector<1x8x512xf32>,
    %c2 = arith.constant 2 : index
    %c0_29 = arith.constant 0 : index
    %c0_30 = arith.constant 0 : index
    %68 = vector.load %arg1[%c2, %c0_29, %c0_30] : memref<8x8x32xf32, #tpu.memory_space<vmem>>, vector<1x8x32xf32>
    %69 = vector.shape_cast %68 : vector<1x8x32xf32> to vector<8x32xf32>
    %cst_31 = arith.constant dense<0.000000e+00> : vector<8x512xf32>
    %70 = tpu.matmul %69, %0, %cst_31 {dimension_numbers = #tpu.dot_dimension_numbers<[1], [0], [0], [1], [0, 0, 1, 1], [], []>} : vector<8x32xf32>, vector<32x512xf32>, vector<8x512xf32> -> vector<8x512xf32>
    %71 = vector.broadcast %2 : vector<1x512xf32> to vector<8x512xf32>
    %72 = arith.addf %70, %71 : vector<8x512xf32>
    %c5 = arith.constant 5 : index
    %c0_32 = arith.constant 0 : index
    %c0_33 = arith.constant 0 : index
    %73 = vector.load %arg1[%c5, %c0_32, %c0_33] : memref<8x8x32xf32, #tpu.memory_space<vmem>>, vector<1x8x32xf32>
    %74 = vector.shape_cast %73 : vector<1x8x32xf32> to vector<8x32xf32>
    %cst_34 = arith.constant dense<0.000000e+00> : vector<8x512xf32>
    %75 = tpu.matmul %74, %0, %cst_34 {dimension_numbers = #tpu.dot_dimension_numbers<[1], [0], [0], [1], [0, 0, 1, 1], [], []>} : vector<8x32xf32>, vector<32x512xf32>, vector<8x512xf32> -> vector<8x512xf32>
    %76 = vector.broadcast %2 : vector<1x512xf32> to vector<8x512xf32>
    %77 = arith.addf %75, %76 : vector<8x512xf32>
    %78 = vector.shape_cast %23 : vector<1x512xi1> to vector<1x512xi1>
    %79 = vector.broadcast %78 : vector<1x512xi1> to vector<8x512xi1>
    %80 = arith.select %79, %72, %77 : vector<8x512xi1>, vector<8x512xf32>
    %c2_35 = arith.constant 2 : index
    %c0_36 = arith.constant 0 : index
    %c0_37 = arith.constant 0 : index
    %81 = vector.load %arg6[%c2_35, %c0_36, %c0_37] : memref<8x8x512xf32, #tpu.memory_space<vmem>>, vector<1x8x512xf32>
    %82 = vector.shape_cast %81 : vector<1x8x512xf32> to vector<8x512xf32>
    %83 = vector.shape_cast %80 : vector<8x512xf32> to vector<1x8x512xf32>
    tpu.vector_store %arg6[%c2_35, %c0_36, %c0_37], %83 {strides = array<i32>} : memref<8x8x512xf32, #tpu.memory_space<vmem>>, vector<1x8x512xf32>,
    %84 = vector.shape_cast %23 : vector<1x512xi1> to vector<1x512xi1>
    %85 = vector.broadcast %84 : vector<1x512xi1> to vector<8x512xi1>
    %86 = arith.select %85, %77, %72 : vector<8x512xi1>, vector<8x512xf32>
    %c5_38 = arith.constant 5 : index
    %c0_39 = arith.constant 0 : index
    %c0_40 = arith.constant 0 : index
    %87 = vector.load %arg6[%c5_38, %c0_39, %c0_40] : memref<8x8x512xf32, #tpu.memory_space<vmem>>, vector<1x8x512xf32>
    %88 = vector.shape_cast %87 : vector<1x8x512xf32> to vector<8x512xf32>
    %89 = vector.shape_cast %86 : vector<8x512xf32> to vector<1x8x512xf32>
    tpu.vector_store %arg6[%c5_38, %c0_39, %c0_40], %89 {strides = array<i32>} : memref<8x8x512xf32, #tpu.memory_space<vmem>>, vector<1x8x512xf32>,
    %c3 = arith.constant 3 : index
    %c0_41 = arith.constant 0 : index
    %c0_42 = arith.constant 0 : index
    %90 = vector.load %arg1[%c3, %c0_41, %c0_42] : memref<8x8x32xf32, #tpu.memory_space<vmem>>, vector<1x8x32xf32>
    %91 = vector.shape_cast %90 : vector<1x8x32xf32> to vector<8x32xf32>
    %cst_43 = arith.constant dense<0.000000e+00> : vector<8x512xf32>
    %92 = tpu.matmul %91, %0, %cst_43 {dimension_numbers = #tpu.dot_dimension_numbers<[1], [0], [0], [1], [0, 0, 1, 1], [], []>} : vector<8x32xf32>, vector<32x512xf32>, vector<8x512xf32> -> vector<8x512xf32>
    %93 = vector.broadcast %2 : vector<1x512xf32> to vector<8x512xf32>
    %94 = arith.addf %92, %93 : vector<8x512xf32>
    %c4 = arith.constant 4 : index
    %c0_44 = arith.constant 0 : index
    %c0_45 = arith.constant 0 : index
    %95 = vector.load %arg1[%c4, %c0_44, %c0_45] : memref<8x8x32xf32, #tpu.memory_space<vmem>>, vector<1x8x32xf32>
    %96 = vector.shape_cast %95 : vector<1x8x32xf32> to vector<8x32xf32>
    %cst_46 = arith.constant dense<0.000000e+00> : vector<8x512xf32>
    %97 = tpu.matmul %96, %0, %cst_46 {dimension_numbers = #tpu.dot_dimension_numbers<[1], [0], [0], [1], [0, 0, 1, 1], [], []>} : vector<8x32xf32>, vector<32x512xf32>, vector<8x512xf32> -> vector<8x512xf32>
    %98 = vector.broadcast %2 : vector<1x512xf32> to vector<8x512xf32>
    %99 = arith.addf %97, %98 : vector<8x512xf32>
    %100 = vector.shape_cast %23 : vector<1x512xi1> to vector<1x512xi1>
    %101 = vector.broadcast %100 : vector<1x512xi1> to vector<8x512xi1>
    %102 = arith.select %101, %94, %99 : vector<8x512xi1>, vector<8x512xf32>
    %c3_47 = arith.constant 3 : index
    %c0_48 = arith.constant 0 : index
    %c0_49 = arith.constant 0 : index
    %103 = vector.load %arg6[%c3_47, %c0_48, %c0_49] : memref<8x8x512xf32, #tpu.memory_space<vmem>>, vector<1x8x512xf32>
    %104 = vector.shape_cast %103 : vector<1x8x512xf32> to vector<8x512xf32>
    %105 = vector.shape_cast %102 : vector<8x512xf32> to vector<1x8x512xf32>
    tpu.vector_store %arg6[%c3_47, %c0_48, %c0_49], %105 {strides = array<i32>} : memref<8x8x512xf32, #tpu.memory_space<vmem>>, vector<1x8x512xf32>,
    %106 = vector.shape_cast %23 : vector<1x512xi1> to vector<1x512xi1>
    %107 = vector.broadcast %106 : vector<1x512xi1> to vector<8x512xi1>
    %108 = arith.select %107, %99, %94 : vector<8x512xi1>, vector<8x512xf32>
    %c4_50 = arith.constant 4 : index
    %c0_51 = arith.constant 0 : index
    %c0_52 = arith.constant 0 : index
    %109 = vector.load %arg6[%c4_50, %c0_51, %c0_52] : memref<8x8x512xf32, #tpu.memory_space<vmem>>, vector<1x8x512xf32>
    %110 = vector.shape_cast %109 : vector<1x8x512xf32> to vector<8x512xf32>
    %111 = vector.shape_cast %108 : vector<8x512xf32> to vector<1x8x512xf32>
    tpu.vector_store %arg6[%c4_50, %c0_51, %c0_52], %111 {strides = array<i32>} : memref<8x8x512xf32, #tpu.memory_space<vmem>>, vector<1x8x512xf32>,
    %cst_53 = arith.constant 0.000000e+00 : f32
    %112 = vector.broadcast %cst_53 : f32 to vector<8x128xf32>
    %c0_i32 = arith.constant 0 : i32
    %113 = arith.index_cast %c0_i32 : i32 to index
    %c0_54 = arith.constant 0 : index
    %c0_55 = arith.constant 0 : index
    %114 = vector.load %arg6[%113, %c0_54, %c0_55] : memref<8x8x512xf32, #tpu.memory_space<vmem>>, vector<1x8x512xf32>
    %115 = vector.shape_cast %114 : vector<1x8x512xf32> to vector<8x512xf32>
    %cst_56 = arith.constant dense<0.000000e+00> : vector<8x512xf32>
    %116 = tpu.matmul %112, %1, %cst_56 {dimension_numbers = #tpu.dot_dimension_numbers<[1], [0], [0], [1], [0, 0, 1, 1], [], []>} : vector<8x128xf32>, vector<128x512xf32>, vector<8x512xf32> -> vector<8x512xf32>
    %117 = arith.addf %115, %116 : vector<8x512xf32>
    %118 = vector.extract_strided_slice %117 {offsets = [0, 0], sizes = [8, 128], strides = [1, 1]} : vector<8x512xf32> to vector<8x128xf32>
    %119 = arith.negf %118 : vector<8x128xf32>
    %120 = math.exp %119 : vector<8x128xf32>
    %cst_57 = arith.constant 1.000000e+00 : f32
    %121 = vector.broadcast %cst_57 : f32 to vector<8x128xf32>
    %122 = arith.addf %121, %120 : vector<8x128xf32>
    %123 = arith.divf %121, %122 : vector<8x128xf32>
    %124 = vector.extract_strided_slice %117 {offsets = [0, 128], sizes = [8, 128], strides = [1, 1]} : vector<8x512xf32> to vector<8x128xf32>
    %125 = arith.negf %124 : vector<8x128xf32>
    %126 = math.exp %125 : vector<8x128xf32>
    %cst_58 = arith.constant 1.000000e+00 : f32
    %127 = vector.broadcast %cst_58 : f32 to vector<8x128xf32>
    %128 = arith.addf %127, %126 : vector<8x128xf32>
    %129 = arith.divf %127, %128 : vector<8x128xf32>
    %130 = vector.extract_strided_slice %117 {offsets = [0, 256], sizes = [8, 128], strides = [1, 1]} : vector<8x512xf32> to vector<8x128xf32>
    %131 = math.tanh %130 : vector<8x128xf32>
    %132 = vector.extract_strided_slice %117 {offsets = [0, 384], sizes = [8, 128], strides = [1, 1]} : vector<8x512xf32> to vector<8x128xf32>
    %133 = arith.negf %132 : vector<8x128xf32>
    %134 = math.exp %133 : vector<8x128xf32>
    %cst_59 = arith.constant 1.000000e+00 : f32
    %135 = vector.broadcast %cst_59 : f32 to vector<8x128xf32>
    %136 = arith.addf %135, %134 : vector<8x128xf32>
    %137 = arith.divf %135, %136 : vector<8x128xf32>
    %138 = arith.mulf %129, %112 : vector<8x128xf32>
    %139 = arith.mulf %123, %131 : vector<8x128xf32>
    %140 = arith.addf %138, %139 : vector<8x128xf32>
    %141 = math.tanh %140 : vector<8x128xf32>
    %142 = arith.mulf %137, %141 : vector<8x128xf32>
    %c1_i32 = arith.constant 1 : i32
    %143 = arith.index_cast %c1_i32 : i32 to index
    %c0_60 = arith.constant 0 : index
    %c0_61 = arith.constant 0 : index
    %144 = vector.load %arg6[%143, %c0_60, %c0_61] : memref<8x8x512xf32, #tpu.memory_space<vmem>>, vector<1x8x512xf32>
    %145 = vector.shape_cast %144 : vector<1x8x512xf32> to vector<8x512xf32>
    %cst_62 = arith.constant dense<0.000000e+00> : vector<8x512xf32>
    %146 = tpu.matmul %142, %1, %cst_62 {dimension_numbers = #tpu.dot_dimension_numbers<[1], [0], [0], [1], [0, 0, 1, 1], [], []>} : vector<8x128xf32>, vector<128x512xf32>, vector<8x512xf32> -> vector<8x512xf32>
    %147 = arith.addf %145, %146 : vector<8x512xf32>
    %148 = vector.extract_strided_slice %147 {offsets = [0, 0], sizes = [8, 128], strides = [1, 1]} : vector<8x512xf32> to vector<8x128xf32>
    %149 = arith.negf %148 : vector<8x128xf32>
    %150 = math.exp %149 : vector<8x128xf32>
    %cst_63 = arith.constant 1.000000e+00 : f32
    %151 = vector.broadcast %cst_63 : f32 to vector<8x128xf32>
    %152 = arith.addf %151, %150 : vector<8x128xf32>
    %153 = arith.divf %151, %152 : vector<8x128xf32>
    %154 = vector.extract_strided_slice %147 {offsets = [0, 128], sizes = [8, 128], strides = [1, 1]} : vector<8x512xf32> to vector<8x128xf32>
    %155 = arith.negf %154 : vector<8x128xf32>
    %156 = math.exp %155 : vector<8x128xf32>
    %cst_64 = arith.constant 1.000000e+00 : f32
    %157 = vector.broadcast %cst_64 : f32 to vector<8x128xf32>
    %158 = arith.addf %157, %156 : vector<8x128xf32>
    %159 = arith.divf %157, %158 : vector<8x128xf32>
    %160 = vector.extract_strided_slice %147 {offsets = [0, 256], sizes = [8, 128], strides = [1, 1]} : vector<8x512xf32> to vector<8x128xf32>
    %161 = math.tanh %160 : vector<8x128xf32>
    %162 = vector.extract_strided_slice %147 {offsets = [0, 384], sizes = [8, 128], strides = [1, 1]} : vector<8x512xf32> to vector<8x128xf32>
    %163 = arith.negf %162 : vector<8x128xf32>
    %164 = math.exp %163 : vector<8x128xf32>
    %cst_65 = arith.constant 1.000000e+00 : f32
    %165 = vector.broadcast %cst_65 : f32 to vector<8x128xf32>
    %166 = arith.addf %165, %164 : vector<8x128xf32>
    %167 = arith.divf %165, %166 : vector<8x128xf32>
    %168 = arith.mulf %159, %140 : vector<8x128xf32>
    %169 = arith.mulf %153, %161 : vector<8x128xf32>
    %170 = arith.addf %168, %169 : vector<8x128xf32>
    %171 = math.tanh %170 : vector<8x128xf32>
    %172 = arith.mulf %167, %171 : vector<8x128xf32>
    %c2_i32 = arith.constant 2 : i32
    %173 = arith.index_cast %c2_i32 : i32 to index
    %c0_66 = arith.constant 0 : index
    %c0_67 = arith.constant 0 : index
    %174 = vector.load %arg6[%173, %c0_66, %c0_67] : memref<8x8x512xf32, #tpu.memory_space<vmem>>, vector<1x8x512xf32>
    %175 = vector.shape_cast %174 : vector<1x8x512xf32> to vector<8x512xf32>
    %cst_68 = arith.constant dense<0.000000e+00> : vector<8x512xf32>
    %176 = tpu.matmul %172, %1, %cst_68 {dimension_numbers = #tpu.dot_dimension_numbers<[1], [0], [0], [1], [0, 0, 1, 1], [], []>} : vector<8x128xf32>, vector<128x512xf32>, vector<8x512xf32> -> vector<8x512xf32>
    %177 = arith.addf %175, %176 : vector<8x512xf32>
    %178 = vector.extract_strided_slice %177 {offsets = [0, 0], sizes = [8, 128], strides = [1, 1]} : vector<8x512xf32> to vector<8x128xf32>
    %179 = arith.negf %178 : vector<8x128xf32>
    %180 = math.exp %179 : vector<8x128xf32>
    %cst_69 = arith.constant 1.000000e+00 : f32
    %181 = vector.broadcast %cst_69 : f32 to vector<8x128xf32>
    %182 = arith.addf %181, %180 : vector<8x128xf32>
    %183 = arith.divf %181, %182 : vector<8x128xf32>
    %184 = vector.extract_strided_slice %177 {offsets = [0, 128], sizes = [8, 128], strides = [1, 1]} : vector<8x512xf32> to vector<8x128xf32>
    %185 = arith.negf %184 : vector<8x128xf32>
    %186 = math.exp %185 : vector<8x128xf32>
    %cst_70 = arith.constant 1.000000e+00 : f32
    %187 = vector.broadcast %cst_70 : f32 to vector<8x128xf32>
    %188 = arith.addf %187, %186 : vector<8x128xf32>
    %189 = arith.divf %187, %188 : vector<8x128xf32>
    %190 = vector.extract_strided_slice %177 {offsets = [0, 256], sizes = [8, 128], strides = [1, 1]} : vector<8x512xf32> to vector<8x128xf32>
    %191 = math.tanh %190 : vector<8x128xf32>
    %192 = vector.extract_strided_slice %177 {offsets = [0, 384], sizes = [8, 128], strides = [1, 1]} : vector<8x512xf32> to vector<8x128xf32>
    %193 = arith.negf %192 : vector<8x128xf32>
    %194 = math.exp %193 : vector<8x128xf32>
    %cst_71 = arith.constant 1.000000e+00 : f32
    %195 = vector.broadcast %cst_71 : f32 to vector<8x128xf32>
    %196 = arith.addf %195, %194 : vector<8x128xf32>
    %197 = arith.divf %195, %196 : vector<8x128xf32>
    %198 = arith.mulf %189, %170 : vector<8x128xf32>
    %199 = arith.mulf %183, %191 : vector<8x128xf32>
    %200 = arith.addf %198, %199 : vector<8x128xf32>
    %201 = math.tanh %200 : vector<8x128xf32>
    %202 = arith.mulf %197, %201 : vector<8x128xf32>
    %c3_i32 = arith.constant 3 : i32
    %203 = arith.index_cast %c3_i32 : i32 to index
    %c0_72 = arith.constant 0 : index
    %c0_73 = arith.constant 0 : index
    %204 = vector.load %arg6[%203, %c0_72, %c0_73] : memref<8x8x512xf32, #tpu.memory_space<vmem>>, vector<1x8x512xf32>
    %205 = vector.shape_cast %204 : vector<1x8x512xf32> to vector<8x512xf32>
    %cst_74 = arith.constant dense<0.000000e+00> : vector<8x512xf32>
    %206 = tpu.matmul %202, %1, %cst_74 {dimension_numbers = #tpu.dot_dimension_numbers<[1], [0], [0], [1], [0, 0, 1, 1], [], []>} : vector<8x128xf32>, vector<128x512xf32>, vector<8x512xf32> -> vector<8x512xf32>
    %207 = arith.addf %205, %206 : vector<8x512xf32>
    %208 = vector.extract_strided_slice %207 {offsets = [0, 0], sizes = [8, 128], strides = [1, 1]} : vector<8x512xf32> to vector<8x128xf32>
    %209 = arith.negf %208 : vector<8x128xf32>
    %210 = math.exp %209 : vector<8x128xf32>
    %cst_75 = arith.constant 1.000000e+00 : f32
    %211 = vector.broadcast %cst_75 : f32 to vector<8x128xf32>
    %212 = arith.addf %211, %210 : vector<8x128xf32>
    %213 = arith.divf %211, %212 : vector<8x128xf32>
    %214 = vector.extract_strided_slice %207 {offsets = [0, 128], sizes = [8, 128], strides = [1, 1]} : vector<8x512xf32> to vector<8x128xf32>
    %215 = arith.negf %214 : vector<8x128xf32>
    %216 = math.exp %215 : vector<8x128xf32>
    %cst_76 = arith.constant 1.000000e+00 : f32
    %217 = vector.broadcast %cst_76 : f32 to vector<8x128xf32>
    %218 = arith.addf %217, %216 : vector<8x128xf32>
    %219 = arith.divf %217, %218 : vector<8x128xf32>
    %220 = vector.extract_strided_slice %207 {offsets = [0, 256], sizes = [8, 128], strides = [1, 1]} : vector<8x512xf32> to vector<8x128xf32>
    %221 = math.tanh %220 : vector<8x128xf32>
    %222 = vector.extract_strided_slice %207 {offsets = [0, 384], sizes = [8, 128], strides = [1, 1]} : vector<8x512xf32> to vector<8x128xf32>
    %223 = arith.negf %222 : vector<8x128xf32>
    %224 = math.exp %223 : vector<8x128xf32>
    %cst_77 = arith.constant 1.000000e+00 : f32
    %225 = vector.broadcast %cst_77 : f32 to vector<8x128xf32>
    %226 = arith.addf %225, %224 : vector<8x128xf32>
    %227 = arith.divf %225, %226 : vector<8x128xf32>
    %228 = arith.mulf %219, %200 : vector<8x128xf32>
    %229 = arith.mulf %213, %221 : vector<8x128xf32>
    %230 = arith.addf %228, %229 : vector<8x128xf32>
    %231 = math.tanh %230 : vector<8x128xf32>
    %232 = arith.mulf %227, %231 : vector<8x128xf32>
    %c4_i32 = arith.constant 4 : i32
    %233 = arith.index_cast %c4_i32 : i32 to index
    %c0_78 = arith.constant 0 : index
    %c0_79 = arith.constant 0 : index
    %234 = vector.load %arg6[%233, %c0_78, %c0_79] : memref<8x8x512xf32, #tpu.memory_space<vmem>>, vector<1x8x512xf32>
    %235 = vector.shape_cast %234 : vector<1x8x512xf32> to vector<8x512xf32>
    %cst_80 = arith.constant dense<0.000000e+00> : vector<8x512xf32>
    %236 = tpu.matmul %232, %1, %cst_80 {dimension_numbers = #tpu.dot_dimension_numbers<[1], [0], [0], [1], [0, 0, 1, 1], [], []>} : vector<8x128xf32>, vector<128x512xf32>, vector<8x512xf32> -> vector<8x512xf32>
    %237 = arith.addf %235, %236 : vector<8x512xf32>
    %238 = vector.extract_strided_slice %237 {offsets = [0, 0], sizes = [8, 128], strides = [1, 1]} : vector<8x512xf32> to vector<8x128xf32>
    %239 = arith.negf %238 : vector<8x128xf32>
    %240 = math.exp %239 : vector<8x128xf32>
    %cst_81 = arith.constant 1.000000e+00 : f32
    %241 = vector.broadcast %cst_81 : f32 to vector<8x128xf32>
    %242 = arith.addf %241, %240 : vector<8x128xf32>
    %243 = arith.divf %241, %242 : vector<8x128xf32>
    %244 = vector.extract_strided_slice %237 {offsets = [0, 128], sizes = [8, 128], strides = [1, 1]} : vector<8x512xf32> to vector<8x128xf32>
    %245 = arith.negf %244 : vector<8x128xf32>
    %246 = math.exp %245 : vector<8x128xf32>
    %cst_82 = arith.constant 1.000000e+00 : f32
    %247 = vector.broadcast %cst_82 : f32 to vector<8x128xf32>
    %248 = arith.addf %247, %246 : vector<8x128xf32>
    %249 = arith.divf %247, %248 : vector<8x128xf32>
    %250 = vector.extract_strided_slice %237 {offsets = [0, 256], sizes = [8, 128], strides = [1, 1]} : vector<8x512xf32> to vector<8x128xf32>
    %251 = math.tanh %250 : vector<8x128xf32>
    %252 = vector.extract_strided_slice %237 {offsets = [0, 384], sizes = [8, 128], strides = [1, 1]} : vector<8x512xf32> to vector<8x128xf32>
    %253 = arith.negf %252 : vector<8x128xf32>
    %254 = math.exp %253 : vector<8x128xf32>
    %cst_83 = arith.constant 1.000000e+00 : f32
    %255 = vector.broadcast %cst_83 : f32 to vector<8x128xf32>
    %256 = arith.addf %255, %254 : vector<8x128xf32>
    %257 = arith.divf %255, %256 : vector<8x128xf32>
    %258 = arith.mulf %249, %230 : vector<8x128xf32>
    %259 = arith.mulf %243, %251 : vector<8x128xf32>
    %260 = arith.addf %258, %259 : vector<8x128xf32>
    %261 = math.tanh %260 : vector<8x128xf32>
    %262 = arith.mulf %257, %261 : vector<8x128xf32>
    %c5_i32 = arith.constant 5 : i32
    %263 = arith.index_cast %c5_i32 : i32 to index
    %c0_84 = arith.constant 0 : index
    %c0_85 = arith.constant 0 : index
    %264 = vector.load %arg6[%263, %c0_84, %c0_85] : memref<8x8x512xf32, #tpu.memory_space<vmem>>, vector<1x8x512xf32>
    %265 = vector.shape_cast %264 : vector<1x8x512xf32> to vector<8x512xf32>
    %cst_86 = arith.constant dense<0.000000e+00> : vector<8x512xf32>
    %266 = tpu.matmul %262, %1, %cst_86 {dimension_numbers = #tpu.dot_dimension_numbers<[1], [0], [0], [1], [0, 0, 1, 1], [], []>} : vector<8x128xf32>, vector<128x512xf32>, vector<8x512xf32> -> vector<8x512xf32>
    %267 = arith.addf %265, %266 : vector<8x512xf32>
    %268 = vector.extract_strided_slice %267 {offsets = [0, 0], sizes = [8, 128], strides = [1, 1]} : vector<8x512xf32> to vector<8x128xf32>
    %269 = arith.negf %268 : vector<8x128xf32>
    %270 = math.exp %269 : vector<8x128xf32>
    %cst_87 = arith.constant 1.000000e+00 : f32
    %271 = vector.broadcast %cst_87 : f32 to vector<8x128xf32>
    %272 = arith.addf %271, %270 : vector<8x128xf32>
    %273 = arith.divf %271, %272 : vector<8x128xf32>
    %274 = vector.extract_strided_slice %267 {offsets = [0, 128], sizes = [8, 128], strides = [1, 1]} : vector<8x512xf32> to vector<8x128xf32>
    %275 = arith.negf %274 : vector<8x128xf32>
    %276 = math.exp %275 : vector<8x128xf32>
    %cst_88 = arith.constant 1.000000e+00 : f32
    %277 = vector.broadcast %cst_88 : f32 to vector<8x128xf32>
    %278 = arith.addf %277, %276 : vector<8x128xf32>
    %279 = arith.divf %277, %278 : vector<8x128xf32>
    %280 = vector.extract_strided_slice %267 {offsets = [0, 256], sizes = [8, 128], strides = [1, 1]} : vector<8x512xf32> to vector<8x128xf32>
    %281 = math.tanh %280 : vector<8x128xf32>
    %282 = vector.extract_strided_slice %267 {offsets = [0, 384], sizes = [8, 128], strides = [1, 1]} : vector<8x512xf32> to vector<8x128xf32>
    %283 = arith.negf %282 : vector<8x128xf32>
    %284 = math.exp %283 : vector<8x128xf32>
    %cst_89 = arith.constant 1.000000e+00 : f32
    %285 = vector.broadcast %cst_89 : f32 to vector<8x128xf32>
    %286 = arith.addf %285, %284 : vector<8x128xf32>
    %287 = arith.divf %285, %286 : vector<8x128xf32>
    %288 = arith.mulf %279, %260 : vector<8x128xf32>
    %289 = arith.mulf %273, %281 : vector<8x128xf32>
    %290 = arith.addf %288, %289 : vector<8x128xf32>
    %291 = math.tanh %290 : vector<8x128xf32>
    %292 = arith.mulf %287, %291 : vector<8x128xf32>
    %c6_i32 = arith.constant 6 : i32
    %293 = arith.index_cast %c6_i32 : i32 to index
    %c0_90 = arith.constant 0 : index
    %c0_91 = arith.constant 0 : index
    %294 = vector.load %arg6[%293, %c0_90, %c0_91] : memref<8x8x512xf32, #tpu.memory_space<vmem>>, vector<1x8x512xf32>
    %295 = vector.shape_cast %294 : vector<1x8x512xf32> to vector<8x512xf32>
    %cst_92 = arith.constant dense<0.000000e+00> : vector<8x512xf32>
    %296 = tpu.matmul %292, %1, %cst_92 {dimension_numbers = #tpu.dot_dimension_numbers<[1], [0], [0], [1], [0, 0, 1, 1], [], []>} : vector<8x128xf32>, vector<128x512xf32>, vector<8x512xf32> -> vector<8x512xf32>
    %297 = arith.addf %295, %296 : vector<8x512xf32>
    %298 = vector.extract_strided_slice %297 {offsets = [0, 0], sizes = [8, 128], strides = [1, 1]} : vector<8x512xf32> to vector<8x128xf32>
    %299 = arith.negf %298 : vector<8x128xf32>
    %300 = math.exp %299 : vector<8x128xf32>
    %cst_93 = arith.constant 1.000000e+00 : f32
    %301 = vector.broadcast %cst_93 : f32 to vector<8x128xf32>
    %302 = arith.addf %301, %300 : vector<8x128xf32>
    %303 = arith.divf %301, %302 : vector<8x128xf32>
    %304 = vector.extract_strided_slice %297 {offsets = [0, 128], sizes = [8, 128], strides = [1, 1]} : vector<8x512xf32> to vector<8x128xf32>
    %305 = arith.negf %304 : vector<8x128xf32>
    %306 = math.exp %305 : vector<8x128xf32>
    %cst_94 = arith.constant 1.000000e+00 : f32
    %307 = vector.broadcast %cst_94 : f32 to vector<8x128xf32>
    %308 = arith.addf %307, %306 : vector<8x128xf32>
    %309 = arith.divf %307, %308 : vector<8x128xf32>
    %310 = vector.extract_strided_slice %297 {offsets = [0, 256], sizes = [8, 128], strides = [1, 1]} : vector<8x512xf32> to vector<8x128xf32>
    %311 = math.tanh %310 : vector<8x128xf32>
    %312 = vector.extract_strided_slice %297 {offsets = [0, 384], sizes = [8, 128], strides = [1, 1]} : vector<8x512xf32> to vector<8x128xf32>
    %313 = arith.negf %312 : vector<8x128xf32>
    %314 = math.exp %313 : vector<8x128xf32>
    %cst_95 = arith.constant 1.000000e+00 : f32
    %315 = vector.broadcast %cst_95 : f32 to vector<8x128xf32>
    %316 = arith.addf %315, %314 : vector<8x128xf32>
    %317 = arith.divf %315, %316 : vector<8x128xf32>
    %318 = arith.mulf %309, %290 : vector<8x128xf32>
    %319 = arith.mulf %303, %311 : vector<8x128xf32>
    %320 = arith.addf %318, %319 : vector<8x128xf32>
    %321 = math.tanh %320 : vector<8x128xf32>
    %322 = arith.mulf %317, %321 : vector<8x128xf32>
    %c7_i32 = arith.constant 7 : i32
    %323 = arith.index_cast %c7_i32 : i32 to index
    %c0_96 = arith.constant 0 : index
    %c0_97 = arith.constant 0 : index
    %324 = vector.load %arg6[%323, %c0_96, %c0_97] : memref<8x8x512xf32, #tpu.memory_space<vmem>>, vector<1x8x512xf32>
    %325 = vector.shape_cast %324 : vector<1x8x512xf32> to vector<8x512xf32>
    %cst_98 = arith.constant dense<0.000000e+00> : vector<8x512xf32>
    %326 = tpu.matmul %322, %1, %cst_98 {dimension_numbers = #tpu.dot_dimension_numbers<[1], [0], [0], [1], [0, 0, 1, 1], [], []>} : vector<8x128xf32>, vector<128x512xf32>, vector<8x512xf32> -> vector<8x512xf32>
    %327 = arith.addf %325, %326 : vector<8x512xf32>
    %328 = vector.extract_strided_slice %327 {offsets = [0, 0], sizes = [8, 128], strides = [1, 1]} : vector<8x512xf32> to vector<8x128xf32>
    %329 = arith.negf %328 : vector<8x128xf32>
    %330 = math.exp %329 : vector<8x128xf32>
    %cst_99 = arith.constant 1.000000e+00 : f32
    %331 = vector.broadcast %cst_99 : f32 to vector<8x128xf32>
    %332 = arith.addf %331, %330 : vector<8x128xf32>
    %333 = arith.divf %331, %332 : vector<8x128xf32>
    %334 = vector.extract_strided_slice %327 {offsets = [0, 128], sizes = [8, 128], strides = [1, 1]} : vector<8x512xf32> to vector<8x128xf32>
    %335 = arith.negf %334 : vector<8x128xf32>
    %336 = math.exp %335 : vector<8x128xf32>
    %cst_100 = arith.constant 1.000000e+00 : f32
    %337 = vector.broadcast %cst_100 : f32 to vector<8x128xf32>
    %338 = arith.addf %337, %336 : vector<8x128xf32>
    %339 = arith.divf %337, %338 : vector<8x128xf32>
    %340 = vector.extract_strided_slice %327 {offsets = [0, 256], sizes = [8, 128], strides = [1, 1]} : vector<8x512xf32> to vector<8x128xf32>
    %341 = math.tanh %340 : vector<8x128xf32>
    %342 = vector.extract_strided_slice %327 {offsets = [0, 384], sizes = [8, 128], strides = [1, 1]} : vector<8x512xf32> to vector<8x128xf32>
    %343 = arith.negf %342 : vector<8x128xf32>
    %344 = math.exp %343 : vector<8x128xf32>
    %cst_101 = arith.constant 1.000000e+00 : f32
    %345 = vector.broadcast %cst_101 : f32 to vector<8x128xf32>
    %346 = arith.addf %345, %344 : vector<8x128xf32>
    %347 = arith.divf %345, %346 : vector<8x128xf32>
    %348 = arith.mulf %339, %320 : vector<8x128xf32>
    %349 = arith.mulf %333, %341 : vector<8x128xf32>
    %350 = arith.addf %348, %349 : vector<8x128xf32>
    %351 = math.tanh %350 : vector<8x128xf32>
    %352 = arith.mulf %347, %351 : vector<8x128xf32>
    %c8_i32 = arith.constant 8 : i32
    %c0_102 = arith.constant 0 : index
    %c0_103 = arith.constant 0 : index
    %353 = vector.load %arg5[%c0_102, %c0_103] : memref<8x128xf32, #tpu.memory_space<vmem>>, vector<8x128xf32>
    tpu.vector_store %arg5[%c0_102, %c0_103], %352 {strides = array<i32>} : memref<8x128xf32, #tpu.memory_space<vmem>>, vector<8x128xf32>,
    return
  }
  func.func @transform_0(%arg0: i32) -> (i32, i32, i32) {
    %c0_i32 = arith.constant 0 : i32
    %c0_i32_0 = arith.constant 0 : i32
    %c0_i32_1 = arith.constant 0 : i32
    return %c0_i32, %arg0, %c0_i32_0 : i32, i32, i32
  }
  func.func @transform_1(%arg0: i32) -> (i32, i32) {
    %c0_i32 = arith.constant 0 : i32
    %c0_i32_0 = arith.constant 0 : i32
    %c0_i32_1 = arith.constant 0 : i32
    return %c0_i32, %c0_i32_0 : i32, i32
  }
  func.func @transform_2(%arg0: i32) -> (i32, i32) {
    %c0_i32 = arith.constant 0 : i32
    %c0_i32_0 = arith.constant 0 : i32
    %c0_i32_1 = arith.constant 0 : i32
    return %c0_i32, %c0_i32_0 : i32, i32
  }
  func.func @transform_3(%arg0: i32) -> (i32, i32) {
    %c0_i32 = arith.constant 0 : i32
    %c0_i32_0 = arith.constant 0 : i32
    %c0_i32_1 = arith.constant 0 : i32
    return %c0_i32, %c0_i32_0 : i32, i32
  }
  func.func @transform_4(%arg0: i32) -> (i32, i32) {
    %c0_i32 = arith.constant 0 : i32
    %c0_i32_0 = arith.constant 0 : i32
    return %arg0, %c0_i32 : i32, i32
  }
}

</mosaic_0001>

<llo_original>
// kernel: lstm_sentence_encoder_parallel.1
$region0: #{lstm_sentence_encoder_parallel.1}
  #allocation0 [shape = 'u32[]', space=smem, size = 0x4, offset = 0x4, fixed_abs, tag = 'smem constant byte address 0x4 - core index']
  #allocation1 [shape = 'u32[144,128]{1,0:T(1,128)}', space=vmem, size = 0x12000, scoped, tag = 'internal scratch']
  #allocation2 [shape = 'f32[8,8,512]{2,1,0:T(8,128)}', space=vmem, size = 0x20000, scoped, tag = 'scratch operand']
  %s0 = inlined_call_operand.vmem [shape: f32[8,8,32], index: 0, kind: input, shape index: {}]
  %s1 = inlined_call_operand.vmem [shape: f32[32,512], index: 1, kind: input, shape index: {}]
  %s2 = inlined_call_operand.vmem [shape: f32[128,512], index: 2, kind: input, shape index: {}]
  %s3 = inlined_call_operand.vmem [shape: f32[1,512], index: 3, kind: input, shape index: {}]
  %s4 = inlined_call_operand.hbm [shape: f32[8,128], index: 4, kind: output, shape index: {}]
  %s5 = sld [smem:[#allocation0]]
  $region26: #{lstm_sentence_encoder_parallel.1} parent=0
    _
  %s7 = ssub.s32 1, %s5
  %s8 = scalar_select 0, %s7, %s5
  $region1: #{lstm_sentence_encoder_parallel.1} parent=0
    #allocation3 [shape = 'u8[4096]{0}', space=vmem, size = 0x1000, scoped, tag = 'output window, operand 0, single buffered']
    #allocation4 [shape = 's32[1]{0}', space=sflag, size = 0x4, scoped, tag = 'scoped memory for lstm_sentence_encoder_parallel.1']
    %9 = vsyncpa [#allocation4], 0
    // Predicated region
    $region2: #{lstm_sentence_encoder_parallel.1} parent=1 // pred_check
      _
    $region3: #{lstm_sentence_encoder_parallel.1} parent=1 // pred_check_branch
      %11 = sbr.rel (0) target = $region5
    $region4: #{lstm_sentence_encoder_parallel.1} parent=1 // pred_region
      _
    $region5: #{lstm_sentence_encoder_parallel.1} parent=1 // pred_fallthru
      _
    // Predicated region
    $region6: #{lstm_sentence_encoder_parallel.1} parent=1 // pred_check
      _
    $region7: #{lstm_sentence_encoder_parallel.1} parent=1 // pred_check_branch
      %13 = sbr.rel (0) target = $region9
    $region8: #{lstm_sentence_encoder_parallel.1} parent=1 // pred_region
      _
    $region9: #{lstm_sentence_encoder_parallel.1} parent=1 // pred_fallthru
      _
    // Predicated region
    $region10: #{lstm_sentence_encoder_parallel.1} parent=1 // pred_check
      _
    $region11: #{lstm_sentence_encoder_parallel.1} parent=1 // pred_check_branch
      %15 = sbr.rel (0) target = $region13
    $region12: #{lstm_sentence_encoder_parallel.1} parent=1 // pred_region
      _
    $region13: #{lstm_sentence_encoder_parallel.1} parent=1 // pred_fallthru
      _
    // Predicated region
    $region14: #{lstm_sentence_encoder_parallel.1} parent=1 // pred_check
      _
    $region15: #{lstm_sentence_encoder_parallel.1} parent=1 // pred_check_branch
      %17 = sbr.rel (0) target = $region17
    $region16: #{lstm_sentence_encoder_parallel.1} parent=1 // pred_region
      _
    $region17: #{lstm_sentence_encoder_parallel.1} parent=1 // pred_fallthru
      _
    %v18 = vld [vmem:[%s1] sm:$0xff]
    %v19 = vld [vmem:[%s1 + $0x8] sm:$0xff]
    %v20 = vld [vmem:[%s1 + $0x10] sm:$0xff]
    %v21 = vld [vmem:[%s1 + $0x18] sm:$0xff]
    %v22 = vld [vmem:[%s1 + $0x20] sm:$0xff]
    %v23 = vld [vmem:[%s1 + $0x28] sm:$0xff]
    %v24 = vld [vmem:[%s1 + $0x30] sm:$0xff]
    %v25 = vld [vmem:[%s1 + $0x38] sm:$0xff]
    %v26 = vld [vmem:[%s1 + $0x40] sm:$0xff]
    %v27 = vld [vmem:[%s1 + $0x48] sm:$0xff]
    %v28 = vld [vmem:[%s1 + $0x50] sm:$0xff]
    %v29 = vld [vmem:[%s1 + $0x58] sm:$0xff]
    %v30 = vld [vmem:[%s1 + $0x60] sm:$0xff]
    %v31 = vld [vmem:[%s1 + $0x68] sm:$0xff]
    %v32 = vld [vmem:[%s1 + $0x70] sm:$0xff]
    %v33 = vld [vmem:[%s1 + $0x78] sm:$0xff]
    %v34 = vld [vmem:[%s2] sm:$0xff]
    %v35 = vld [vmem:[%s2 + $0x8] sm:$0xff]
    %v36 = vld [vmem:[%s2 + $0x10] sm:$0xff]
    %v37 = vld [vmem:[%s2 + $0x18] sm:$0xff]
    %v38 = vld [vmem:[%s2 + $0x20] sm:$0xff]
    %v39 = vld [vmem:[%s2 + $0x28] sm:$0xff]
    %v40 = vld [vmem:[%s2 + $0x30] sm:$0xff]
    %v41 = vld [vmem:[%s2 + $0x38] sm:$0xff]
    %v42 = vld [vmem:[%s2 + $0x40] sm:$0xff]
    %v43 = vld [vmem:[%s2 + $0x48] sm:$0xff]
    %v44 = vld [vmem:[%s2 + $0x50] sm:$0xff]
    %v45 = vld [vmem:[%s2 + $0x58] sm:$0xff]
    %v46 = vld [vmem:[%s2 + $0x60] sm:$0xff]
    %v47 = vld [vmem:[%s2 + $0x68] sm:$0xff]
    %v48 = vld [vmem:[%s2 + $0x70] sm:$0xff]
    %v49 = vld [vmem:[%s2 + $0x78] sm:$0xff]
    %v50 = vld [vmem:[%s2 + $0x80] sm:$0xff]
    %v51 = vld [vmem:[%s2 + $0x88] sm:$0xff]
    %v52 = vld [vmem:[%s2 + $0x90] sm:$0xff]
    %v53 = vld [vmem:[%s2 + $0x98] sm:$0xff]
    %v54 = vld [vmem:[%s2 + $0xa0] sm:$0xff]
    %v55 = vld [vmem:[%s2 + $0xa8] sm:$0xff]
    %v56 = vld [vmem:[%s2 + $0xb0] sm:$0xff]
    %v57 = vld [vmem:[%s2 + $0xb8] sm:$0xff]
    %v58 = vld [vmem:[%s2 + $0xc0] sm:$0xff]
    %v59 = vld [vmem:[%s2 + $0xc8] sm:$0xff]
    %v60 = vld [vmem:[%s2 + $0xd0] sm:$0xff]
    %v61 = vld [vmem:[%s2 + $0xd8] sm:$0xff]
    %v62 = vld [vmem:[%s2 + $0xe0] sm:$0xff]
    %v63 = vld [vmem:[%s2 + $0xe8] sm:$0xff]
    %v64 = vld [vmem:[%s2 + $0xf0] sm:$0xff]
    %v65 = vld [vmem:[%s2 + $0xf8] sm:$0xff]
    %v66 = vld [vmem:[%s2 + $0x100] sm:$0xff]
    %v67 = vld [vmem:[%s2 + $0x108] sm:$0xff]
    %v68 = vld [vmem:[%s2 + $0x110] sm:$0xff]
    %v69 = vld [vmem:[%s2 + $0x118] sm:$0xff]
    %v70 = vld [vmem:[%s2 + $0x120] sm:$0xff]
    %v71 = vld [vmem:[%s2 + $0x128] sm:$0xff]
    %v72 = vld [vmem:[%s2 + $0x130] sm:$0xff]
    %v73 = vld [vmem:[%s2 + $0x138] sm:$0xff]
    %v74 = vld [vmem:[%s2 + $0x140] sm:$0xff]
    %v75 = vld [vmem:[%s2 + $0x148] sm:$0xff]
    %v76 = vld [vmem:[%s2 + $0x150] sm:$0xff]
    %v77 = vld [vmem:[%s2 + $0x158] sm:$0xff]
    %v78 = vld [vmem:[%s2 + $0x160] sm:$0xff]
    %v79 = vld [vmem:[%s2 + $0x168] sm:$0xff]
    %v80 = vld [vmem:[%s2 + $0x170] sm:$0xff]
    %v81 = vld [vmem:[%s2 + $0x178] sm:$0xff]
    %v82 = vld [vmem:[%s2 + $0x180] sm:$0xff]
    %v83 = vld [vmem:[%s2 + $0x188] sm:$0xff]
    %v84 = vld [vmem:[%s2 + $0x190] sm:$0xff]
    %v85 = vld [vmem:[%s2 + $0x198] sm:$0xff]
    %v86 = vld [vmem:[%s2 + $0x1a0] sm:$0xff]
    %v87 = vld [vmem:[%s2 + $0x1a8] sm:$0xff]
    %v88 = vld [vmem:[%s2 + $0x1b0] sm:$0xff]
    %v89 = vld [vmem:[%s2 + $0x1b8] sm:$0xff]
    %v90 = vld [vmem:[%s2 + $0x1c0] sm:$0xff]
    %v91 = vld [vmem:[%s2 + $0x1c8] sm:$0xff]
    %v92 = vld [vmem:[%s2 + $0x1d0] sm:$0xff]
    %v93 = vld [vmem:[%s2 + $0x1d8] sm:$0xff]
    %v94 = vld [vmem:[%s2 + $0x1e0] sm:$0xff]
    %v95 = vld [vmem:[%s2 + $0x1e8] sm:$0xff]
    %v96 = vld [vmem:[%s2 + $0x1f0] sm:$0xff]
    %v97 = vld [vmem:[%s2 + $0x1f8] sm:$0xff]
    %v98 = vld [vmem:[%s3] sm:$0xf]
    %v99 = vlaneseq
    %v100 = vand.u32 %v99, 127
    %v101 = vadd.s32 %v100, 128
    %v102 = vadd.s32 %v100, 256
    %v103 = vadd.s32 %v100, 384
    %vm104 = vcmp.lt.s32.totalorder %v100, 32
    %vm105 = vcmp.lt.s32.totalorder %v101, 32
    %vm106 = vcmp.lt.s32.totalorder %v102, 32
    %vm107 = vcmp.lt.s32.totalorder %v103, 32
    %vm108 = vcmp.ge.s32.totalorder %v100, 128
    %vm109 = vcmp.ge.s32.totalorder %v101, 128
    %vm110 = vcmp.ge.s32.totalorder %v102, 128
    %vm111 = vcmp.ge.s32.totalorder %v103, 128
    %vm112 = vcmp.lt.s32.totalorder %v100, 160
    %vm113 = vcmp.lt.s32.totalorder %v101, 160
    %vm114 = vcmp.lt.s32.totalorder %v102, 160
    %vm115 = vcmp.lt.s32.totalorder %v103, 160
    %vm116 = vmand %vm108, %vm112
    %vm117 = vmand %vm109, %vm113
    %vm118 = vmand %vm110, %vm114
    %vm119 = vmand %vm111, %vm115
    %vm120 = vmor %vm104, %vm116
    %vm121 = vmor %vm105, %vm117
    %vm122 = vmor %vm106, %vm118
    %vm123 = vmor %vm107, %vm119
    %vm124 = vcmp.ge.s32.totalorder %v100, 256
    %vm125 = vcmp.ge.s32.totalorder %v101, 256
    %vm126 = vcmp.ge.s32.totalorder %v102, 256
    %vm127 = vcmp.ge.s32.totalorder %v103, 256
    %vm128 = vcmp.lt.s32.totalorder %v100, 288
    %vm129 = vcmp.lt.s32.totalorder %v101, 288
    %vm130 = vcmp.lt.s32.totalorder %v102, 288
    %vm131 = vcmp.lt.s32.totalorder %v103, 288
    %vm132 = vmand %vm124, %vm128
    %vm133 = vmand %vm125, %vm129
    %vm134 = vmand %vm126, %vm130
    %vm135 = vmand %vm127, %vm131
    %vm136 = vmor %vm120, %vm132
    %vm137 = vmor %vm121, %vm133
    %vm138 = vmor %vm122, %vm134
    %vm139 = vmor %vm123, %vm135
    %vm140 = vcmp.ge.s32.totalorder %v100, 384
    %vm141 = vcmp.ge.s32.totalorder %v101, 384
    %vm142 = vcmp.ge.s32.totalorder %v102, 384
    %vm143 = vcmp.ge.s32.totalorder %v103, 384
    %vm144 = vcmp.lt.s32.totalorder %v100, 416
    %vm145 = vcmp.lt.s32.totalorder %v101, 416
    %vm146 = vcmp.lt.s32.totalorder %v102, 416
    %vm147 = vcmp.lt.s32.totalorder %v103, 416
    %vm148 = vmand %vm140, %vm144
    %vm149 = vmand %vm141, %vm145
    %vm150 = vmand %vm142, %vm146
    %vm151 = vmand %vm143, %vm147
    %vm152 = vmor %vm136, %vm148
    %vm153 = vmor %vm137, %vm149
    %vm154 = vmor %vm138, %vm150
    %vm155 = vmor %vm139, %vm151
    %v156 = vld [vmem:[%s0] sm:$0xff]
    %v158 = vlaneseq
    %v159 = vshrl.u32 %v158, 7
    %v160 = vsub.s32 0, %v159
    %v161 = vrot.slane %v98, %v160
    %v162 = vlaneseq
    %v163 = vshrl.u32 %v162, 7
    %v164 = vsub.s32 1, %v163
    %v165 = vrot.slane %v98, %v164
    %v166 = vlaneseq
    %v167 = vshrl.u32 %v166, 7
    %v168 = vsub.s32 2, %v167
    %v169 = vrot.slane %v98, %v168
    %v170 = vlaneseq
    %v171 = vshrl.u32 %v170, 7
    %v172 = vsub.s32 3, %v171
    %v173 = vrot.slane %v98, %v172
    %vm178 = vcmask 261120
    %v180 = vsel %vm178, %v156, 0
    %182 = vmatprep.subr.mxu0 0.0
    %183 = vmatpush1.msra.mxu0 0.0
    %184 = vmatprep.subr.mxu0 0.0
    %185 = vmatpush1.msra.mxu0 0.0
    %186 = vmatprep.subr.mxu0 0.0
    %187 = vmatpush1.msra.mxu0 0.0
    %188 = vmatprep.subr.mxu0 0.0
    %189 = vmatpush1.msra.mxu0 0.0
    %190 = vmatprep.subr.mxu0 0.0
    %191 = vmatpush1.msra.mxu0 0.0
    %192 = vmatprep.subr.mxu0 0.0
    %193 = vmatpush1.msra.mxu0 0.0
    %194 = vmatprep.subr.mxu0 0.0
    %195 = vmatpush1.msra.mxu0 0.0
    %196 = vmatprep.subr.mxu0 0.0
    %197 = vmatpush1.msra.mxu0 0.0
    %198 = vmatprep.subr.mxu0 0.0
    %199 = vmatpush1.msra.mxu0 0.0
    %200 = vmatprep.subr.mxu0 0.0
    %201 = vmatpush1.msra.mxu0 0.0
    %202 = vmatprep.subr.mxu0 0.0
    %203 = vmatpush1.msra.mxu0 0.0
    %204 = vmatprep.subr.mxu0 0.0
    %205 = vmatpush1.msra.mxu0 0.0
    %206 = vmatprep.subr.mxu0 %v31
    %207 = vmatpush1.msra.mxu0 %v30
    %208 = vmatprep.subr.mxu0 %v27
    %209 = vmatpush1.msra.mxu0 %v26
    %210 = vmatprep.subr.mxu0 %v23
    %211 = vmatpush1.msra.mxu0 %v22
    %212 = vmatprep.subr.mxu0 %v19
    %213 = vmatpush1.msra.mxu0 %v18
    %214 = vmatprep.subr.mxu0 0.0
    %215 = vmatpush2.msra.mxu0 0.0
    %216 = vmatprep.subr.mxu0 0.0
    %217 = vmatpush2.msra.mxu0 0.0
    %218 = vmatprep.subr.mxu0 0.0
    %219 = vmatpush2.msra.mxu0 0.0
    %220 = vmatprep.subr.mxu0 0.0
    %221 = vmatpush2.msra.mxu0 0.0
    %222 = vmatprep.subr.mxu0 0.0
    %223 = vmatpush2.msra.mxu0 0.0
    %224 = vmatprep.subr.mxu0 0.0
    %225 = vmatpush2.msra.mxu0 0.0
    %226 = vmatprep.subr.mxu0 0.0
    %227 = vmatpush2.msra.mxu0 0.0
    %228 = vmatprep.subr.mxu0 0.0
    %229 = vmatpush2.msra.mxu0 0.0
    %230 = vmatprep.subr.mxu0 0.0
    %231 = vmatpush2.msra.mxu0 0.0
    %232 = vmatprep.subr.mxu0 0.0
    %233 = vmatpush2.msra.mxu0 0.0
    %234 = vmatprep.subr.mxu0 0.0
    %235 = vmatpush2.msra.mxu0 0.0
    %236 = vmatprep.subr.mxu0 0.0
    %237 = vmatpush2.msra.mxu0 0.0
    %238 = vmatprep.subr.mxu0 0.0
    %239 = vmatpush2.msra.mxu0 0.0
    %240 = vmatprep.subr.mxu0 0.0
    %241 = vmatpush2.msra.mxu0 0.0
    %242 = vmatprep.subr.mxu0 0.0
    %243 = vmatpush2.msra.mxu0 0.0
    %244 = vmatprep.subr.mxu0 0.0
    %245 = vmatpush2.msra.mxu0 0.0
    %246 = vmatprep.mubr.f32.mxu0 0.0
    %247 = vmatmul.mubr.f32.gmra.mxu0 %v180
    %v248 = vpop.f32.mrf.mxu0
    %v249 = vadd.f32 %v161, %v248
    %v250 = vpop.f32.mrf.mxu0
    %v251 = vadd.f32 %v165, %v250
    %252 = vdwg.mxu0
    %253 = vmatprep.subr.mxu0 0.0
    %254 = vmatpush1.msra.mxu0 0.0
    %255 = vmatprep.subr.mxu0 0.0
    %256 = vmatpush1.msra.mxu0 0.0
    %257 = vmatprep.subr.mxu0 0.0
    %258 = vmatpush1.msra.mxu0 0.0
    %259 = vmatprep.subr.mxu0 0.0
    %260 = vmatpush1.msra.mxu0 0.0
    %261 = vmatprep.subr.mxu0 0.0
    %262 = vmatpush1.msra.mxu0 0.0
    %263 = vmatprep.subr.mxu0 0.0
    %264 = vmatpush1.msra.mxu0 0.0
    %265 = vmatprep.subr.mxu0 0.0
    %266 = vmatpush1.msra.mxu0 0.0
    %267 = vmatprep.subr.mxu0 0.0
    %268 = vmatpush1.msra.mxu0 0.0
    %269 = vmatprep.subr.mxu0 0.0
    %270 = vmatpush1.msra.mxu0 0.0
    %271 = vmatprep.subr.mxu0 0.0
    %272 = vmatpush1.msra.mxu0 0.0
    %273 = vmatprep.subr.mxu0 0.0
    %274 = vmatpush1.msra.mxu0 0.0
    %275 = vmatprep.subr.mxu0 0.0
    %276 = vmatpush1.msra.mxu0 0.0
    %277 = vmatprep.subr.mxu0 %v33
    %278 = vmatpush1.msra.mxu0 %v32
    %279 = vmatprep.subr.mxu0 %v29
    %280 = vmatpush1.msra.mxu0 %v28
    %281 = vmatprep.subr.mxu0 %v25
    %282 = vmatpush1.msra.mxu0 %v24
    %283 = vmatprep.subr.mxu0 %v21
    %284 = vmatpush1.msra.mxu0 %v20
    %285 = vmatprep.subr.mxu0 0.0
    %286 = vmatpush2.msra.mxu0 0.0
    %287 = vmatprep.subr.mxu0 0.0
    %288 = vmatpush2.msra.mxu0 0.0
    %289 = vmatprep.subr.mxu0 0.0
    %290 = vmatpush2.msra.mxu0 0.0
    %291 = vmatprep.subr.mxu0 0.0
    %292 = vmatpush2.msra.mxu0 0.0
    %293 = vmatprep.subr.mxu0 0.0
    %294 = vmatpush2.msra.mxu0 0.0
    %295 = vmatprep.subr.mxu0 0.0
    %296 = vmatpush2.msra.mxu0 0.0
    %297 = vmatprep.subr.mxu0 0.0
    %298 = vmatpush2.msra.mxu0 0.0
    %299 = vmatprep.subr.mxu0 0.0
    %300 = vmatpush2.msra.mxu0 0.0
    %301 = vmatprep.subr.mxu0 0.0
    %302 = vmatpush2.msra.mxu0 0.0
    %303 = vmatprep.subr.mxu0 0.0
    %304 = vmatpush2.msra.mxu0 0.0
    %305 = vmatprep.subr.mxu0 0.0
    %306 = vmatpush2.msra.mxu0 0.0
    %307 = vmatprep.subr.mxu0 0.0
    %308 = vmatpush2.msra.mxu0 0.0
    %309 = vmatprep.subr.mxu0 0.0
    %310 = vmatpush2.msra.mxu0 0.0
    %311 = vmatprep.subr.mxu0 0.0
    %312 = vmatpush2.msra.mxu0 0.0
    %313 = vmatprep.subr.mxu0 0.0
    %314 = vmatpush2.msra.mxu0 0.0
    %315 = vmatprep.subr.mxu0 0.0
    %316 = vmatpush2.msra.mxu0 0.0
    %317 = vmatprep.mubr.f32.mxu0 0.0
    %318 = vmatmul.mubr.f32.gmra.mxu0 %v180
    %v319 = vpop.f32.mrf.mxu0
    %v320 = vadd.f32 %v169, %v319
    %v321 = vpop.f32.mrf.mxu0
    %v322 = vadd.f32 %v173, %v321
    %323 = vdwg.mxu0
    %s324 = scalar_lea.vmem %s0, 56
    %v325 = vld [vmem:[%s324] sm:$0xff]
    %v327 = vsel %vm178, %v325, 0
    %329 = vmatprep.subr.mxu0 0.0
    %330 = vmatpush1.msra.mxu0 0.0
    %331 = vmatprep.subr.mxu0 0.0
    %332 = vmatpush1.msra.mxu0 0.0
    %333 = vmatprep.subr.mxu0 0.0
    %334 = vmatpush1.msra.mxu0 0.0
    %335 = vmatprep.subr.mxu0 0.0
    %336 = vmatpush1.msra.mxu0 0.0
    %337 = vmatprep.subr.mxu0 0.0
    %338 = vmatpush1.msra.mxu0 0.0
    %339 = vmatprep.subr.mxu0 0.0
    %340 = vmatpush1.msra.mxu0 0.0
    %341 = vmatprep.subr.mxu0 0.0
    %342 = vmatpush1.msra.mxu0 0.0
    %343 = vmatprep.subr.mxu0 0.0
    %344 = vmatpush1.msra.mxu0 0.0
    %345 = vmatprep.subr.mxu0 0.0
    %346 = vmatpush1.msra.mxu0 0.0
    %347 = vmatprep.subr.mxu0 0.0
    %348 = vmatpush1.msra.mxu0 0.0
    %349 = vmatprep.subr.mxu0 0.0
    %350 = vmatpush1.msra.mxu0 0.0
    %351 = vmatprep.subr.mxu0 0.0
    %352 = vmatpush1.msra.mxu0 0.0
    %353 = vmatprep.subr.mxu0 %v31
    %354 = vmatpush1.msra.mxu0 %v30
    %355 = vmatprep.subr.mxu0 %v27
    %356 = vmatpush1.msra.mxu0 %v26
    %357 = vmatprep.subr.mxu0 %v23
    %358 = vmatpush1.msra.mxu0 %v22
    %359 = vmatprep.subr.mxu0 %v19
    %360 = vmatpush1.msra.mxu0 %v18
    %361 = vmatprep.subr.mxu0 0.0
    %362 = vmatpush2.msra.mxu0 0.0
    %363 = vmatprep.subr.mxu0 0.0
    %364 = vmatpush2.msra.mxu0 0.0
    %365 = vmatprep.subr.mxu0 0.0
    %366 = vmatpush2.msra.mxu0 0.0
    %367 = vmatprep.subr.mxu0 0.0
    %368 = vmatpush2.msra.mxu0 0.0
    %369 = vmatprep.subr.mxu0 0.0
    %370 = vmatpush2.msra.mxu0 0.0
    %371 = vmatprep.subr.mxu0 0.0
    %372 = vmatpush2.msra.mxu0 0.0
    %373 = vmatprep.subr.mxu0 0.0
    %374 = vmatpush2.msra.mxu0 0.0
    %375 = vmatprep.subr.mxu0 0.0
    %376 = vmatpush2.msra.mxu0 0.0
    %377 = vmatprep.subr.mxu0 0.0
    %378 = vmatpush2.msra.mxu0 0.0
    %379 = vmatprep.subr.mxu0 0.0
    %380 = vmatpush2.msra.mxu0 0.0
    %381 = vmatprep.subr.mxu0 0.0
    %382 = vmatpush2.msra.mxu0 0.0
    %383 = vmatprep.subr.mxu0 0.0
    %384 = vmatpush2.msra.mxu0 0.0
    %385 = vmatprep.subr.mxu0 0.0
    %386 = vmatpush2.msra.mxu0 0.0
    %387 = vmatprep.subr.mxu0 0.0
    %388 = vmatpush2.msra.mxu0 0.0
    %389 = vmatprep.subr.mxu0 0.0
    %390 = vmatpush2.msra.mxu0 0.0
    %391 = vmatprep.subr.mxu0 0.0
    %392 = vmatpush2.msra.mxu0 0.0
    %393 = vmatprep.mubr.f32.mxu0 0.0
    %394 = vmatmul.mubr.f32.gmra.mxu0 %v327
    %v395 = vpop.f32.mrf.mxu0
    %v396 = vadd.f32 %v161, %v395
    %v397 = vpop.f32.mrf.mxu0
    %v398 = vadd.f32 %v165, %v397
    %399 = vdwg.mxu0
    %400 = vmatprep.subr.mxu0 0.0
    %401 = vmatpush1.msra.mxu0 0.0
    %402 = vmatprep.subr.mxu0 0.0
    %403 = vmatpush1.msra.mxu0 0.0
    %404 = vmatprep.subr.mxu0 0.0
    %405 = vmatpush1.msra.mxu0 0.0
    %406 = vmatprep.subr.mxu0 0.0
    %407 = vmatpush1.msra.mxu0 0.0
    %408 = vmatprep.subr.mxu0 0.0
    %409 = vmatpush1.msra.mxu0 0.0
    %410 = vmatprep.subr.mxu0 0.0
    %411 = vmatpush1.msra.mxu0 0.0
    %412 = vmatprep.subr.mxu0 0.0
    %413 = vmatpush1.msra.mxu0 0.0
    %414 = vmatprep.subr.mxu0 0.0
    %415 = vmatpush1.msra.mxu0 0.0
    %416 = vmatprep.subr.mxu0 0.0
    %417 = vmatpush1.msra.mxu0 0.0
    %418 = vmatprep.subr.mxu0 0.0
    %419 = vmatpush1.msra.mxu0 0.0
    %420 = vmatprep.subr.mxu0 0.0
    %421 = vmatpush1.msra.mxu0 0.0
    %422 = vmatprep.subr.mxu0 0.0
    %423 = vmatpush1.msra.mxu0 0.0
    %424 = vmatprep.subr.mxu0 %v33
    %425 = vmatpush1.msra.mxu0 %v32
    %426 = vmatprep.subr.mxu0 %v29
    %427 = vmatpush1.msra.mxu0 %v28
    %428 = vmatprep.subr.mxu0 %v25
    %429 = vmatpush1.msra.mxu0 %v24
    %430 = vmatprep.subr.mxu0 %v21
    %431 = vmatpush1.msra.mxu0 %v20
    %432 = vmatprep.subr.mxu0 0.0
    %433 = vmatpush2.msra.mxu0 0.0
    %434 = vmatprep.subr.mxu0 0.0
    %435 = vmatpush2.msra.mxu0 0.0
    %436 = vmatprep.subr.mxu0 0.0
    %437 = vmatpush2.msra.mxu0 0.0
    %438 = vmatprep.subr.mxu0 0.0
    %439 = vmatpush2.msra.mxu0 0.0
    %440 = vmatprep.subr.mxu0 0.0
    %441 = vmatpush2.msra.mxu0 0.0
    %442 = vmatprep.subr.mxu0 0.0
    %443 = vmatpush2.msra.mxu0 0.0
    %444 = vmatprep.subr.mxu0 0.0
    %445 = vmatpush2.msra.mxu0 0.0
    %446 = vmatprep.subr.mxu0 0.0
    %447 = vmatpush2.msra.mxu0 0.0
    %448 = vmatprep.subr.mxu0 0.0
    %449 = vmatpush2.msra.mxu0 0.0
    %450 = vmatprep.subr.mxu0 0.0
    %451 = vmatpush2.msra.mxu0 0.0
    %452 = vmatprep.subr.mxu0 0.0
    %453 = vmatpush2.msra.mxu0 0.0
    %454 = vmatprep.subr.mxu0 0.0
    %455 = vmatpush2.msra.mxu0 0.0
    %456 = vmatprep.subr.mxu0 0.0
    %457 = vmatpush2.msra.mxu0 0.0
    %458 = vmatprep.subr.mxu0 0.0
    %459 = vmatpush2.msra.mxu0 0.0
    %460 = vmatprep.subr.mxu0 0.0
    %461 = vmatpush2.msra.mxu0 0.0
    %462 = vmatprep.subr.mxu0 0.0
    %463 = vmatpush2.msra.mxu0 0.0
    %464 = vmatprep.mubr.f32.mxu0 0.0
    %465 = vmatmul.mubr.f32.gmra.mxu0 %v327
    %v466 = vpop.f32.mrf.mxu0
    %v467 = vadd.f32 %v169, %v466
    %v468 = vpop.f32.mrf.mxu0
    %v469 = vadd.f32 %v173, %v468
    %470 = vdwg.mxu0
    %v471 = vsel %vm152, 1, 0
    %v472 = vsel %vm153, 1, 0
    %v473 = vsel %vm154, 1, 0
    %v474 = vsel %vm155, 1, 0
    %vm475 = vcmp.eq.s32.totalorder %v471, 1
    %vm476 = vcmp.eq.s32.totalorder %v472, 1
    %vm477 = vcmp.eq.s32.totalorder %v473, 1
    %vm478 = vcmp.eq.s32.totalorder %v474, 1
    %v479 = vsel %vm475, %v249, %v396
    %v480 = vsel %vm476, %v251, %v398
    %v481 = vsel %vm477, %v320, %v467
    %v482 = vsel %vm478, %v322, %v469
    %483 = vst [vmem:[#allocation2] sm:$0xff] %v479
    %484 = vst [vmem:[#allocation2 + $0x8] sm:$0xff] %v480
    %485 = vst [vmem:[#allocation2 + $0x10] sm:$0xff] %v481
    %486 = vst [vmem:[#allocation2 + $0x18] sm:$0xff] %v482
    %v487 = vsel %vm475, %v396, %v249
    %v488 = vsel %vm476, %v398, %v251
    %v489 = vsel %vm477, %v467, %v320
    %v490 = vsel %vm478, %v469, %v322
    %s491 = scalar_lea.vmem [#allocation2], 224
    %492 = vst [vmem:[%s491] sm:$0xff] %v487
    %493 = vst [vmem:[%s491 + $0x8] sm:$0xff] %v488
    %494 = vst [vmem:[%s491 + $0x10] sm:$0xff] %v489
    %495 = vst [vmem:[%s491 + $0x18] sm:$0xff] %v490
    %s496 = scalar_lea.vmem %s0, 8
    %v497 = vld [vmem:[%s496] sm:$0xff]
    %v499 = vsel %vm178, %v497, 0
    %501 = vmatprep.subr.mxu0 0.0
    %502 = vmatpush1.msra.mxu0 0.0
    %503 = vmatprep.subr.mxu0 0.0
    %504 = vmatpush1.msra.mxu0 0.0
    %505 = vmatprep.subr.mxu0 0.0
    %506 = vmatpush1.msra.mxu0 0.0
    %507 = vmatprep.subr.mxu0 0.0
    %508 = vmatpush1.msra.mxu0 0.0
    %509 = vmatprep.subr.mxu0 0.0
    %510 = vmatpush1.msra.mxu0 0.0
    %511 = vmatprep.subr.mxu0 0.0
    %512 = vmatpush1.msra.mxu0 0.0
    %513 = vmatprep.subr.mxu0 0.0
    %514 = vmatpush1.msra.mxu0 0.0
    %515 = vmatprep.subr.mxu0 0.0
    %516 = vmatpush1.msra.mxu0 0.0
    %517 = vmatprep.subr.mxu0 0.0
    %518 = vmatpush1.msra.mxu0 0.0
    %519 = vmatprep.subr.mxu0 0.0
    %520 = vmatpush1.msra.mxu0 0.0
    %521 = vmatprep.subr.mxu0 0.0
    %522 = vmatpush1.msra.mxu0 0.0
    %523 = vmatprep.subr.mxu0 0.0
    %524 = vmatpush1.msra.mxu0 0.0
    %525 = vmatprep.subr.mxu0 %v31
    %526 = vmatpush1.msra.mxu0 %v30
    %527 = vmatprep.subr.mxu0 %v27
    %528 = vmatpush1.msra.mxu0 %v26
    %529 = vmatprep.subr.mxu0 %v23
    %530 = vmatpush1.msra.mxu0 %v22
    %531 = vmatprep.subr.mxu0 %v19
    %532 = vmatpush1.msra.mxu0 %v18
    %533 = vmatprep.subr.mxu0 0.0
    %534 = vmatpush2.msra.mxu0 0.0
    %535 = vmatprep.subr.mxu0 0.0
    %536 = vmatpush2.msra.mxu0 0.0
    %537 = vmatprep.subr.mxu0 0.0
    %538 = vmatpush2.msra.mxu0 0.0
    %539 = vmatprep.subr.mxu0 0.0
    %540 = vmatpush2.msra.mxu0 0.0
    %541 = vmatprep.subr.mxu0 0.0
    %542 = vmatpush2.msra.mxu0 0.0
    %543 = vmatprep.subr.mxu0 0.0
    %544 = vmatpush2.msra.mxu0 0.0
    %545 = vmatprep.subr.mxu0 0.0
    %546 = vmatpush2.msra.mxu0 0.0
    %547 = vmatprep.subr.mxu0 0.0
    %548 = vmatpush2.msra.mxu0 0.0
    %549 = vmatprep.subr.mxu0 0.0
    %550 = vmatpush2.msra.mxu0 0.0
    %551 = vmatprep.subr.mxu0 0.0
    %552 = vmatpush2.msra.mxu0 0.0
    %553 = vmatprep.subr.mxu0 0.0
    %554 = vmatpush2.msra.mxu0 0.0
    %555 = vmatprep.subr.mxu0 0.0
    %556 = vmatpush2.msra.mxu0 0.0
    %557 = vmatprep.subr.mxu0 0.0
    %558 = vmatpush2.msra.mxu0 0.0
    %559 = vmatprep.subr.mxu0 0.0
    %560 = vmatpush2.msra.mxu0 0.0
    %561 = vmatprep.subr.mxu0 0.0
    %562 = vmatpush2.msra.mxu0 0.0
    %563 = vmatprep.subr.mxu0 0.0
    %564 = vmatpush2.msra.mxu0 0.0
    %565 = vmatprep.mubr.f32.mxu0 0.0
    %566 = vmatmul.mubr.f32.gmra.mxu0 %v499
    %v567 = vpop.f32.mrf.mxu0
    %v568 = vadd.f32 %v161, %v567
    %v569 = vpop.f32.mrf.mxu0
    %v570 = vadd.f32 %v165, %v569
    %571 = vdwg.mxu0
    %572 = vmatprep.subr.mxu0 0.0
    %573 = vmatpush1.msra.mxu0 0.0
    %574 = vmatprep.subr.mxu0 0.0
    %575 = vmatpush1.msra.mxu0 0.0
    %576 = vmatprep.subr.mxu0 0.0
    %577 = vmatpush1.msra.mxu0 0.0
    %578 = vmatprep.subr.mxu0 0.0
    %579 = vmatpush1.msra.mxu0 0.0
    %580 = vmatprep.subr.mxu0 0.0
    %581 = vmatpush1.msra.mxu0 0.0
    %582 = vmatprep.subr.mxu0 0.0
    %583 = vmatpush1.msra.mxu0 0.0
    %584 = vmatprep.subr.mxu0 0.0
    %585 = vmatpush1.msra.mxu0 0.0
    %586 = vmatprep.subr.mxu0 0.0
    %587 = vmatpush1.msra.mxu0 0.0
    %588 = vmatprep.subr.mxu0 0.0
    %589 = vmatpush1.msra.mxu0 0.0
    %590 = vmatprep.subr.mxu0 0.0
    %591 = vmatpush1.msra.mxu0 0.0
    %592 = vmatprep.subr.mxu0 0.0
    %593 = vmatpush1.msra.mxu0 0.0
    %594 = vmatprep.subr.mxu0 0.0
    %595 = vmatpush1.msra.mxu0 0.0
    %596 = vmatprep.subr.mxu0 %v33
    %597 = vmatpush1.msra.mxu0 %v32
    %598 = vmatprep.subr.mxu0 %v29
    %599 = vmatpush1.msra.mxu0 %v28
    %600 = vmatprep.subr.mxu0 %v25
    %601 = vmatpush1.msra.mxu0 %v24
    %602 = vmatprep.subr.mxu0 %v21
    %603 = vmatpush1.msra.mxu0 %v20
    %604 = vmatprep.subr.mxu0 0.0
    %605 = vmatpush2.msra.mxu0 0.0
    %606 = vmatprep.subr.mxu0 0.0
    %607 = vmatpush2.msra.mxu0 0.0
    %608 = vmatprep.subr.mxu0 0.0
    %609 = vmatpush2.msra.mxu0 0.0
    %610 = vmatprep.subr.mxu0 0.0
    %611 = vmatpush2.msra.mxu0 0.0
    %612 = vmatprep.subr.mxu0 0.0
    %613 = vmatpush2.msra.mxu0 0.0
    %614 = vmatprep.subr.mxu0 0.0
    %615 = vmatpush2.msra.mxu0 0.0
    %616 = vmatprep.subr.mxu0 0.0
    %617 = vmatpush2.msra.mxu0 0.0
    %618 = vmatprep.subr.mxu0 0.0
    %619 = vmatpush2.msra.mxu0 0.0
    %620 = vmatprep.subr.mxu0 0.0
    %621 = vmatpush2.msra.mxu0 0.0
    %622 = vmatprep.subr.mxu0 0.0
    %623 = vmatpush2.msra.mxu0 0.0
    %624 = vmatprep.subr.mxu0 0.0
    %625 = vmatpush2.msra.mxu0 0.0
    %626 = vmatprep.subr.mxu0 0.0
    %627 = vmatpush2.msra.mxu0 0.0
    %628 = vmatprep.subr.mxu0 0.0
    %629 = vmatpush2.msra.mxu0 0.0
    %630 = vmatprep.subr.mxu0 0.0
    %631 = vmatpush2.msra.mxu0 0.0
    %632 = vmatprep.subr.mxu0 0.0
    %633 = vmatpush2.msra.mxu0 0.0
    %634 = vmatprep.subr.mxu0 0.0
    %635 = vmatpush2.msra.mxu0 0.0
    %636 = vmatprep.mubr.f32.mxu0 0.0
    %637 = vmatmul.mubr.f32.gmra.mxu0 %v499
    %v638 = vpop.f32.mrf.mxu0
    %v639 = vadd.f32 %v169, %v638
    %v640 = vpop.f32.mrf.mxu0
    %v641 = vadd.f32 %v173, %v640
    %642 = vdwg.mxu0
    %s643 = scalar_lea.vmem %s0, 48
    %v644 = vld [vmem:[%s643] sm:$0xff]
    %v646 = vsel %vm178, %v644, 0
    %648 = vmatprep.subr.mxu0 0.0
    %649 = vmatpush1.msra.mxu0 0.0
    %650 = vmatprep.subr.mxu0 0.0
    %651 = vmatpush1.msra.mxu0 0.0
    %652 = vmatprep.subr.mxu0 0.0
    %653 = vmatpush1.msra.mxu0 0.0
    %654 = vmatprep.subr.mxu0 0.0
    %655 = vmatpush1.msra.mxu0 0.0
    %656 = vmatprep.subr.mxu0 0.0
    %657 = vmatpush1.msra.mxu0 0.0
    %658 = vmatprep.subr.mxu0 0.0
    %659 = vmatpush1.msra.mxu0 0.0
    %660 = vmatprep.subr.mxu0 0.0
    %661 = vmatpush1.msra.mxu0 0.0
    %662 = vmatprep.subr.mxu0 0.0
    %663 = vmatpush1.msra.mxu0 0.0
    %664 = vmatprep.subr.mxu0 0.0
    %665 = vmatpush1.msra.mxu0 0.0
    %666 = vmatprep.subr.mxu0 0.0
    %667 = vmatpush1.msra.mxu0 0.0
    %668 = vmatprep.subr.mxu0 0.0
    %669 = vmatpush1.msra.mxu0 0.0
    %670 = vmatprep.subr.mxu0 0.0
    %671 = vmatpush1.msra.mxu0 0.0
    %672 = vmatprep.subr.mxu0 %v31
    %673 = vmatpush1.msra.mxu0 %v30
    %674 = vmatprep.subr.mxu0 %v27
    %675 = vmatpush1.msra.mxu0 %v26
    %676 = vmatprep.subr.mxu0 %v23
    %677 = vmatpush1.msra.mxu0 %v22
    %678 = vmatprep.subr.mxu0 %v19
    %679 = vmatpush1.msra.mxu0 %v18
    %680 = vmatprep.subr.mxu0 0.0
    %681 = vmatpush2.msra.mxu0 0.0
    %682 = vmatprep.subr.mxu0 0.0
    %683 = vmatpush2.msra.mxu0 0.0
    %684 = vmatprep.subr.mxu0 0.0
    %685 = vmatpush2.msra.mxu0 0.0
    %686 = vmatprep.subr.mxu0 0.0
    %687 = vmatpush2.msra.mxu0 0.0
    %688 = vmatprep.subr.mxu0 0.0
    %689 = vmatpush2.msra.mxu0 0.0
    %690 = vmatprep.subr.mxu0 0.0
    %691 = vmatpush2.msra.mxu0 0.0
    %692 = vmatprep.subr.mxu0 0.0
    %693 = vmatpush2.msra.mxu0 0.0
    %694 = vmatprep.subr.mxu0 0.0
    %695 = vmatpush2.msra.mxu0 0.0
    %696 = vmatprep.subr.mxu0 0.0
    %697 = vmatpush2.msra.mxu0 0.0
    %698 = vmatprep.subr.mxu0 0.0
    %699 = vmatpush2.msra.mxu0 0.0
    %700 = vmatprep.subr.mxu0 0.0
    %701 = vmatpush2.msra.mxu0 0.0
    %702 = vmatprep.subr.mxu0 0.0
    %703 = vmatpush2.msra.mxu0 0.0
    %704 = vmatprep.subr.mxu0 0.0
    %705 = vmatpush2.msra.mxu0 0.0
    %706 = vmatprep.subr.mxu0 0.0
    %707 = vmatpush2.msra.mxu0 0.0
    %708 = vmatprep.subr.mxu0 0.0
    %709 = vmatpush2.msra.mxu0 0.0
    %710 = vmatprep.subr.mxu0 0.0
    %711 = vmatpush2.msra.mxu0 0.0
    %712 = vmatprep.mubr.f32.mxu0 0.0
    %713 = vmatmul.mubr.f32.gmra.mxu0 %v646
    %v714 = vpop.f32.mrf.mxu0
    %v715 = vadd.f32 %v161, %v714
    %v716 = vpop.f32.mrf.mxu0
    %v717 = vadd.f32 %v165, %v716
    %718 = vdwg.mxu0
    %719 = vmatprep.subr.mxu0 0.0
    %720 = vmatpush1.msra.mxu0 0.0
    %721 = vmatprep.subr.mxu0 0.0
    %722 = vmatpush1.msra.mxu0 0.0
    %723 = vmatprep.subr.mxu0 0.0
    %724 = vmatpush1.msra.mxu0 0.0
    %725 = vmatprep.subr.mxu0 0.0
    %726 = vmatpush1.msra.mxu0 0.0
    %727 = vmatprep.subr.mxu0 0.0
    %728 = vmatpush1.msra.mxu0 0.0
    %729 = vmatprep.subr.mxu0 0.0
    %730 = vmatpush1.msra.mxu0 0.0
    %731 = vmatprep.subr.mxu0 0.0
    %732 = vmatpush1.msra.mxu0 0.0
    %733 = vmatprep.subr.mxu0 0.0
    %734 = vmatpush1.msra.mxu0 0.0
    %735 = vmatprep.subr.mxu0 0.0
    %736 = vmatpush1.msra.mxu0 0.0
    %737 = vmatprep.subr.mxu0 0.0
    %738 = vmatpush1.msra.mxu0 0.0
    %739 = vmatprep.subr.mxu0 0.0
    %740 = vmatpush1.msra.mxu0 0.0
    %741 = vmatprep.subr.mxu0 0.0
    %742 = vmatpush1.msra.mxu0 0.0
    %743 = vmatprep.subr.mxu0 %v33
    %744 = vmatpush1.msra.mxu0 %v32
    %745 = vmatprep.subr.mxu0 %v29
    %746 = vmatpush1.msra.mxu0 %v28
    %747 = vmatprep.subr.mxu0 %v25
    %748 = vmatpush1.msra.mxu0 %v24
    %749 = vmatprep.subr.mxu0 %v21
    %750 = vmatpush1.msra.mxu0 %v20
    %751 = vmatprep.subr.mxu0 0.0
    %752 = vmatpush2.msra.mxu0 0.0
    %753 = vmatprep.subr.mxu0 0.0
    %754 = vmatpush2.msra.mxu0 0.0
    %755 = vmatprep.subr.mxu0 0.0
    %756 = vmatpush2.msra.mxu0 0.0
    %757 = vmatprep.subr.mxu0 0.0
    %758 = vmatpush2.msra.mxu0 0.0
    %759 = vmatprep.subr.mxu0 0.0
    %760 = vmatpush2.msra.mxu0 0.0
    %761 = vmatprep.subr.mxu0 0.0
    %762 = vmatpush2.msra.mxu0 0.0
    %763 = vmatprep.subr.mxu0 0.0
    %764 = vmatpush2.msra.mxu0 0.0
    %765 = vmatprep.subr.mxu0 0.0
    %766 = vmatpush2.msra.mxu0 0.0
    %767 = vmatprep.subr.mxu0 0.0
    %768 = vmatpush2.msra.mxu0 0.0
    %769 = vmatprep.subr.mxu0 0.0
    %770 = vmatpush2.msra.mxu0 0.0
    %771 = vmatprep.subr.mxu0 0.0
    %772 = vmatpush2.msra.mxu0 0.0
    %773 = vmatprep.subr.mxu0 0.0
    %774 = vmatpush2.msra.mxu0 0.0
    %775 = vmatprep.subr.mxu0 0.0
    %776 = vmatpush2.msra.mxu0 0.0
    %777 = vmatprep.subr.mxu0 0.0
    %778 = vmatpush2.msra.mxu0 0.0
    %779 = vmatprep.subr.mxu0 0.0
    %780 = vmatpush2.msra.mxu0 0.0
    %781 = vmatprep.subr.mxu0 0.0
    %782 = vmatpush2.msra.mxu0 0.0
    %783 = vmatprep.mubr.f32.mxu0 0.0
    %784 = vmatmul.mubr.f32.gmra.mxu0 %v646
    %v785 = vpop.f32.mrf.mxu0
    %v786 = vadd.f32 %v169, %v785
    %v787 = vpop.f32.mrf.mxu0
    %v788 = vadd.f32 %v173, %v787
    %789 = vdwg.mxu0
    %v790 = vsel %vm475, %v568, %v715
    %v791 = vsel %vm476, %v570, %v717
    %v792 = vsel %vm477, %v639, %v786
    %v793 = vsel %vm478, %v641, %v788
    %s794 = scalar_lea.vmem [#allocation2], 32
    %795 = vst [vmem:[%s794] sm:$0xff] %v790
    %796 = vst [vmem:[%s794 + $0x8] sm:$0xff] %v791
    %797 = vst [vmem:[%s794 + $0x10] sm:$0xff] %v792
    %798 = vst [vmem:[%s794 + $0x18] sm:$0xff] %v793
    %v799 = vsel %vm475, %v715, %v568
    %v800 = vsel %vm476, %v717, %v570
    %v801 = vsel %vm477, %v786, %v639
    %v802 = vsel %vm478, %v788, %v641
    %s803 = scalar_lea.vmem [#allocation2], 192
    %804 = vst [vmem:[%s803] sm:$0xff] %v799
    %805 = vst [vmem:[%s803 + $0x8] sm:$0xff] %v800
    %806 = vst [vmem:[%s803 + $0x10] sm:$0xff] %v801
    %807 = vst [vmem:[%s803 + $0x18] sm:$0xff] %v802
    %s808 = scalar_lea.vmem %s0, 16
    %v809 = vld [vmem:[%s808] sm:$0xff]
    %v811 = vsel %vm178, %v809, 0
    %813 = vmatprep.subr.mxu0 0.0
    %814 = vmatpush1.msra.mxu0 0.0
    %815 = vmatprep.subr.mxu0 0.0
    %816 = vmatpush1.msra.mxu0 0.0
    %817 = vmatprep.subr.mxu0 0.0
    %818 = vmatpush1.msra.mxu0 0.0
    %819 = vmatprep.subr.mxu0 0.0
    %820 = vmatpush1.msra.mxu0 0.0
    %821 = vmatprep.subr.mxu0 0.0
    %822 = vmatpush1.msra.mxu0 0.0
    %823 = vmatprep.subr.mxu0 0.0
    %824 = vmatpush1.msra.mxu0 0.0
    %825 = vmatprep.subr.mxu0 0.0
    %826 = vmatpush1.msra.mxu0 0.0
    %827 = vmatprep.subr.mxu0 0.0
    %828 = vmatpush1.msra.mxu0 0.0
    %829 = vmatprep.subr.mxu0 0.0
    %830 = vmatpush1.msra.mxu0 0.0
    %831 = vmatprep.subr.mxu0 0.0
    %832 = vmatpush1.msra.mxu0 0.0
    %833 = vmatprep.subr.mxu0 0.0
    %834 = vmatpush1.msra.mxu0 0.0
    %835 = vmatprep.subr.mxu0 0.0
    %836 = vmatpush1.msra.mxu0 0.0
    %837 = vmatprep.subr.mxu0 %v31
    %838 = vmatpush1.msra.mxu0 %v30
    %839 = vmatprep.subr.mxu0 %v27
    %840 = vmatpush1.msra.mxu0 %v26
    %841 = vmatprep.subr.mxu0 %v23
    %842 = vmatpush1.msra.mxu0 %v22
    %843 = vmatprep.subr.mxu0 %v19
    %844 = vmatpush1.msra.mxu0 %v18
    %845 = vmatprep.subr.mxu0 0.0
    %846 = vmatpush2.msra.mxu0 0.0
    %847 = vmatprep.subr.mxu0 0.0
    %848 = vmatpush2.msra.mxu0 0.0
    %849 = vmatprep.subr.mxu0 0.0
    %850 = vmatpush2.msra.mxu0 0.0
    %851 = vmatprep.subr.mxu0 0.0
    %852 = vmatpush2.msra.mxu0 0.0
    %853 = vmatprep.subr.mxu0 0.0
    %854 = vmatpush2.msra.mxu0 0.0
    %855 = vmatprep.subr.mxu0 0.0
    %856 = vmatpush2.msra.mxu0 0.0
    %857 = vmatprep.subr.mxu0 0.0
    %858 = vmatpush2.msra.mxu0 0.0
    %859 = vmatprep.subr.mxu0 0.0
    %860 = vmatpush2.msra.mxu0 0.0
    %861 = vmatprep.subr.mxu0 0.0
    %862 = vmatpush2.msra.mxu0 0.0
    %863 = vmatprep.subr.mxu0 0.0
    %864 = vmatpush2.msra.mxu0 0.0
    %865 = vmatprep.subr.mxu0 0.0
    %866 = vmatpush2.msra.mxu0 0.0
    %867 = vmatprep.subr.mxu0 0.0
    %868 = vmatpush2.msra.mxu0 0.0
    %869 = vmatprep.subr.mxu0 0.0
    %870 = vmatpush2.msra.mxu0 0.0
    %871 = vmatprep.subr.mxu0 0.0
    %872 = vmatpush2.msra.mxu0 0.0
    %873 = vmatprep.subr.mxu0 0.0
    %874 = vmatpush2.msra.mxu0 0.0
    %875 = vmatprep.subr.mxu0 0.0
    %876 = vmatpush2.msra.mxu0 0.0
    %877 = vmatprep.mubr.f32.mxu0 0.0
    %878 = vmatmul.mubr.f32.gmra.mxu0 %v811
    %v879 = vpop.f32.mrf.mxu0
    %v880 = vadd.f32 %v161, %v879
    %v881 = vpop.f32.mrf.mxu0
    %v882 = vadd.f32 %v165, %v881
    %883 = vdwg.mxu0
    %884 = vmatprep.subr.mxu0 0.0
    %885 = vmatpush1.msra.mxu0 0.0
    %886 = vmatprep.subr.mxu0 0.0
    %887 = vmatpush1.msra.mxu0 0.0
    %888 = vmatprep.subr.mxu0 0.0
    %889 = vmatpush1.msra.mxu0 0.0
    %890 = vmatprep.subr.mxu0 0.0
    %891 = vmatpush1.msra.mxu0 0.0
    %892 = vmatprep.subr.mxu0 0.0
    %893 = vmatpush1.msra.mxu0 0.0
    %894 = vmatprep.subr.mxu0 0.0
    %895 = vmatpush1.msra.mxu0 0.0
    %896 = vmatprep.subr.mxu0 0.0
    %897 = vmatpush1.msra.mxu0 0.0
    %898 = vmatprep.subr.mxu0 0.0
    %899 = vmatpush1.msra.mxu0 0.0
    %900 = vmatprep.subr.mxu0 0.0
    %901 = vmatpush1.msra.mxu0 0.0
    %902 = vmatprep.subr.mxu0 0.0
    %903 = vmatpush1.msra.mxu0 0.0
    %904 = vmatprep.subr.mxu0 0.0
    %905 = vmatpush1.msra.mxu0 0.0
    %906 = vmatprep.subr.mxu0 0.0
    %907 = vmatpush1.msra.mxu0 0.0
    %908 = vmatprep.subr.mxu0 %v33
    %909 = vmatpush1.msra.mxu0 %v32
    %910 = vmatprep.subr.mxu0 %v29
    %911 = vmatpush1.msra.mxu0 %v28
    %912 = vmatprep.subr.mxu0 %v25
    %913 = vmatpush1.msra.mxu0 %v24
    %914 = vmatprep.subr.mxu0 %v21
    %915 = vmatpush1.msra.mxu0 %v20
    %916 = vmatprep.subr.mxu0 0.0
    %917 = vmatpush2.msra.mxu0 0.0
    %918 = vmatprep.subr.mxu0 0.0
    %919 = vmatpush2.msra.mxu0 0.0
    %920 = vmatprep.subr.mxu0 0.0
    %921 = vmatpush2.msra.mxu0 0.0
    %922 = vmatprep.subr.mxu0 0.0
    %923 = vmatpush2.msra.mxu0 0.0
    %924 = vmatprep.subr.mxu0 0.0
    %925 = vmatpush2.msra.mxu0 0.0
    %926 = vmatprep.subr.mxu0 0.0
    %927 = vmatpush2.msra.mxu0 0.0
    %928 = vmatprep.subr.mxu0 0.0
    %929 = vmatpush2.msra.mxu0 0.0
    %930 = vmatprep.subr.mxu0 0.0
    %931 = vmatpush2.msra.mxu0 0.0
    %932 = vmatprep.subr.mxu0 0.0
    %933 = vmatpush2.msra.mxu0 0.0
    %934 = vmatprep.subr.mxu0 0.0
    %935 = vmatpush2.msra.mxu0 0.0
    %936 = vmatprep.subr.mxu0 0.0
    %937 = vmatpush2.msra.mxu0 0.0
    %938 = vmatprep.subr.mxu0 0.0
    %939 = vmatpush2.msra.mxu0 0.0
    %940 = vmatprep.subr.mxu0 0.0
    %941 = vmatpush2.msra.mxu0 0.0
    %942 = vmatprep.subr.mxu0 0.0
    %943 = vmatpush2.msra.mxu0 0.0
    %944 = vmatprep.subr.mxu0 0.0
    %945 = vmatpush2.msra.mxu0 0.0
    %946 = vmatprep.subr.mxu0 0.0
    %947 = vmatpush2.msra.mxu0 0.0
    %948 = vmatprep.mubr.f32.mxu0 0.0
    %949 = vmatmul.mubr.f32.gmra.mxu0 %v811
    %v950 = vpop.f32.mrf.mxu0
    %v951 = vadd.f32 %v169, %v950
    %v952 = vpop.f32.mrf.mxu0
    %v953 = vadd.f32 %v173, %v952
    %954 = vdwg.mxu0
    %s955 = scalar_lea.vmem %s0, 40
    %v956 = vld [vmem:[%s955] sm:$0xff]
    %v958 = vsel %vm178, %v956, 0
    %960 = vmatprep.subr.mxu0 0.0
    %961 = vmatpush1.msra.mxu0 0.0
    %962 = vmatprep.subr.mxu0 0.0
    %963 = vmatpush1.msra.mxu0 0.0
    %964 = vmatprep.subr.mxu0 0.0
    %965 = vmatpush1.msra.mxu0 0.0
    %966 = vmatprep.subr.mxu0 0.0
    %967 = vmatpush1.msra.mxu0 0.0
    %968 = vmatprep.subr.mxu0 0.0
    %969 = vmatpush1.msra.mxu0 0.0
    %970 = vmatprep.subr.mxu0 0.0
    %971 = vmatpush1.msra.mxu0 0.0
    %972 = vmatprep.subr.mxu0 0.0
    %973 = vmatpush1.msra.mxu0 0.0
    %974 = vmatprep.subr.mxu0 0.0
    %975 = vmatpush1.msra.mxu0 0.0
    %976 = vmatprep.subr.mxu0 0.0
    %977 = vmatpush1.msra.mxu0 0.0
    %978 = vmatprep.subr.mxu0 0.0
    %979 = vmatpush1.msra.mxu0 0.0
    %980 = vmatprep.subr.mxu0 0.0
    %981 = vmatpush1.msra.mxu0 0.0
    %982 = vmatprep.subr.mxu0 0.0
    %983 = vmatpush1.msra.mxu0 0.0
    %984 = vmatprep.subr.mxu0 %v31
    %985 = vmatpush1.msra.mxu0 %v30
    %986 = vmatprep.subr.mxu0 %v27
    %987 = vmatpush1.msra.mxu0 %v26
    %988 = vmatprep.subr.mxu0 %v23
    %989 = vmatpush1.msra.mxu0 %v22
    %990 = vmatprep.subr.mxu0 %v19
    %991 = vmatpush1.msra.mxu0 %v18
    %992 = vmatprep.subr.mxu0 0.0
    %993 = vmatpush2.msra.mxu0 0.0
    %994 = vmatprep.subr.mxu0 0.0
    %995 = vmatpush2.msra.mxu0 0.0
    %996 = vmatprep.subr.mxu0 0.0
    %997 = vmatpush2.msra.mxu0 0.0
    %998 = vmatprep.subr.mxu0 0.0
    %999 = vmatpush2.msra.mxu0 0.0
    %1000 = vmatprep.subr.mxu0 0.0
    %1001 = vmatpush2.msra.mxu0 0.0
    %1002 = vmatprep.subr.mxu0 0.0
    %1003 = vmatpush2.msra.mxu0 0.0
    %1004 = vmatprep.subr.mxu0 0.0
    %1005 = vmatpush2.msra.mxu0 0.0
    %1006 = vmatprep.subr.mxu0 0.0
    %1007 = vmatpush2.msra.mxu0 0.0
    %1008 = vmatprep.subr.mxu0 0.0
    %1009 = vmatpush2.msra.mxu0 0.0
    %1010 = vmatprep.subr.mxu0 0.0
    %1011 = vmatpush2.msra.mxu0 0.0
    %1012 = vmatprep.subr.mxu0 0.0
    %1013 = vmatpush2.msra.mxu0 0.0
    %1014 = vmatprep.subr.mxu0 0.0
    %1015 = vmatpush2.msra.mxu0 0.0
    %1016 = vmatprep.subr.mxu0 0.0
    %1017 = vmatpush2.msra.mxu0 0.0
    %1018 = vmatprep.subr.mxu0 0.0
    %1019 = vmatpush2.msra.mxu0 0.0
    %1020 = vmatprep.subr.mxu0 0.0
    %1021 = vmatpush2.msra.mxu0 0.0
    %1022 = vmatprep.subr.mxu0 0.0
    %1023 = vmatpush2.msra.mxu0 0.0
    %1024 = vmatprep.mubr.f32.mxu0 0.0
    %1025 = vmatmul.mubr.f32.gmra.mxu0 %v958
    %v1026 = vpop.f32.mrf.mxu0
    %v1027 = vadd.f32 %v161, %v1026
    %v1028 = vpop.f32.mrf.mxu0
    %v1029 = vadd.f32 %v165, %v1028
    %1030 = vdwg.mxu0
    %1031 = vmatprep.subr.mxu0 0.0
    %1032 = vmatpush1.msra.mxu0 0.0
    %1033 = vmatprep.subr.mxu0 0.0
    %1034 = vmatpush1.msra.mxu0 0.0
    %1035 = vmatprep.subr.mxu0 0.0
    %1036 = vmatpush1.msra.mxu0 0.0
    %1037 = vmatprep.subr.mxu0 0.0
    %1038 = vmatpush1.msra.mxu0 0.0
    %1039 = vmatprep.subr.mxu0 0.0
    %1040 = vmatpush1.msra.mxu0 0.0
    %1041 = vmatprep.subr.mxu0 0.0
    %1042 = vmatpush1.msra.mxu0 0.0
    %1043 = vmatprep.subr.mxu0 0.0
    %1044 = vmatpush1.msra.mxu0 0.0
    %1045 = vmatprep.subr.mxu0 0.0
    %1046 = vmatpush1.msra.mxu0 0.0
    %1047 = vmatprep.subr.mxu0 0.0
    %1048 = vmatpush1.msra.mxu0 0.0
    %1049 = vmatprep.subr.mxu0 0.0
    %1050 = vmatpush1.msra.mxu0 0.0
    %1051 = vmatprep.subr.mxu0 0.0
    %1052 = vmatpush1.msra.mxu0 0.0
    %1053 = vmatprep.subr.mxu0 0.0
    %1054 = vmatpush1.msra.mxu0 0.0
    %1055 = vmatprep.subr.mxu0 %v33
    %1056 = vmatpush1.msra.mxu0 %v32
    %1057 = vmatprep.subr.mxu0 %v29
    %1058 = vmatpush1.msra.mxu0 %v28
    %1059 = vmatprep.subr.mxu0 %v25
    %1060 = vmatpush1.msra.mxu0 %v24
    %1061 = vmatprep.subr.mxu0 %v21
    %1062 = vmatpush1.msra.mxu0 %v20
    %1063 = vmatprep.subr.mxu0 0.0
    %1064 = vmatpush2.msra.mxu0 0.0
    %1065 = vmatprep.subr.mxu0 0.0
    %1066 = vmatpush2.msra.mxu0 0.0
    %1067 = vmatprep.subr.mxu0 0.0
    %1068 = vmatpush2.msra.mxu0 0.0
    %1069 = vmatprep.subr.mxu0 0.0
    %1070 = vmatpush2.msra.mxu0 0.0
    %1071 = vmatprep.subr.mxu0 0.0
    %1072 = vmatpush2.msra.mxu0 0.0
    %1073 = vmatprep.subr.mxu0 0.0
    %1074 = vmatpush2.msra.mxu0 0.0
    %1075 = vmatprep.subr.mxu0 0.0
    %1076 = vmatpush2.msra.mxu0 0.0
    %1077 = vmatprep.subr.mxu0 0.0
    %1078 = vmatpush2.msra.mxu0 0.0
    %1079 = vmatprep.subr.mxu0 0.0
    %1080 = vmatpush2.msra.mxu0 0.0
    %1081 = vmatprep.subr.mxu0 0.0
    %1082 = vmatpush2.msra.mxu0 0.0
    %1083 = vmatprep.subr.mxu0 0.0
    %1084 = vmatpush2.msra.mxu0 0.0
    %1085 = vmatprep.subr.mxu0 0.0
    %1086 = vmatpush2.msra.mxu0 0.0
    %1087 = vmatprep.subr.mxu0 0.0
    %1088 = vmatpush2.msra.mxu0 0.0
    %1089 = vmatprep.subr.mxu0 0.0
    %1090 = vmatpush2.msra.mxu0 0.0
    %1091 = vmatprep.subr.mxu0 0.0
    %1092 = vmatpush2.msra.mxu0 0.0
    %1093 = vmatprep.subr.mxu0 0.0
    %1094 = vmatpush2.msra.mxu0 0.0
    %1095 = vmatprep.mubr.f32.mxu0 0.0
    %1096 = vmatmul.mubr.f32.gmra.mxu0 %v958
    %v1097 = vpop.f32.mrf.mxu0
    %v1098 = vadd.f32 %v169, %v1097
    %v1099 = vpop.f32.mrf.mxu0
    %v1100 = vadd.f32 %v173, %v1099
    %1101 = vdwg.mxu0
    %v1102 = vsel %vm475, %v880, %v1027
    %v1103 = vsel %vm476, %v882, %v1029
    %v1104 = vsel %vm477, %v951, %v1098
    %v1105 = vsel %vm478, %v953, %v1100
    %s1106 = scalar_lea.vmem [#allocation2], 64
    %1107 = vst [vmem:[%s1106] sm:$0xff] %v1102
    %1108 = vst [vmem:[%s1106 + $0x8] sm:$0xff] %v1103
    %1109 = vst [vmem:[%s1106 + $0x10] sm:$0xff] %v1104
    %1110 = vst [vmem:[%s1106 + $0x18] sm:$0xff] %v1105
    %v1111 = vsel %vm475, %v1027, %v880
    %v1112 = vsel %vm476, %v1029, %v882
    %v1113 = vsel %vm477, %v1098, %v951
    %v1114 = vsel %vm478, %v1100, %v953
    %s1115 = scalar_lea.vmem [#allocation2], 160
    %1116 = vst [vmem:[%s1115] sm:$0xff] %v1111
    %1117 = vst [vmem:[%s1115 + $0x8] sm:$0xff] %v1112
    %1118 = vst [vmem:[%s1115 + $0x10] sm:$0xff] %v1113
    %1119 = vst [vmem:[%s1115 + $0x18] sm:$0xff] %v1114
    %s1120 = scalar_lea.vmem %s0, 24
    %v1121 = vld [vmem:[%s1120] sm:$0xff]
    %v1123 = vsel %vm178, %v1121, 0
    %1125 = vmatprep.subr.mxu0 0.0
    %1126 = vmatpush1.msra.mxu0 0.0
    %1127 = vmatprep.subr.mxu0 0.0
    %1128 = vmatpush1.msra.mxu0 0.0
    %1129 = vmatprep.subr.mxu0 0.0
    %1130 = vmatpush1.msra.mxu0 0.0
    %1131 = vmatprep.subr.mxu0 0.0
    %1132 = vmatpush1.msra.mxu0 0.0
    %1133 = vmatprep.subr.mxu0 0.0
    %1134 = vmatpush1.msra.mxu0 0.0
    %1135 = vmatprep.subr.mxu0 0.0
    %1136 = vmatpush1.msra.mxu0 0.0
    %1137 = vmatprep.subr.mxu0 0.0
    %1138 = vmatpush1.msra.mxu0 0.0
    %1139 = vmatprep.subr.mxu0 0.0
    %1140 = vmatpush1.msra.mxu0 0.0
    %1141 = vmatprep.subr.mxu0 0.0
    %1142 = vmatpush1.msra.mxu0 0.0
    %1143 = vmatprep.subr.mxu0 0.0
    %1144 = vmatpush1.msra.mxu0 0.0
    %1145 = vmatprep.subr.mxu0 0.0
    %1146 = vmatpush1.msra.mxu0 0.0
    %1147 = vmatprep.subr.mxu0 0.0
    %1148 = vmatpush1.msra.mxu0 0.0
    %1149 = vmatprep.subr.mxu0 %v31
    %1150 = vmatpush1.msra.mxu0 %v30
    %1151 = vmatprep.subr.mxu0 %v27
    %1152 = vmatpush1.msra.mxu0 %v26
    %1153 = vmatprep.subr.mxu0 %v23
    %1154 = vmatpush1.msra.mxu0 %v22
    %1155 = vmatprep.subr.mxu0 %v19
    %1156 = vmatpush1.msra.mxu0 %v18
    %1157 = vmatprep.subr.mxu0 0.0
    %1158 = vmatpush2.msra.mxu0 0.0
    %1159 = vmatprep.subr.mxu0 0.0
    %1160 = vmatpush2.msra.mxu0 0.0
    %1161 = vmatprep.subr.mxu0 0.0
    %1162 = vmatpush2.msra.mxu0 0.0
    %1163 = vmatprep.subr.mxu0 0.0
    %1164 = vmatpush2.msra.mxu0 0.0
    %1165 = vmatprep.subr.mxu0 0.0
    %1166 = vmatpush2.msra.mxu0 0.0
    %1167 = vmatprep.subr.mxu0 0.0
    %1168 = vmatpush2.msra.mxu0 0.0
    %1169 = vmatprep.subr.mxu0 0.0
    %1170 = vmatpush2.msra.mxu0 0.0
    %1171 = vmatprep.subr.mxu0 0.0
    %1172 = vmatpush2.msra.mxu0 0.0
    %1173 = vmatprep.subr.mxu0 0.0
    %1174 = vmatpush2.msra.mxu0 0.0
    %1175 = vmatprep.subr.mxu0 0.0
    %1176 = vmatpush2.msra.mxu0 0.0
    %1177 = vmatprep.subr.mxu0 0.0
    %1178 = vmatpush2.msra.mxu0 0.0
    %1179 = vmatprep.subr.mxu0 0.0
    %1180 = vmatpush2.msra.mxu0 0.0
    %1181 = vmatprep.subr.mxu0 0.0
    %1182 = vmatpush2.msra.mxu0 0.0
    %1183 = vmatprep.subr.mxu0 0.0
    %1184 = vmatpush2.msra.mxu0 0.0
    %1185 = vmatprep.subr.mxu0 0.0
    %1186 = vmatpush2.msra.mxu0 0.0
    %1187 = vmatprep.subr.mxu0 0.0
    %1188 = vmatpush2.msra.mxu0 0.0
    %1189 = vmatprep.mubr.f32.mxu0 0.0
    %1190 = vmatmul.mubr.f32.gmra.mxu0 %v1123
    %v1191 = vpop.f32.mrf.mxu0
    %v1192 = vadd.f32 %v161, %v1191
    %v1193 = vpop.f32.mrf.mxu0
    %v1194 = vadd.f32 %v165, %v1193
    %1195 = vdwg.mxu0
    %1196 = vmatprep.subr.mxu0 0.0
    %1197 = vmatpush1.msra.mxu0 0.0
    %1198 = vmatprep.subr.mxu0 0.0
    %1199 = vmatpush1.msra.mxu0 0.0
    %1200 = vmatprep.subr.mxu0 0.0
    %1201 = vmatpush1.msra.mxu0 0.0
    %1202 = vmatprep.subr.mxu0 0.0
    %1203 = vmatpush1.msra.mxu0 0.0
    %1204 = vmatprep.subr.mxu0 0.0
    %1205 = vmatpush1.msra.mxu0 0.0
    %1206 = vmatprep.subr.mxu0 0.0
    %1207 = vmatpush1.msra.mxu0 0.0
    %1208 = vmatprep.subr.mxu0 0.0
    %1209 = vmatpush1.msra.mxu0 0.0
    %1210 = vmatprep.subr.mxu0 0.0
    %1211 = vmatpush1.msra.mxu0 0.0
    %1212 = vmatprep.subr.mxu0 0.0
    %1213 = vmatpush1.msra.mxu0 0.0
    %1214 = vmatprep.subr.mxu0 0.0
    %1215 = vmatpush1.msra.mxu0 0.0
    %1216 = vmatprep.subr.mxu0 0.0
    %1217 = vmatpush1.msra.mxu0 0.0
    %1218 = vmatprep.subr.mxu0 0.0
    %1219 = vmatpush1.msra.mxu0 0.0
    %1220 = vmatprep.subr.mxu0 %v33
    %1221 = vmatpush1.msra.mxu0 %v32
    %1222 = vmatprep.subr.mxu0 %v29
    %1223 = vmatpush1.msra.mxu0 %v28
    %1224 = vmatprep.subr.mxu0 %v25
    %1225 = vmatpush1.msra.mxu0 %v24
    %1226 = vmatprep.subr.mxu0 %v21
    %1227 = vmatpush1.msra.mxu0 %v20
    %1228 = vmatprep.subr.mxu0 0.0
    %1229 = vmatpush2.msra.mxu0 0.0
    %1230 = vmatprep.subr.mxu0 0.0
    %1231 = vmatpush2.msra.mxu0 0.0
    %1232 = vmatprep.subr.mxu0 0.0
    %1233 = vmatpush2.msra.mxu0 0.0
    %1234 = vmatprep.subr.mxu0 0.0
    %1235 = vmatpush2.msra.mxu0 0.0
    %1236 = vmatprep.subr.mxu0 0.0
    %1237 = vmatpush2.msra.mxu0 0.0
    %1238 = vmatprep.subr.mxu0 0.0
    %1239 = vmatpush2.msra.mxu0 0.0
    %1240 = vmatprep.subr.mxu0 0.0
    %1241 = vmatpush2.msra.mxu0 0.0
    %1242 = vmatprep.subr.mxu0 0.0
    %1243 = vmatpush2.msra.mxu0 0.0
    %1244 = vmatprep.subr.mxu0 0.0
    %1245 = vmatpush2.msra.mxu0 0.0
    %1246 = vmatprep.subr.mxu0 0.0
    %1247 = vmatpush2.msra.mxu0 0.0
    %1248 = vmatprep.subr.mxu0 0.0
    %1249 = vmatpush2.msra.mxu0 0.0
    %1250 = vmatprep.subr.mxu0 0.0
    %1251 = vmatpush2.msra.mxu0 0.0
    %1252 = vmatprep.subr.mxu0 0.0
    %1253 = vmatpush2.msra.mxu0 0.0
    %1254 = vmatprep.subr.mxu0 0.0
    %1255 = vmatpush2.msra.mxu0 0.0
    %1256 = vmatprep.subr.mxu0 0.0
    %1257 = vmatpush2.msra.mxu0 0.0
    %1258 = vmatprep.subr.mxu0 0.0
    %1259 = vmatpush2.msra.mxu0 0.0
    %1260 = vmatprep.mubr.f32.mxu0 0.0
    %1261 = vmatmul.mubr.f32.gmra.mxu0 %v1123
    %v1262 = vpop.f32.mrf.mxu0
    %v1263 = vadd.f32 %v169, %v1262
    %v1264 = vpop.f32.mrf.mxu0
    %v1265 = vadd.f32 %v173, %v1264
    %1266 = vdwg.mxu0
    %s1267 = scalar_lea.vmem %s0, 32
    %v1268 = vld [vmem:[%s1267] sm:$0xff]
    %v1270 = vsel %vm178, %v1268, 0
    %1272 = vmatprep.subr.mxu0 0.0
    %1273 = vmatpush1.msra.mxu0 0.0
    %1274 = vmatprep.subr.mxu0 0.0
    %1275 = vmatpush1.msra.mxu0 0.0
    %1276 = vmatprep.subr.mxu0 0.0
    %1277 = vmatpush1.msra.mxu0 0.0
    %1278 = vmatprep.subr.mxu0 0.0
    %1279 = vmatpush1.msra.mxu0 0.0
    %1280 = vmatprep.subr.mxu0 0.0
    %1281 = vmatpush1.msra.mxu0 0.0
    %1282 = vmatprep.subr.mxu0 0.0
    %1283 = vmatpush1.msra.mxu0 0.0
    %1284 = vmatprep.subr.mxu0 0.0
    %1285 = vmatpush1.msra.mxu0 0.0
    %1286 = vmatprep.subr.mxu0 0.0
    %1287 = vmatpush1.msra.mxu0 0.0
    %1288 = vmatprep.subr.mxu0 0.0
    %1289 = vmatpush1.msra.mxu0 0.0
    %1290 = vmatprep.subr.mxu0 0.0
    %1291 = vmatpush1.msra.mxu0 0.0
    %1292 = vmatprep.subr.mxu0 0.0
    %1293 = vmatpush1.msra.mxu0 0.0
    %1294 = vmatprep.subr.mxu0 0.0
    %1295 = vmatpush1.msra.mxu0 0.0
    %1296 = vmatprep.subr.mxu0 %v31
    %1297 = vmatpush1.msra.mxu0 %v30
    %1298 = vmatprep.subr.mxu0 %v27
    %1299 = vmatpush1.msra.mxu0 %v26
    %1300 = vmatprep.subr.mxu0 %v23
    %1301 = vmatpush1.msra.mxu0 %v22
    %1302 = vmatprep.subr.mxu0 %v19
    %1303 = vmatpush1.msra.mxu0 %v18
    %1304 = vmatprep.subr.mxu0 0.0
    %1305 = vmatpush2.msra.mxu0 0.0
    %1306 = vmatprep.subr.mxu0 0.0
    %1307 = vmatpush2.msra.mxu0 0.0
    %1308 = vmatprep.subr.mxu0 0.0
    %1309 = vmatpush2.msra.mxu0 0.0
    %1310 = vmatprep.subr.mxu0 0.0
    %1311 = vmatpush2.msra.mxu0 0.0
    %1312 = vmatprep.subr.mxu0 0.0
    %1313 = vmatpush2.msra.mxu0 0.0
    %1314 = vmatprep.subr.mxu0 0.0
    %1315 = vmatpush2.msra.mxu0 0.0
    %1316 = vmatprep.subr.mxu0 0.0
    %1317 = vmatpush2.msra.mxu0 0.0
    %1318 = vmatprep.subr.mxu0 0.0
    %1319 = vmatpush2.msra.mxu0 0.0
    %1320 = vmatprep.subr.mxu0 0.0
    %1321 = vmatpush2.msra.mxu0 0.0
    %1322 = vmatprep.subr.mxu0 0.0
    %1323 = vmatpush2.msra.mxu0 0.0
    %1324 = vmatprep.subr.mxu0 0.0
    %1325 = vmatpush2.msra.mxu0 0.0
    %1326 = vmatprep.subr.mxu0 0.0
    %1327 = vmatpush2.msra.mxu0 0.0
    %1328 = vmatprep.subr.mxu0 0.0
    %1329 = vmatpush2.msra.mxu0 0.0
    %1330 = vmatprep.subr.mxu0 0.0
    %1331 = vmatpush2.msra.mxu0 0.0
    %1332 = vmatprep.subr.mxu0 0.0
    %1333 = vmatpush2.msra.mxu0 0.0
    %1334 = vmatprep.subr.mxu0 0.0
    %1335 = vmatpush2.msra.mxu0 0.0
    %1336 = vmatprep.mubr.f32.mxu0 0.0
    %1337 = vmatmul.mubr.f32.gmra.mxu0 %v1270
    %v1338 = vpop.f32.mrf.mxu0
    %v1339 = vadd.f32 %v161, %v1338
    %v1340 = vpop.f32.mrf.mxu0
    %v1341 = vadd.f32 %v165, %v1340
    %1342 = vdwg.mxu0
    %1343 = vmatprep.subr.mxu0 0.0
    %1344 = vmatpush1.msra.mxu0 0.0
    %1345 = vmatprep.subr.mxu0 0.0
    %1346 = vmatpush1.msra.mxu0 0.0
    %1347 = vmatprep.subr.mxu0 0.0
    %1348 = vmatpush1.msra.mxu0 0.0
    %1349 = vmatprep.subr.mxu0 0.0
    %1350 = vmatpush1.msra.mxu0 0.0
    %1351 = vmatprep.subr.mxu0 0.0
    %1352 = vmatpush1.msra.mxu0 0.0
    %1353 = vmatprep.subr.mxu0 0.0
    %1354 = vmatpush1.msra.mxu0 0.0
    %1355 = vmatprep.subr.mxu0 0.0
    %1356 = vmatpush1.msra.mxu0 0.0
    %1357 = vmatprep.subr.mxu0 0.0
    %1358 = vmatpush1.msra.mxu0 0.0
    %1359 = vmatprep.subr.mxu0 0.0
    %1360 = vmatpush1.msra.mxu0 0.0
    %1361 = vmatprep.subr.mxu0 0.0
    %1362 = vmatpush1.msra.mxu0 0.0
    %1363 = vmatprep.subr.mxu0 0.0
    %1364 = vmatpush1.msra.mxu0 0.0
    %1365 = vmatprep.subr.mxu0 0.0
    %1366 = vmatpush1.msra.mxu0 0.0
    %1367 = vmatprep.subr.mxu0 %v33
    %1368 = vmatpush1.msra.mxu0 %v32
    %1369 = vmatprep.subr.mxu0 %v29
    %1370 = vmatpush1.msra.mxu0 %v28
    %1371 = vmatprep.subr.mxu0 %v25
    %1372 = vmatpush1.msra.mxu0 %v24
    %1373 = vmatprep.subr.mxu0 %v21
    %1374 = vmatpush1.msra.mxu0 %v20
    %1375 = vmatprep.subr.mxu0 0.0
    %1376 = vmatpush2.msra.mxu0 0.0
    %1377 = vmatprep.subr.mxu0 0.0
    %1378 = vmatpush2.msra.mxu0 0.0
    %1379 = vmatprep.subr.mxu0 0.0
    %1380 = vmatpush2.msra.mxu0 0.0
    %1381 = vmatprep.subr.mxu0 0.0
    %1382 = vmatpush2.msra.mxu0 0.0
    %1383 = vmatprep.subr.mxu0 0.0
    %1384 = vmatpush2.msra.mxu0 0.0
    %1385 = vmatprep.subr.mxu0 0.0
    %1386 = vmatpush2.msra.mxu0 0.0
    %1387 = vmatprep.subr.mxu0 0.0
    %1388 = vmatpush2.msra.mxu0 0.0
    %1389 = vmatprep.subr.mxu0 0.0
    %1390 = vmatpush2.msra.mxu0 0.0
    %1391 = vmatprep.subr.mxu0 0.0
    %1392 = vmatpush2.msra.mxu0 0.0
    %1393 = vmatprep.subr.mxu0 0.0
    %1394 = vmatpush2.msra.mxu0 0.0
    %1395 = vmatprep.subr.mxu0 0.0
    %1396 = vmatpush2.msra.mxu0 0.0
    %1397 = vmatprep.subr.mxu0 0.0
    %1398 = vmatpush2.msra.mxu0 0.0
    %1399 = vmatprep.subr.mxu0 0.0
    %1400 = vmatpush2.msra.mxu0 0.0
    %1401 = vmatprep.subr.mxu0 0.0
    %1402 = vmatpush2.msra.mxu0 0.0
    %1403 = vmatprep.subr.mxu0 0.0
    %1404 = vmatpush2.msra.mxu0 0.0
    %1405 = vmatprep.subr.mxu0 0.0
    %1406 = vmatpush2.msra.mxu0 0.0
    %1407 = vmatprep.mubr.f32.mxu0 0.0
    %1408 = vmatmul.mubr.f32.gmra.mxu0 %v1270
    %v1409 = vpop.f32.mrf.mxu0
    %v1410 = vadd.f32 %v169, %v1409
    %v1411 = vpop.f32.mrf.mxu0
    %v1412 = vadd.f32 %v173, %v1411
    %1413 = vdwg.mxu0
    %v1414 = vsel %vm475, %v1192, %v1339
    %v1415 = vsel %vm476, %v1194, %v1341
    %v1416 = vsel %vm477, %v1263, %v1410
    %v1417 = vsel %vm478, %v1265, %v1412
    %s1418 = scalar_lea.vmem [#allocation2], 96
    %1419 = vst [vmem:[%s1418] sm:$0xff] %v1414
    %1420 = vst [vmem:[%s1418 + $0x8] sm:$0xff] %v1415
    %1421 = vst [vmem:[%s1418 + $0x10] sm:$0xff] %v1416
    %1422 = vst [vmem:[%s1418 + $0x18] sm:$0xff] %v1417
    %v1423 = vsel %vm475, %v1339, %v1192
    %v1424 = vsel %vm476, %v1341, %v1194
    %v1425 = vsel %vm477, %v1410, %v1263
    %v1426 = vsel %vm478, %v1412, %v1265
    %s1427 = scalar_lea.vmem [#allocation2], 128
    %1428 = vst [vmem:[%s1427] sm:$0xff] %v1423
    %1429 = vst [vmem:[%s1427 + $0x8] sm:$0xff] %v1424
    %1430 = vst [vmem:[%s1427 + $0x10] sm:$0xff] %v1425
    %1431 = vst [vmem:[%s1427 + $0x18] sm:$0xff] %v1426
    %v1432 = vld [vmem:[#allocation2] sm:$0xff]
    %v1433 = vld [vmem:[#allocation2 + $0x8] sm:$0xff]
    %v1434 = vld [vmem:[#allocation2 + $0x10] sm:$0xff]
    %v1435 = vld [vmem:[#allocation2 + $0x18] sm:$0xff]
    %1436 = vmatprep.subr.mxu0 %v95
    %1437 = vmatpush1.msra.mxu0 %v94
    %1438 = vmatprep.subr.mxu0 %v91
    %1439 = vmatpush1.msra.mxu0 %v90
    %1440 = vmatprep.subr.mxu0 %v87
    %1441 = vmatpush1.msra.mxu0 %v86
    %1442 = vmatprep.subr.mxu0 %v83
    %1443 = vmatpush1.msra.mxu0 %v82
    %1444 = vmatprep.subr.mxu0 %v79
    %1445 = vmatpush1.msra.mxu0 %v78
    %1446 = vmatprep.subr.mxu0 %v75
    %1447 = vmatpush1.msra.mxu0 %v74
    %1448 = vmatprep.subr.mxu0 %v71
    %1449 = vmatpush1.msra.mxu0 %v70
    %1450 = vmatprep.subr.mxu0 %v67
    %1451 = vmatpush1.msra.mxu0 %v66
    %1452 = vmatprep.subr.mxu0 %v63
    %1453 = vmatpush1.msra.mxu0 %v62
    %1454 = vmatprep.subr.mxu0 %v59
    %1455 = vmatpush1.msra.mxu0 %v58
    %1456 = vmatprep.subr.mxu0 %v55
    %1457 = vmatpush1.msra.mxu0 %v54
    %1458 = vmatprep.subr.mxu0 %v51
    %1459 = vmatpush1.msra.mxu0 %v50
    %1460 = vmatprep.subr.mxu0 %v47
    %1461 = vmatpush1.msra.mxu0 %v46
    %1462 = vmatprep.subr.mxu0 %v43
    %1463 = vmatpush1.msra.mxu0 %v42
    %1464 = vmatprep.subr.mxu0 %v39
    %1465 = vmatpush1.msra.mxu0 %v38
    %1466 = vmatprep.subr.mxu0 %v35
    %1467 = vmatpush1.msra.mxu0 %v34
    %1468 = vmatprep.subr.mxu0 0.0
    %1469 = vmatpush2.msra.mxu0 0.0
    %1470 = vmatprep.subr.mxu0 0.0
    %1471 = vmatpush2.msra.mxu0 0.0
    %1472 = vmatprep.subr.mxu0 0.0
    %1473 = vmatpush2.msra.mxu0 0.0
    %1474 = vmatprep.subr.mxu0 0.0
    %1475 = vmatpush2.msra.mxu0 0.0
    %1476 = vmatprep.subr.mxu0 0.0
    %1477 = vmatpush2.msra.mxu0 0.0
    %1478 = vmatprep.subr.mxu0 0.0
    %1479 = vmatpush2.msra.mxu0 0.0
    %1480 = vmatprep.subr.mxu0 0.0
    %1481 = vmatpush2.msra.mxu0 0.0
    %1482 = vmatprep.subr.mxu0 0.0
    %1483 = vmatpush2.msra.mxu0 0.0
    %1484 = vmatprep.subr.mxu0 0.0
    %1485 = vmatpush2.msra.mxu0 0.0
    %1486 = vmatprep.subr.mxu0 0.0
    %1487 = vmatpush2.msra.mxu0 0.0
    %1488 = vmatprep.subr.mxu0 0.0
    %1489 = vmatpush2.msra.mxu0 0.0
    %1490 = vmatprep.subr.mxu0 0.0
    %1491 = vmatpush2.msra.mxu0 0.0
    %1492 = vmatprep.subr.mxu0 0.0
    %1493 = vmatpush2.msra.mxu0 0.0
    %1494 = vmatprep.subr.mxu0 0.0
    %1495 = vmatpush2.msra.mxu0 0.0
    %1496 = vmatprep.subr.mxu0 0.0
    %1497 = vmatpush2.msra.mxu0 0.0
    %1498 = vmatprep.subr.mxu0 0.0
    %1499 = vmatpush2.msra.mxu0 0.0
    %1500 = vmatprep.mubr.f32.mxu0 0.0
    %1501 = vmatmul.mubr.f32.gmra.mxu0 0.0
    %v1502 = vpop.f32.mrf.mxu0
    %v1503 = vadd.f32 0.0, %v1502
    %v1504 = vpop.f32.mrf.mxu0
    %v1505 = vadd.f32 0.0, %v1504
    %1506 = vdwg.mxu0
    %1507 = vmatprep.subr.mxu0 %v97
    %1508 = vmatpush1.msra.mxu0 %v96
    %1509 = vmatprep.subr.mxu0 %v93
    %1510 = vmatpush1.msra.mxu0 %v92
    %1511 = vmatprep.subr.mxu0 %v89
    %1512 = vmatpush1.msra.mxu0 %v88
    %1513 = vmatprep.subr.mxu0 %v85
    %1514 = vmatpush1.msra.mxu0 %v84
    %1515 = vmatprep.subr.mxu0 %v81
    %1516 = vmatpush1.msra.mxu0 %v80
    %1517 = vmatprep.subr.mxu0 %v77
    %1518 = vmatpush1.msra.mxu0 %v76
    %1519 = vmatprep.subr.mxu0 %v73
    %1520 = vmatpush1.msra.mxu0 %v72
    %1521 = vmatprep.subr.mxu0 %v69
    %1522 = vmatpush1.msra.mxu0 %v68
    %1523 = vmatprep.subr.mxu0 %v65
    %1524 = vmatpush1.msra.mxu0 %v64
    %1525 = vmatprep.subr.mxu0 %v61
    %1526 = vmatpush1.msra.mxu0 %v60
    %1527 = vmatprep.subr.mxu0 %v57
    %1528 = vmatpush1.msra.mxu0 %v56
    %1529 = vmatprep.subr.mxu0 %v53
    %1530 = vmatpush1.msra.mxu0 %v52
    %1531 = vmatprep.subr.mxu0 %v49
    %1532 = vmatpush1.msra.mxu0 %v48
    %1533 = vmatprep.subr.mxu0 %v45
    %1534 = vmatpush1.msra.mxu0 %v44
    %1535 = vmatprep.subr.mxu0 %v41
    %1536 = vmatpush1.msra.mxu0 %v40
    %1537 = vmatprep.subr.mxu0 %v37
    %1538 = vmatpush1.msra.mxu0 %v36
    %1539 = vmatprep.subr.mxu0 0.0
    %1540 = vmatpush2.msra.mxu0 0.0
    %1541 = vmatprep.subr.mxu0 0.0
    %1542 = vmatpush2.msra.mxu0 0.0
    %1543 = vmatprep.subr.mxu0 0.0
    %1544 = vmatpush2.msra.mxu0 0.0
    %1545 = vmatprep.subr.mxu0 0.0
    %1546 = vmatpush2.msra.mxu0 0.0
    %1547 = vmatprep.subr.mxu0 0.0
    %1548 = vmatpush2.msra.mxu0 0.0
    %1549 = vmatprep.subr.mxu0 0.0
    %1550 = vmatpush2.msra.mxu0 0.0
    %1551 = vmatprep.subr.mxu0 0.0
    %1552 = vmatpush2.msra.mxu0 0.0
    %1553 = vmatprep.subr.mxu0 0.0
    %1554 = vmatpush2.msra.mxu0 0.0
    %1555 = vmatprep.subr.mxu0 0.0
    %1556 = vmatpush2.msra.mxu0 0.0
    %1557 = vmatprep.subr.mxu0 0.0
    %1558 = vmatpush2.msra.mxu0 0.0
    %1559 = vmatprep.subr.mxu0 0.0
    %1560 = vmatpush2.msra.mxu0 0.0
    %1561 = vmatprep.subr.mxu0 0.0
    %1562 = vmatpush2.msra.mxu0 0.0
    %1563 = vmatprep.subr.mxu0 0.0
    %1564 = vmatpush2.msra.mxu0 0.0
    %1565 = vmatprep.subr.mxu0 0.0
    %1566 = vmatpush2.msra.mxu0 0.0
    %1567 = vmatprep.subr.mxu0 0.0
    %1568 = vmatpush2.msra.mxu0 0.0
    %1569 = vmatprep.subr.mxu0 0.0
    %1570 = vmatpush2.msra.mxu0 0.0
    %1571 = vmatprep.mubr.f32.mxu0 0.0
    %1572 = vmatmul.mubr.f32.gmra.mxu0 0.0
    %v1573 = vpop.f32.mrf.mxu0
    %v1574 = vadd.f32 0.0, %v1573
    %v1575 = vpop.f32.mrf.mxu0
    %v1576 = vadd.f32 0.0, %v1575
    %1577 = vdwg.mxu0
    %v1578 = vadd.f32 %v1432, %v1503
    %v1579 = vadd.f32 %v1433, %v1505
    %v1580 = vadd.f32 %v1434, %v1574
    %v1581 = vadd.f32 %v1435, %v1576
    %v1582 = vxor.u32 %v1578, 2147483648
    %v1583 = vmul.f32 %v1582, 1.442695
    %v1584 = vpow.pop %v1583
    %v1585 = vadd.f32 %v1584, 1.0
    %v1586 = vrcp.pop %v1585
    %v1587 = vmul.f32 1.0, %v1586
    %v1588 = vxor.u32 %v1579, 2147483648
    %v1589 = vmul.f32 %v1588, 1.442695
    %v1590 = vpow.pop %v1589
    %v1591 = vadd.f32 %v1590, 1.0
    %v1592 = vrcp.pop %v1591
    %v1593 = vmul.f32 1.0, %v1592
    %v1594 = vtanh.pop %v1580
    %v1595 = vxor.u32 %v1581, 2147483648
    %v1596 = vmul.f32 %v1595, 1.442695
    %v1597 = vpow.pop %v1596
    %v1598 = vadd.f32 %v1597, 1.0
    %v1599 = vrcp.pop %v1598
    %v1600 = vmul.f32 1.0, %v1599
    %v1601 = vmul.f32 %v1593, 0.0
    %v1602 = vmul.f32 %v1587, %v1594
    %v1603 = vadd.f32 %v1601, %v1602
    %v1604 = vtanh.pop %v1603
    %v1605 = vmul.f32 %v1600, %v1604
    %v1606 = vld [vmem:[%s794] sm:$0xff]
    %v1607 = vld [vmem:[%s794 + $0x8] sm:$0xff]
    %v1608 = vld [vmem:[%s794 + $0x10] sm:$0xff]
    %v1609 = vld [vmem:[%s794 + $0x18] sm:$0xff]
    %1610 = vmatprep.subr.mxu0 %v95
    %1611 = vmatpush1.msra.mxu0 %v94
    %1612 = vmatprep.subr.mxu0 %v91
    %1613 = vmatpush1.msra.mxu0 %v90
    %1614 = vmatprep.subr.mxu0 %v87
    %1615 = vmatpush1.msra.mxu0 %v86
    %1616 = vmatprep.subr.mxu0 %v83
    %1617 = vmatpush1.msra.mxu0 %v82
    %1618 = vmatprep.subr.mxu0 %v79
    %1619 = vmatpush1.msra.mxu0 %v78
    %1620 = vmatprep.subr.mxu0 %v75
    %1621 = vmatpush1.msra.mxu0 %v74
    %1622 = vmatprep.subr.mxu0 %v71
    %1623 = vmatpush1.msra.mxu0 %v70
    %1624 = vmatprep.subr.mxu0 %v67
    %1625 = vmatpush1.msra.mxu0 %v66
    %1626 = vmatprep.subr.mxu0 %v63
    %1627 = vmatpush1.msra.mxu0 %v62
    %1628 = vmatprep.subr.mxu0 %v59
    %1629 = vmatpush1.msra.mxu0 %v58
    %1630 = vmatprep.subr.mxu0 %v55
    %1631 = vmatpush1.msra.mxu0 %v54
    %1632 = vmatprep.subr.mxu0 %v51
    %1633 = vmatpush1.msra.mxu0 %v50
    %1634 = vmatprep.subr.mxu0 %v47
    %1635 = vmatpush1.msra.mxu0 %v46
    %1636 = vmatprep.subr.mxu0 %v43
    %1637 = vmatpush1.msra.mxu0 %v42
    %1638 = vmatprep.subr.mxu0 %v39
    %1639 = vmatpush1.msra.mxu0 %v38
    %1640 = vmatprep.subr.mxu0 %v35
    %1641 = vmatpush1.msra.mxu0 %v34
    %1642 = vmatprep.subr.mxu0 0.0
    %1643 = vmatpush2.msra.mxu0 0.0
    %1644 = vmatprep.subr.mxu0 0.0
    %1645 = vmatpush2.msra.mxu0 0.0
    %1646 = vmatprep.subr.mxu0 0.0
    %1647 = vmatpush2.msra.mxu0 0.0
    %1648 = vmatprep.subr.mxu0 0.0
    %1649 = vmatpush2.msra.mxu0 0.0
    %1650 = vmatprep.subr.mxu0 0.0
    %1651 = vmatpush2.msra.mxu0 0.0
    %1652 = vmatprep.subr.mxu0 0.0
    %1653 = vmatpush2.msra.mxu0 0.0
    %1654 = vmatprep.subr.mxu0 0.0
    %1655 = vmatpush2.msra.mxu0 0.0
    %1656 = vmatprep.subr.mxu0 0.0
    %1657 = vmatpush2.msra.mxu0 0.0
    %1658 = vmatprep.subr.mxu0 0.0
    %1659 = vmatpush2.msra.mxu0 0.0
    %1660 = vmatprep.subr.mxu0 0.0
    %1661 = vmatpush2.msra.mxu0 0.0
    %1662 = vmatprep.subr.mxu0 0.0
    %1663 = vmatpush2.msra.mxu0 0.0
    %1664 = vmatprep.subr.mxu0 0.0
    %1665 = vmatpush2.msra.mxu0 0.0
    %1666 = vmatprep.subr.mxu0 0.0
    %1667 = vmatpush2.msra.mxu0 0.0
    %1668 = vmatprep.subr.mxu0 0.0
    %1669 = vmatpush2.msra.mxu0 0.0
    %1670 = vmatprep.subr.mxu0 0.0
    %1671 = vmatpush2.msra.mxu0 0.0
    %1672 = vmatprep.subr.mxu0 0.0
    %1673 = vmatpush2.msra.mxu0 0.0
    %1674 = vmatprep.mubr.f32.mxu0 0.0
    %1675 = vmatmul.mubr.f32.gmra.mxu0 %v1605
    %v1676 = vpop.f32.mrf.mxu0
    %v1677 = vadd.f32 0.0, %v1676
    %v1678 = vpop.f32.mrf.mxu0
    %v1679 = vadd.f32 0.0, %v1678
    %1680 = vdwg.mxu0
    %1681 = vmatprep.subr.mxu0 %v97
    %1682 = vmatpush1.msra.mxu0 %v96
    %1683 = vmatprep.subr.mxu0 %v93
    %1684 = vmatpush1.msra.mxu0 %v92
    %1685 = vmatprep.subr.mxu0 %v89
    %1686 = vmatpush1.msra.mxu0 %v88
    %1687 = vmatprep.subr.mxu0 %v85
    %1688 = vmatpush1.msra.mxu0 %v84
    %1689 = vmatprep.subr.mxu0 %v81
    %1690 = vmatpush1.msra.mxu0 %v80
    %1691 = vmatprep.subr.mxu0 %v77
    %1692 = vmatpush1.msra.mxu0 %v76
    %1693 = vmatprep.subr.mxu0 %v73
    %1694 = vmatpush1.msra.mxu0 %v72
    %1695 = vmatprep.subr.mxu0 %v69
    %1696 = vmatpush1.msra.mxu0 %v68
    %1697 = vmatprep.subr.mxu0 %v65
    %1698 = vmatpush1.msra.mxu0 %v64
    %1699 = vmatprep.subr.mxu0 %v61
    %1700 = vmatpush1.msra.mxu0 %v60
    %1701 = vmatprep.subr.mxu0 %v57
    %1702 = vmatpush1.msra.mxu0 %v56
    %1703 = vmatprep.subr.mxu0 %v53
    %1704 = vmatpush1.msra.mxu0 %v52
    %1705 = vmatprep.subr.mxu0 %v49
    %1706 = vmatpush1.msra.mxu0 %v48
    %1707 = vmatprep.subr.mxu0 %v45
    %1708 = vmatpush1.msra.mxu0 %v44
    %1709 = vmatprep.subr.mxu0 %v41
    %1710 = vmatpush1.msra.mxu0 %v40
    %1711 = vmatprep.subr.mxu0 %v37
    %1712 = vmatpush1.msra.mxu0 %v36
    %1713 = vmatprep.subr.mxu0 0.0
    %1714 = vmatpush2.msra.mxu0 0.0
    %1715 = vmatprep.subr.mxu0 0.0
    %1716 = vmatpush2.msra.mxu0 0.0
    %1717 = vmatprep.subr.mxu0 0.0
    %1718 = vmatpush2.msra.mxu0 0.0
    %1719 = vmatprep.subr.mxu0 0.0
    %1720 = vmatpush2.msra.mxu0 0.0
    %1721 = vmatprep.subr.mxu0 0.0
    %1722 = vmatpush2.msra.mxu0 0.0
    %1723 = vmatprep.subr.mxu0 0.0
    %1724 = vmatpush2.msra.mxu0 0.0
    %1725 = vmatprep.subr.mxu0 0.0
    %1726 = vmatpush2.msra.mxu0 0.0
    %1727 = vmatprep.subr.mxu0 0.0
    %1728 = vmatpush2.msra.mxu0 0.0
    %1729 = vmatprep.subr.mxu0 0.0
    %1730 = vmatpush2.msra.mxu0 0.0
    %1731 = vmatprep.subr.mxu0 0.0
    %1732 = vmatpush2.msra.mxu0 0.0
    %1733 = vmatprep.subr.mxu0 0.0
    %1734 = vmatpush2.msra.mxu0 0.0
    %1735 = vmatprep.subr.mxu0 0.0
    %1736 = vmatpush2.msra.mxu0 0.0
    %1737 = vmatprep.subr.mxu0 0.0
    %1738 = vmatpush2.msra.mxu0 0.0
    %1739 = vmatprep.subr.mxu0 0.0
    %1740 = vmatpush2.msra.mxu0 0.0
    %1741 = vmatprep.subr.mxu0 0.0
    %1742 = vmatpush2.msra.mxu0 0.0
    %1743 = vmatprep.subr.mxu0 0.0
    %1744 = vmatpush2.msra.mxu0 0.0
    %1745 = vmatprep.mubr.f32.mxu0 0.0
    %1746 = vmatmul.mubr.f32.gmra.mxu0 %v1605
    %v1747 = vpop.f32.mrf.mxu0
    %v1748 = vadd.f32 0.0, %v1747
    %v1749 = vpop.f32.mrf.mxu0
    %v1750 = vadd.f32 0.0, %v1749
    %1751 = vdwg.mxu0
    %v1752 = vadd.f32 %v1606, %v1677
    %v1753 = vadd.f32 %v1607, %v1679
    %v1754 = vadd.f32 %v1608, %v1748
    %v1755 = vadd.f32 %v1609, %v1750
    %v1756 = vxor.u32 %v1752, 2147483648
    %v1757 = vmul.f32 %v1756, 1.442695
    %v1758 = vpow.pop %v1757
    %v1759 = vadd.f32 %v1758, 1.0
    %v1760 = vrcp.pop %v1759
    %v1761 = vmul.f32 1.0, %v1760
    %v1762 = vxor.u32 %v1753, 2147483648
    %v1763 = vmul.f32 %v1762, 1.442695
    %v1764 = vpow.pop %v1763
    %v1765 = vadd.f32 %v1764, 1.0
    %v1766 = vrcp.pop %v1765
    %v1767 = vmul.f32 1.0, %v1766
    %v1768 = vtanh.pop %v1754
    %v1769 = vxor.u32 %v1755, 2147483648
    %v1770 = vmul.f32 %v1769, 1.442695
    %v1771 = vpow.pop %v1770
    %v1772 = vadd.f32 %v1771, 1.0
    %v1773 = vrcp.pop %v1772
    %v1774 = vmul.f32 1.0, %v1773
    %v1775 = vmul.f32 %v1767, %v1603
    %v1776 = vmul.f32 %v1761, %v1768
    %v1777 = vadd.f32 %v1775, %v1776
    %v1778 = vtanh.pop %v1777
    %v1779 = vmul.f32 %v1774, %v1778
    %v1780 = vld [vmem:[%s1106] sm:$0xff]
    %v1781 = vld [vmem:[%s1106 + $0x8] sm:$0xff]
    %v1782 = vld [vmem:[%s1106 + $0x10] sm:$0xff]
    %v1783 = vld [vmem:[%s1106 + $0x18] sm:$0xff]
    %1784 = vmatprep.subr.mxu0 %v95
    %1785 = vmatpush1.msra.mxu0 %v94
    %1786 = vmatprep.subr.mxu0 %v91
    %1787 = vmatpush1.msra.mxu0 %v90
    %1788 = vmatprep.subr.mxu0 %v87
    %1789 = vmatpush1.msra.mxu0 %v86
    %1790 = vmatprep.subr.mxu0 %v83
    %1791 = vmatpush1.msra.mxu0 %v82
    %1792 = vmatprep.subr.mxu0 %v79
    %1793 = vmatpush1.msra.mxu0 %v78
    %1794 = vmatprep.subr.mxu0 %v75
    %1795 = vmatpush1.msra.mxu0 %v74
    %1796 = vmatprep.subr.mxu0 %v71
    %1797 = vmatpush1.msra.mxu0 %v70
    %1798 = vmatprep.subr.mxu0 %v67
    %1799 = vmatpush1.msra.mxu0 %v66
    %1800 = vmatprep.subr.mxu0 %v63
    %1801 = vmatpush1.msra.mxu0 %v62
    %1802 = vmatprep.subr.mxu0 %v59
    %1803 = vmatpush1.msra.mxu0 %v58
    %1804 = vmatprep.subr.mxu0 %v55
    %1805 = vmatpush1.msra.mxu0 %v54
    %1806 = vmatprep.subr.mxu0 %v51
    %1807 = vmatpush1.msra.mxu0 %v50
    %1808 = vmatprep.subr.mxu0 %v47
    %1809 = vmatpush1.msra.mxu0 %v46
    %1810 = vmatprep.subr.mxu0 %v43
    %1811 = vmatpush1.msra.mxu0 %v42
    %1812 = vmatprep.subr.mxu0 %v39
    %1813 = vmatpush1.msra.mxu0 %v38
    %1814 = vmatprep.subr.mxu0 %v35
    %1815 = vmatpush1.msra.mxu0 %v34
    %1816 = vmatprep.subr.mxu0 0.0
    %1817 = vmatpush2.msra.mxu0 0.0
    %1818 = vmatprep.subr.mxu0 0.0
    %1819 = vmatpush2.msra.mxu0 0.0
    %1820 = vmatprep.subr.mxu0 0.0
    %1821 = vmatpush2.msra.mxu0 0.0
    %1822 = vmatprep.subr.mxu0 0.0
    %1823 = vmatpush2.msra.mxu0 0.0
    %1824 = vmatprep.subr.mxu0 0.0
    %1825 = vmatpush2.msra.mxu0 0.0
    %1826 = vmatprep.subr.mxu0 0.0
    %1827 = vmatpush2.msra.mxu0 0.0
    %1828 = vmatprep.subr.mxu0 0.0
    %1829 = vmatpush2.msra.mxu0 0.0
    %1830 = vmatprep.subr.mxu0 0.0
    %1831 = vmatpush2.msra.mxu0 0.0
    %1832 = vmatprep.subr.mxu0 0.0
    %1833 = vmatpush2.msra.mxu0 0.0
    %1834 = vmatprep.subr.mxu0 0.0
    %1835 = vmatpush2.msra.mxu0 0.0
    %1836 = vmatprep.subr.mxu0 0.0
    %1837 = vmatpush2.msra.mxu0 0.0
    %1838 = vmatprep.subr.mxu0 0.0
    %1839 = vmatpush2.msra.mxu0 0.0
    %1840 = vmatprep.subr.mxu0 0.0
    %1841 = vmatpush2.msra.mxu0 0.0
    %1842 = vmatprep.subr.mxu0 0.0
    %1843 = vmatpush2.msra.mxu0 0.0
    %1844 = vmatprep.subr.mxu0 0.0
    %1845 = vmatpush2.msra.mxu0 0.0
    %1846 = vmatprep.subr.mxu0 0.0
    %1847 = vmatpush2.msra.mxu0 0.0
    %1848 = vmatprep.mubr.f32.mxu0 0.0
    %1849 = vmatmul.mubr.f32.gmra.mxu0 %v1779
    %v1850 = vpop.f32.mrf.mxu0
    %v1851 = vadd.f32 0.0, %v1850
    %v1852 = vpop.f32.mrf.mxu0
    %v1853 = vadd.f32 0.0, %v1852
    %1854 = vdwg.mxu0
    %1855 = vmatprep.subr.mxu0 %v97
    %1856 = vmatpush1.msra.mxu0 %v96
    %1857 = vmatprep.subr.mxu0 %v93
    %1858 = vmatpush1.msra.mxu0 %v92
    %1859 = vmatprep.subr.mxu0 %v89
    %1860 = vmatpush1.msra.mxu0 %v88
    %1861 = vmatprep.subr.mxu0 %v85
    %1862 = vmatpush1.msra.mxu0 %v84
    %1863 = vmatprep.subr.mxu0 %v81
    %1864 = vmatpush1.msra.mxu0 %v80
    %1865 = vmatprep.subr.mxu0 %v77
    %1866 = vmatpush1.msra.mxu0 %v76
    %1867 = vmatprep.subr.mxu0 %v73
    %1868 = vmatpush1.msra.mxu0 %v72
    %1869 = vmatprep.subr.mxu0 %v69
    %1870 = vmatpush1.msra.mxu0 %v68
    %1871 = vmatprep.subr.mxu0 %v65
    %1872 = vmatpush1.msra.mxu0 %v64
    %1873 = vmatprep.subr.mxu0 %v61
    %1874 = vmatpush1.msra.mxu0 %v60
    %1875 = vmatprep.subr.mxu0 %v57
    %1876 = vmatpush1.msra.mxu0 %v56
    %1877 = vmatprep.subr.mxu0 %v53
    %1878 = vmatpush1.msra.mxu0 %v52
    %1879 = vmatprep.subr.mxu0 %v49
    %1880 = vmatpush1.msra.mxu0 %v48
    %1881 = vmatprep.subr.mxu0 %v45
    %1882 = vmatpush1.msra.mxu0 %v44
    %1883 = vmatprep.subr.mxu0 %v41
    %1884 = vmatpush1.msra.mxu0 %v40
    %1885 = vmatprep.subr.mxu0 %v37
    %1886 = vmatpush1.msra.mxu0 %v36
    %1887 = vmatprep.subr.mxu0 0.0
    %1888 = vmatpush2.msra.mxu0 0.0
    %1889 = vmatprep.subr.mxu0 0.0
    %1890 = vmatpush2.msra.mxu0 0.0
    %1891 = vmatprep.subr.mxu0 0.0
    %1892 = vmatpush2.msra.mxu0 0.0
    %1893 = vmatprep.subr.mxu0 0.0
    %1894 = vmatpush2.msra.mxu0 0.0
    %1895 = vmatprep.subr.mxu0 0.0
    %1896 = vmatpush2.msra.mxu0 0.0
    %1897 = vmatprep.subr.mxu0 0.0
    %1898 = vmatpush2.msra.mxu0 0.0
    %1899 = vmatprep.subr.mxu0 0.0
    %1900 = vmatpush2.msra.mxu0 0.0
    %1901 = vmatprep.subr.mxu0 0.0
    %1902 = vmatpush2.msra.mxu0 0.0
    %1903 = vmatprep.subr.mxu0 0.0
    %1904 = vmatpush2.msra.mxu0 0.0
    %1905 = vmatprep.subr.mxu0 0.0
    %1906 = vmatpush2.msra.mxu0 0.0
    %1907 = vmatprep.subr.mxu0 0.0
    %1908 = vmatpush2.msra.mxu0 0.0
    %1909 = vmatprep.subr.mxu0 0.0
    %1910 = vmatpush2.msra.mxu0 0.0
    %1911 = vmatprep.subr.mxu0 0.0
    %1912 = vmatpush2.msra.mxu0 0.0
    %1913 = vmatprep.subr.mxu0 0.0
    %1914 = vmatpush2.msra.mxu0 0.0
    %1915 = vmatprep.subr.mxu0 0.0
    %1916 = vmatpush2.msra.mxu0 0.0
    %1917 = vmatprep.subr.mxu0 0.0
    %1918 = vmatpush2.msra.mxu0 0.0
    %1919 = vmatprep.mubr.f32.mxu0 0.0
    %1920 = vmatmul.mubr.f32.gmra.mxu0 %v1779
    %v1921 = vpop.f32.mrf.mxu0
    %v1922 = vadd.f32 0.0, %v1921
    %v1923 = vpop.f32.mrf.mxu0
    %v1924 = vadd.f32 0.0, %v1923
    %1925 = vdwg.mxu0
    %v1926 = vadd.f32 %v1780, %v1851
    %v1927 = vadd.f32 %v1781, %v1853
    %v1928 = vadd.f32 %v1782, %v1922
    %v1929 = vadd.f32 %v1783, %v1924
    %v1930 = vxor.u32 %v1926, 2147483648
    %v1931 = vmul.f32 %v1930, 1.442695
    %v1932 = vpow.pop %v1931
    %v1933 = vadd.f32 %v1932, 1.0
    %v1934 = vrcp.pop %v1933
    %v1935 = vmul.f32 1.0, %v1934
    %v1936 = vxor.u32 %v1927, 2147483648
    %v1937 = vmul.f32 %v1936, 1.442695
    %v1938 = vpow.pop %v1937
    %v1939 = vadd.f32 %v1938, 1.0
    %v1940 = vrcp.pop %v1939
    %v1941 = vmul.f32 1.0, %v1940
    %v1942 = vtanh.pop %v1928
    %v1943 = vxor.u32 %v1929, 2147483648
    %v1944 = vmul.f32 %v1943, 1.442695
    %v1945 = vpow.pop %v1944
    %v1946 = vadd.f32 %v1945, 1.0
    %v1947 = vrcp.pop %v1946
    %v1948 = vmul.f32 1.0, %v1947
    %v1949 = vmul.f32 %v1941, %v1777
    %v1950 = vmul.f32 %v1935, %v1942
    %v1951 = vadd.f32 %v1949, %v1950
    %v1952 = vtanh.pop %v1951
    %v1953 = vmul.f32 %v1948, %v1952
    %v1954 = vld [vmem:[%s1418] sm:$0xff]
    %v1955 = vld [vmem:[%s1418 + $0x8] sm:$0xff]
    %v1956 = vld [vmem:[%s1418 + $0x10] sm:$0xff]
    %v1957 = vld [vmem:[%s1418 + $0x18] sm:$0xff]
    %1958 = vmatprep.subr.mxu0 %v95
    %1959 = vmatpush1.msra.mxu0 %v94
    %1960 = vmatprep.subr.mxu0 %v91
    %1961 = vmatpush1.msra.mxu0 %v90
    %1962 = vmatprep.subr.mxu0 %v87
    %1963 = vmatpush1.msra.mxu0 %v86
    %1964 = vmatprep.subr.mxu0 %v83
    %1965 = vmatpush1.msra.mxu0 %v82
    %1966 = vmatprep.subr.mxu0 %v79
    %1967 = vmatpush1.msra.mxu0 %v78
    %1968 = vmatprep.subr.mxu0 %v75
    %1969 = vmatpush1.msra.mxu0 %v74
    %1970 = vmatprep.subr.mxu0 %v71
    %1971 = vmatpush1.msra.mxu0 %v70
    %1972 = vmatprep.subr.mxu0 %v67
    %1973 = vmatpush1.msra.mxu0 %v66
    %1974 = vmatprep.subr.mxu0 %v63
    %1975 = vmatpush1.msra.mxu0 %v62
    %1976 = vmatprep.subr.mxu0 %v59
    %1977 = vmatpush1.msra.mxu0 %v58
    %1978 = vmatprep.subr.mxu0 %v55
    %1979 = vmatpush1.msra.mxu0 %v54
    %1980 = vmatprep.subr.mxu0 %v51
    %1981 = vmatpush1.msra.mxu0 %v50
    %1982 = vmatprep.subr.mxu0 %v47
    %1983 = vmatpush1.msra.mxu0 %v46
    %1984 = vmatprep.subr.mxu0 %v43
    %1985 = vmatpush1.msra.mxu0 %v42
    %1986 = vmatprep.subr.mxu0 %v39
    %1987 = vmatpush1.msra.mxu0 %v38
    %1988 = vmatprep.subr.mxu0 %v35
    %1989 = vmatpush1.msra.mxu0 %v34
    %1990 = vmatprep.subr.mxu0 0.0
    %1991 = vmatpush2.msra.mxu0 0.0
    %1992 = vmatprep.subr.mxu0 0.0
    %1993 = vmatpush2.msra.mxu0 0.0
    %1994 = vmatprep.subr.mxu0 0.0
    %1995 = vmatpush2.msra.mxu0 0.0
    %1996 = vmatprep.subr.mxu0 0.0
    %1997 = vmatpush2.msra.mxu0 0.0
    %1998 = vmatprep.subr.mxu0 0.0
    %1999 = vmatpush2.msra.mxu0 0.0
    %2000 = vmatprep.subr.mxu0 0.0
    %2001 = vmatpush2.msra.mxu0 0.0
    %2002 = vmatprep.subr.mxu0 0.0
    %2003 = vmatpush2.msra.mxu0 0.0
    %2004 = vmatprep.subr.mxu0 0.0
    %2005 = vmatpush2.msra.mxu0 0.0
    %2006 = vmatprep.subr.mxu0 0.0
    %2007 = vmatpush2.msra.mxu0 0.0
    %2008 = vmatprep.subr.mxu0 0.0
    %2009 = vmatpush2.msra.mxu0 0.0
    %2010 = vmatprep.subr.mxu0 0.0
    %2011 = vmatpush2.msra.mxu0 0.0
    %2012 = vmatprep.subr.mxu0 0.0
    %2013 = vmatpush2.msra.mxu0 0.0
    %2014 = vmatprep.subr.mxu0 0.0
    %2015 = vmatpush2.msra.mxu0 0.0
    %2016 = vmatprep.subr.mxu0 0.0
    %2017 = vmatpush2.msra.mxu0 0.0
    %2018 = vmatprep.subr.mxu0 0.0
    %2019 = vmatpush2.msra.mxu0 0.0
    %2020 = vmatprep.subr.mxu0 0.0
    %2021 = vmatpush2.msra.mxu0 0.0
    %2022 = vmatprep.mubr.f32.mxu0 0.0
    %2023 = vmatmul.mubr.f32.gmra.mxu0 %v1953
    %v2024 = vpop.f32.mrf.mxu0
    %v2025 = vadd.f32 0.0, %v2024
    %v2026 = vpop.f32.mrf.mxu0
    %v2027 = vadd.f32 0.0, %v2026
    %2028 = vdwg.mxu0
    %2029 = vmatprep.subr.mxu0 %v97
    %2030 = vmatpush1.msra.mxu0 %v96
    %2031 = vmatprep.subr.mxu0 %v93
    %2032 = vmatpush1.msra.mxu0 %v92
    %2033 = vmatprep.subr.mxu0 %v89
    %2034 = vmatpush1.msra.mxu0 %v88
    %2035 = vmatprep.subr.mxu0 %v85
    %2036 = vmatpush1.msra.mxu0 %v84
    %2037 = vmatprep.subr.mxu0 %v81
    %2038 = vmatpush1.msra.mxu0 %v80
    %2039 = vmatprep.subr.mxu0 %v77
    %2040 = vmatpush1.msra.mxu0 %v76
    %2041 = vmatprep.subr.mxu0 %v73
    %2042 = vmatpush1.msra.mxu0 %v72
    %2043 = vmatprep.subr.mxu0 %v69
    %2044 = vmatpush1.msra.mxu0 %v68
    %2045 = vmatprep.subr.mxu0 %v65
    %2046 = vmatpush1.msra.mxu0 %v64
    %2047 = vmatprep.subr.mxu0 %v61
    %2048 = vmatpush1.msra.mxu0 %v60
    %2049 = vmatprep.subr.mxu0 %v57
    %2050 = vmatpush1.msra.mxu0 %v56
    %2051 = vmatprep.subr.mxu0 %v53
    %2052 = vmatpush1.msra.mxu0 %v52
    %2053 = vmatprep.subr.mxu0 %v49
    %2054 = vmatpush1.msra.mxu0 %v48
    %2055 = vmatprep.subr.mxu0 %v45
    %2056 = vmatpush1.msra.mxu0 %v44
    %2057 = vmatprep.subr.mxu0 %v41
    %2058 = vmatpush1.msra.mxu0 %v40
    %2059 = vmatprep.subr.mxu0 %v37
    %2060 = vmatpush1.msra.mxu0 %v36
    %2061 = vmatprep.subr.mxu0 0.0
    %2062 = vmatpush2.msra.mxu0 0.0
    %2063 = vmatprep.subr.mxu0 0.0
    %2064 = vmatpush2.msra.mxu0 0.0
    %2065 = vmatprep.subr.mxu0 0.0
    %2066 = vmatpush2.msra.mxu0 0.0
    %2067 = vmatprep.subr.mxu0 0.0
    %2068 = vmatpush2.msra.mxu0 0.0
    %2069 = vmatprep.subr.mxu0 0.0
    %2070 = vmatpush2.msra.mxu0 0.0
    %2071 = vmatprep.subr.mxu0 0.0
    %2072 = vmatpush2.msra.mxu0 0.0
    %2073 = vmatprep.subr.mxu0 0.0
    %2074 = vmatpush2.msra.mxu0 0.0
    %2075 = vmatprep.subr.mxu0 0.0
    %2076 = vmatpush2.msra.mxu0 0.0
    %2077 = vmatprep.subr.mxu0 0.0
    %2078 = vmatpush2.msra.mxu0 0.0
    %2079 = vmatprep.subr.mxu0 0.0
    %2080 = vmatpush2.msra.mxu0 0.0
    %2081 = vmatprep.subr.mxu0 0.0
    %2082 = vmatpush2.msra.mxu0 0.0
    %2083 = vmatprep.subr.mxu0 0.0
    %2084 = vmatpush2.msra.mxu0 0.0
    %2085 = vmatprep.subr.mxu0 0.0
    %2086 = vmatpush2.msra.mxu0 0.0
    %2087 = vmatprep.subr.mxu0 0.0
    %2088 = vmatpush2.msra.mxu0 0.0
    %2089 = vmatprep.subr.mxu0 0.0
    %2090 = vmatpush2.msra.mxu0 0.0
    %2091 = vmatprep.subr.mxu0 0.0
    %2092 = vmatpush2.msra.mxu0 0.0
    %2093 = vmatprep.mubr.f32.mxu0 0.0
    %2094 = vmatmul.mubr.f32.gmra.mxu0 %v1953
    %v2095 = vpop.f32.mrf.mxu0
    %v2096 = vadd.f32 0.0, %v2095
    %v2097 = vpop.f32.mrf.mxu0
    %v2098 = vadd.f32 0.0, %v2097
    %2099 = vdwg.mxu0
    %v2100 = vadd.f32 %v1954, %v2025
    %v2101 = vadd.f32 %v1955, %v2027
    %v2102 = vadd.f32 %v1956, %v2096
    %v2103 = vadd.f32 %v1957, %v2098
    %v2104 = vxor.u32 %v2100, 2147483648
    %v2105 = vmul.f32 %v2104, 1.442695
    %v2106 = vpow.pop %v2105
    %v2107 = vadd.f32 %v2106, 1.0
    %v2108 = vrcp.pop %v2107
    %v2109 = vmul.f32 1.0, %v2108
    %v2110 = vxor.u32 %v2101, 2147483648
    %v2111 = vmul.f32 %v2110, 1.442695
    %v2112 = vpow.pop %v2111
    %v2113 = vadd.f32 %v2112, 1.0
    %v2114 = vrcp.pop %v2113
    %v2115 = vmul.f32 1.0, %v2114
    %v2116 = vtanh.pop %v2102
    %v2117 = vxor.u32 %v2103, 2147483648
    %v2118 = vmul.f32 %v2117, 1.442695
    %v2119 = vpow.pop %v2118
    %v2120 = vadd.f32 %v2119, 1.0
    %v2121 = vrcp.pop %v2120
    %v2122 = vmul.f32 1.0, %v2121
    %v2123 = vmul.f32 %v2115, %v1951
    %v2124 = vmul.f32 %v2109, %v2116
    %v2125 = vadd.f32 %v2123, %v2124
    %v2126 = vtanh.pop %v2125
    %v2127 = vmul.f32 %v2122, %v2126
    %v2128 = vld [vmem:[%s1427] sm:$0xff]
    %v2129 = vld [vmem:[%s1427 + $0x8] sm:$0xff]
    %v2130 = vld [vmem:[%s1427 + $0x10] sm:$0xff]
    %v2131 = vld [vmem:[%s1427 + $0x18] sm:$0xff]
    %2132 = vmatprep.subr.mxu0 %v95
    %2133 = vmatpush1.msra.mxu0 %v94
    %2134 = vmatprep.subr.mxu0 %v91
    %2135 = vmatpush1.msra.mxu0 %v90
    %2136 = vmatprep.subr.mxu0 %v87
    %2137 = vmatpush1.msra.mxu0 %v86
    %2138 = vmatprep.subr.mxu0 %v83
    %2139 = vmatpush1.msra.mxu0 %v82
    %2140 = vmatprep.subr.mxu0 %v79
    %2141 = vmatpush1.msra.mxu0 %v78
    %2142 = vmatprep.subr.mxu0 %v75
    %2143 = vmatpush1.msra.mxu0 %v74
    %2144 = vmatprep.subr.mxu0 %v71
    %2145 = vmatpush1.msra.mxu0 %v70
    %2146 = vmatprep.subr.mxu0 %v67
    %2147 = vmatpush1.msra.mxu0 %v66
    %2148 = vmatprep.subr.mxu0 %v63
    %2149 = vmatpush1.msra.mxu0 %v62
    %2150 = vmatprep.subr.mxu0 %v59
    %2151 = vmatpush1.msra.mxu0 %v58
    %2152 = vmatprep.subr.mxu0 %v55
    %2153 = vmatpush1.msra.mxu0 %v54
    %2154 = vmatprep.subr.mxu0 %v51
    %2155 = vmatpush1.msra.mxu0 %v50
    %2156 = vmatprep.subr.mxu0 %v47
    %2157 = vmatpush1.msra.mxu0 %v46
    %2158 = vmatprep.subr.mxu0 %v43
    %2159 = vmatpush1.msra.mxu0 %v42
    %2160 = vmatprep.subr.mxu0 %v39
    %2161 = vmatpush1.msra.mxu0 %v38
    %2162 = vmatprep.subr.mxu0 %v35
    %2163 = vmatpush1.msra.mxu0 %v34
    %2164 = vmatprep.subr.mxu0 0.0
    %2165 = vmatpush2.msra.mxu0 0.0
    %2166 = vmatprep.subr.mxu0 0.0
    %2167 = vmatpush2.msra.mxu0 0.0
    %2168 = vmatprep.subr.mxu0 0.0
    %2169 = vmatpush2.msra.mxu0 0.0
    %2170 = vmatprep.subr.mxu0 0.0
    %2171 = vmatpush2.msra.mxu0 0.0
    %2172 = vmatprep.subr.mxu0 0.0
    %2173 = vmatpush2.msra.mxu0 0.0
    %2174 = vmatprep.subr.mxu0 0.0
    %2175 = vmatpush2.msra.mxu0 0.0
    %2176 = vmatprep.subr.mxu0 0.0
    %2177 = vmatpush2.msra.mxu0 0.0
    %2178 = vmatprep.subr.mxu0 0.0
    %2179 = vmatpush2.msra.mxu0 0.0
    %2180 = vmatprep.subr.mxu0 0.0
    %2181 = vmatpush2.msra.mxu0 0.0
    %2182 = vmatprep.subr.mxu0 0.0
    %2183 = vmatpush2.msra.mxu0 0.0
    %2184 = vmatprep.subr.mxu0 0.0
    %2185 = vmatpush2.msra.mxu0 0.0
    %2186 = vmatprep.subr.mxu0 0.0
    %2187 = vmatpush2.msra.mxu0 0.0
    %2188 = vmatprep.subr.mxu0 0.0
    %2189 = vmatpush2.msra.mxu0 0.0
    %2190 = vmatprep.subr.mxu0 0.0
    %2191 = vmatpush2.msra.mxu0 0.0
    %2192 = vmatprep.subr.mxu0 0.0
    %2193 = vmatpush2.msra.mxu0 0.0
    %2194 = vmatprep.subr.mxu0 0.0
    %2195 = vmatpush2.msra.mxu0 0.0
    %2196 = vmatprep.mubr.f32.mxu0 0.0
    %2197 = vmatmul.mubr.f32.gmra.mxu0 %v2127
    %v2198 = vpop.f32.mrf.mxu0
    %v2199 = vadd.f32 0.0, %v2198
    %v2200 = vpop.f32.mrf.mxu0
    %v2201 = vadd.f32 0.0, %v2200
    %2202 = vdwg.mxu0
    %2203 = vmatprep.subr.mxu0 %v97
    %2204 = vmatpush1.msra.mxu0 %v96
    %2205 = vmatprep.subr.mxu0 %v93
    %2206 = vmatpush1.msra.mxu0 %v92
    %2207 = vmatprep.subr.mxu0 %v89
    %2208 = vmatpush1.msra.mxu0 %v88
    %2209 = vmatprep.subr.mxu0 %v85
    %2210 = vmatpush1.msra.mxu0 %v84
    %2211 = vmatprep.subr.mxu0 %v81
    %2212 = vmatpush1.msra.mxu0 %v80
    %2213 = vmatprep.subr.mxu0 %v77
    %2214 = vmatpush1.msra.mxu0 %v76
    %2215 = vmatprep.subr.mxu0 %v73
    %2216 = vmatpush1.msra.mxu0 %v72
    %2217 = vmatprep.subr.mxu0 %v69
    %2218 = vmatpush1.msra.mxu0 %v68
    %2219 = vmatprep.subr.mxu0 %v65
    %2220 = vmatpush1.msra.mxu0 %v64
    %2221 = vmatprep.subr.mxu0 %v61
    %2222 = vmatpush1.msra.mxu0 %v60
    %2223 = vmatprep.subr.mxu0 %v57
    %2224 = vmatpush1.msra.mxu0 %v56
    %2225 = vmatprep.subr.mxu0 %v53
    %2226 = vmatpush1.msra.mxu0 %v52
    %2227 = vmatprep.subr.mxu0 %v49
    %2228 = vmatpush1.msra.mxu0 %v48
    %2229 = vmatprep.subr.mxu0 %v45
    %2230 = vmatpush1.msra.mxu0 %v44
    %2231 = vmatprep.subr.mxu0 %v41
    %2232 = vmatpush1.msra.mxu0 %v40
    %2233 = vmatprep.subr.mxu0 %v37
    %2234 = vmatpush1.msra.mxu0 %v36
    %2235 = vmatprep.subr.mxu0 0.0
    %2236 = vmatpush2.msra.mxu0 0.0
    %2237 = vmatprep.subr.mxu0 0.0
    %2238 = vmatpush2.msra.mxu0 0.0
    %2239 = vmatprep.subr.mxu0 0.0
    %2240 = vmatpush2.msra.mxu0 0.0
    %2241 = vmatprep.subr.mxu0 0.0
    %2242 = vmatpush2.msra.mxu0 0.0
    %2243 = vmatprep.subr.mxu0 0.0
    %2244 = vmatpush2.msra.mxu0 0.0
    %2245 = vmatprep.subr.mxu0 0.0
    %2246 = vmatpush2.msra.mxu0 0.0
    %2247 = vmatprep.subr.mxu0 0.0
    %2248 = vmatpush2.msra.mxu0 0.0
    %2249 = vmatprep.subr.mxu0 0.0
    %2250 = vmatpush2.msra.mxu0 0.0
    %2251 = vmatprep.subr.mxu0 0.0
    %2252 = vmatpush2.msra.mxu0 0.0
    %2253 = vmatprep.subr.mxu0 0.0
    %2254 = vmatpush2.msra.mxu0 0.0
    %2255 = vmatprep.subr.mxu0 0.0
    %2256 = vmatpush2.msra.mxu0 0.0
    %2257 = vmatprep.subr.mxu0 0.0
    %2258 = vmatpush2.msra.mxu0 0.0
    %2259 = vmatprep.subr.mxu0 0.0
    %2260 = vmatpush2.msra.mxu0 0.0
    %2261 = vmatprep.subr.mxu0 0.0
    %2262 = vmatpush2.msra.mxu0 0.0
    %2263 = vmatprep.subr.mxu0 0.0
    %2264 = vmatpush2.msra.mxu0 0.0
    %2265 = vmatprep.subr.mxu0 0.0
    %2266 = vmatpush2.msra.mxu0 0.0
    %2267 = vmatprep.mubr.f32.mxu0 0.0
    %2268 = vmatmul.mubr.f32.gmra.mxu0 %v2127
    %v2269 = vpop.f32.mrf.mxu0
    %v2270 = vadd.f32 0.0, %v2269
    %v2271 = vpop.f32.mrf.mxu0
    %v2272 = vadd.f32 0.0, %v2271
    %2273 = vdwg.mxu0
    %v2274 = vadd.f32 %v2128, %v2199
    %v2275 = vadd.f32 %v2129, %v2201
    %v2276 = vadd.f32 %v2130, %v2270
    %v2277 = vadd.f32 %v2131, %v2272
    %v2278 = vxor.u32 %v2274, 2147483648
    %v2279 = vmul.f32 %v2278, 1.442695
    %v2280 = vpow.pop %v2279
    %v2281 = vadd.f32 %v2280, 1.0
    %v2282 = vrcp.pop %v2281
    %v2283 = vmul.f32 1.0, %v2282
    %v2284 = vxor.u32 %v2275, 2147483648
    %v2285 = vmul.f32 %v2284, 1.442695
    %v2286 = vpow.pop %v2285
    %v2287 = vadd.f32 %v2286, 1.0
    %v2288 = vrcp.pop %v2287
    %v2289 = vmul.f32 1.0, %v2288
    %v2290 = vtanh.pop %v2276
    %v2291 = vxor.u32 %v2277, 2147483648
    %v2292 = vmul.f32 %v2291, 1.442695
    %v2293 = vpow.pop %v2292
    %v2294 = vadd.f32 %v2293, 1.0
    %v2295 = vrcp.pop %v2294
    %v2296 = vmul.f32 1.0, %v2295
    %v2297 = vmul.f32 %v2289, %v2125
    %v2298 = vmul.f32 %v2283, %v2290
    %v2299 = vadd.f32 %v2297, %v2298
    %v2300 = vtanh.pop %v2299
    %v2301 = vmul.f32 %v2296, %v2300
    %v2302 = vld [vmem:[%s1115] sm:$0xff]
    %v2303 = vld [vmem:[%s1115 + $0x8] sm:$0xff]
    %v2304 = vld [vmem:[%s1115 + $0x10] sm:$0xff]
    %v2305 = vld [vmem:[%s1115 + $0x18] sm:$0xff]
    %2306 = vmatprep.subr.mxu0 %v95
    %2307 = vmatpush1.msra.mxu0 %v94
    %2308 = vmatprep.subr.mxu0 %v91
    %2309 = vmatpush1.msra.mxu0 %v90
    %2310 = vmatprep.subr.mxu0 %v87
    %2311 = vmatpush1.msra.mxu0 %v86
    %2312 = vmatprep.subr.mxu0 %v83
    %2313 = vmatpush1.msra.mxu0 %v82
    %2314 = vmatprep.subr.mxu0 %v79
    %2315 = vmatpush1.msra.mxu0 %v78
    %2316 = vmatprep.subr.mxu0 %v75
    %2317 = vmatpush1.msra.mxu0 %v74
    %2318 = vmatprep.subr.mxu0 %v71
    %2319 = vmatpush1.msra.mxu0 %v70
    %2320 = vmatprep.subr.mxu0 %v67
    %2321 = vmatpush1.msra.mxu0 %v66
    %2322 = vmatprep.subr.mxu0 %v63
    %2323 = vmatpush1.msra.mxu0 %v62
    %2324 = vmatprep.subr.mxu0 %v59
    %2325 = vmatpush1.msra.mxu0 %v58
    %2326 = vmatprep.subr.mxu0 %v55
    %2327 = vmatpush1.msra.mxu0 %v54
    %2328 = vmatprep.subr.mxu0 %v51
    %2329 = vmatpush1.msra.mxu0 %v50
    %2330 = vmatprep.subr.mxu0 %v47
    %2331 = vmatpush1.msra.mxu0 %v46
    %2332 = vmatprep.subr.mxu0 %v43
    %2333 = vmatpush1.msra.mxu0 %v42
    %2334 = vmatprep.subr.mxu0 %v39
    %2335 = vmatpush1.msra.mxu0 %v38
    %2336 = vmatprep.subr.mxu0 %v35
    %2337 = vmatpush1.msra.mxu0 %v34
    %2338 = vmatprep.subr.mxu0 0.0
    %2339 = vmatpush2.msra.mxu0 0.0
    %2340 = vmatprep.subr.mxu0 0.0
    %2341 = vmatpush2.msra.mxu0 0.0
    %2342 = vmatprep.subr.mxu0 0.0
    %2343 = vmatpush2.msra.mxu0 0.0
    %2344 = vmatprep.subr.mxu0 0.0
    %2345 = vmatpush2.msra.mxu0 0.0
    %2346 = vmatprep.subr.mxu0 0.0
    %2347 = vmatpush2.msra.mxu0 0.0
    %2348 = vmatprep.subr.mxu0 0.0
    %2349 = vmatpush2.msra.mxu0 0.0
    %2350 = vmatprep.subr.mxu0 0.0
    %2351 = vmatpush2.msra.mxu0 0.0
    %2352 = vmatprep.subr.mxu0 0.0
    %2353 = vmatpush2.msra.mxu0 0.0
    %2354 = vmatprep.subr.mxu0 0.0
    %2355 = vmatpush2.msra.mxu0 0.0
    %2356 = vmatprep.subr.mxu0 0.0
    %2357 = vmatpush2.msra.mxu0 0.0
    %2358 = vmatprep.subr.mxu0 0.0
    %2359 = vmatpush2.msra.mxu0 0.0
    %2360 = vmatprep.subr.mxu0 0.0
    %2361 = vmatpush2.msra.mxu0 0.0
    %2362 = vmatprep.subr.mxu0 0.0
    %2363 = vmatpush2.msra.mxu0 0.0
    %2364 = vmatprep.subr.mxu0 0.0
    %2365 = vmatpush2.msra.mxu0 0.0
    %2366 = vmatprep.subr.mxu0 0.0
    %2367 = vmatpush2.msra.mxu0 0.0
    %2368 = vmatprep.subr.mxu0 0.0
    %2369 = vmatpush2.msra.mxu0 0.0
    %2370 = vmatprep.mubr.f32.mxu0 0.0
    %2371 = vmatmul.mubr.f32.gmra.mxu0 %v2301
    %v2372 = vpop.f32.mrf.mxu0
    %v2373 = vadd.f32 0.0, %v2372
    %v2374 = vpop.f32.mrf.mxu0
    %v2375 = vadd.f32 0.0, %v2374
    %2376 = vdwg.mxu0
    %2377 = vmatprep.subr.mxu0 %v97
    %2378 = vmatpush1.msra.mxu0 %v96
    %2379 = vmatprep.subr.mxu0 %v93
    %2380 = vmatpush1.msra.mxu0 %v92
    %2381 = vmatprep.subr.mxu0 %v89
    %2382 = vmatpush1.msra.mxu0 %v88
    %2383 = vmatprep.subr.mxu0 %v85
    %2384 = vmatpush1.msra.mxu0 %v84
    %2385 = vmatprep.subr.mxu0 %v81
    %2386 = vmatpush1.msra.mxu0 %v80
    %2387 = vmatprep.subr.mxu0 %v77
    %2388 = vmatpush1.msra.mxu0 %v76
    %2389 = vmatprep.subr.mxu0 %v73
    %2390 = vmatpush1.msra.mxu0 %v72
    %2391 = vmatprep.subr.mxu0 %v69
    %2392 = vmatpush1.msra.mxu0 %v68
    %2393 = vmatprep.subr.mxu0 %v65
    %2394 = vmatpush1.msra.mxu0 %v64
    %2395 = vmatprep.subr.mxu0 %v61
    %2396 = vmatpush1.msra.mxu0 %v60
    %2397 = vmatprep.subr.mxu0 %v57
    %2398 = vmatpush1.msra.mxu0 %v56
    %2399 = vmatprep.subr.mxu0 %v53
    %2400 = vmatpush1.msra.mxu0 %v52
    %2401 = vmatprep.subr.mxu0 %v49
    %2402 = vmatpush1.msra.mxu0 %v48
    %2403 = vmatprep.subr.mxu0 %v45
    %2404 = vmatpush1.msra.mxu0 %v44
    %2405 = vmatprep.subr.mxu0 %v41
    %2406 = vmatpush1.msra.mxu0 %v40
    %2407 = vmatprep.subr.mxu0 %v37
    %2408 = vmatpush1.msra.mxu0 %v36
    %2409 = vmatprep.subr.mxu0 0.0
    %2410 = vmatpush2.msra.mxu0 0.0
    %2411 = vmatprep.subr.mxu0 0.0
    %2412 = vmatpush2.msra.mxu0 0.0
    %2413 = vmatprep.subr.mxu0 0.0
    %2414 = vmatpush2.msra.mxu0 0.0
    %2415 = vmatprep.subr.mxu0 0.0
    %2416 = vmatpush2.msra.mxu0 0.0
    %2417 = vmatprep.subr.mxu0 0.0
    %2418 = vmatpush2.msra.mxu0 0.0
    %2419 = vmatprep.subr.mxu0 0.0
    %2420 = vmatpush2.msra.mxu0 0.0
    %2421 = vmatprep.subr.mxu0 0.0
    %2422 = vmatpush2.msra.mxu0 0.0
    %2423 = vmatprep.subr.mxu0 0.0
    %2424 = vmatpush2.msra.mxu0 0.0
    %2425 = vmatprep.subr.mxu0 0.0
    %2426 = vmatpush2.msra.mxu0 0.0
    %2427 = vmatprep.subr.mxu0 0.0
    %2428 = vmatpush2.msra.mxu0 0.0
    %2429 = vmatprep.subr.mxu0 0.0
    %2430 = vmatpush2.msra.mxu0 0.0
    %2431 = vmatprep.subr.mxu0 0.0
    %2432 = vmatpush2.msra.mxu0 0.0
    %2433 = vmatprep.subr.mxu0 0.0
    %2434 = vmatpush2.msra.mxu0 0.0
    %2435 = vmatprep.subr.mxu0 0.0
    %2436 = vmatpush2.msra.mxu0 0.0
    %2437 = vmatprep.subr.mxu0 0.0
    %2438 = vmatpush2.msra.mxu0 0.0
    %2439 = vmatprep.subr.mxu0 0.0
    %2440 = vmatpush2.msra.mxu0 0.0
    %2441 = vmatprep.mubr.f32.mxu0 0.0
    %2442 = vmatmul.mubr.f32.gmra.mxu0 %v2301
    %v2443 = vpop.f32.mrf.mxu0
    %v2444 = vadd.f32 0.0, %v2443
    %v2445 = vpop.f32.mrf.mxu0
    %v2446 = vadd.f32 0.0, %v2445
    %2447 = vdwg.mxu0
    %v2448 = vadd.f32 %v2302, %v2373
    %v2449 = vadd.f32 %v2303, %v2375
    %v2450 = vadd.f32 %v2304, %v2444
    %v2451 = vadd.f32 %v2305, %v2446
    %v2452 = vxor.u32 %v2448, 2147483648
    %v2453 = vmul.f32 %v2452, 1.442695
    %v2454 = vpow.pop %v2453
    %v2455 = vadd.f32 %v2454, 1.0
    %v2456 = vrcp.pop %v2455
    %v2457 = vmul.f32 1.0, %v2456
    %v2458 = vxor.u32 %v2449, 2147483648
    %v2459 = vmul.f32 %v2458, 1.442695
    %v2460 = vpow.pop %v2459
    %v2461 = vadd.f32 %v2460, 1.0
    %v2462 = vrcp.pop %v2461
    %v2463 = vmul.f32 1.0, %v2462
    %v2464 = vtanh.pop %v2450
    %v2465 = vxor.u32 %v2451, 2147483648
    %v2466 = vmul.f32 %v2465, 1.442695
    %v2467 = vpow.pop %v2466
    %v2468 = vadd.f32 %v2467, 1.0
    %v2469 = vrcp.pop %v2468
    %v2470 = vmul.f32 1.0, %v2469
    %v2471 = vmul.f32 %v2463, %v2299
    %v2472 = vmul.f32 %v2457, %v2464
    %v2473 = vadd.f32 %v2471, %v2472
    %v2474 = vtanh.pop %v2473
    %v2475 = vmul.f32 %v2470, %v2474
    %v2476 = vld [vmem:[%s803] sm:$0xff]
    %v2477 = vld [vmem:[%s803 + $0x8] sm:$0xff]
    %v2478 = vld [vmem:[%s803 + $0x10] sm:$0xff]
    %v2479 = vld [vmem:[%s803 + $0x18] sm:$0xff]
    %2480 = vmatprep.subr.mxu0 %v95
    %2481 = vmatpush1.msra.mxu0 %v94
    %2482 = vmatprep.subr.mxu0 %v91
    %2483 = vmatpush1.msra.mxu0 %v90
    %2484 = vmatprep.subr.mxu0 %v87
    %2485 = vmatpush1.msra.mxu0 %v86
    %2486 = vmatprep.subr.mxu0 %v83
    %2487 = vmatpush1.msra.mxu0 %v82
    %2488 = vmatprep.subr.mxu0 %v79
    %2489 = vmatpush1.msra.mxu0 %v78
    %2490 = vmatprep.subr.mxu0 %v75
    %2491 = vmatpush1.msra.mxu0 %v74
    %2492 = vmatprep.subr.mxu0 %v71
    %2493 = vmatpush1.msra.mxu0 %v70
    %2494 = vmatprep.subr.mxu0 %v67
    %2495 = vmatpush1.msra.mxu0 %v66
    %2496 = vmatprep.subr.mxu0 %v63
    %2497 = vmatpush1.msra.mxu0 %v62
    %2498 = vmatprep.subr.mxu0 %v59
    %2499 = vmatpush1.msra.mxu0 %v58
    %2500 = vmatprep.subr.mxu0 %v55
    %2501 = vmatpush1.msra.mxu0 %v54
    %2502 = vmatprep.subr.mxu0 %v51
    %2503 = vmatpush1.msra.mxu0 %v50
    %2504 = vmatprep.subr.mxu0 %v47
    %2505 = vmatpush1.msra.mxu0 %v46
    %2506 = vmatprep.subr.mxu0 %v43
    %2507 = vmatpush1.msra.mxu0 %v42
    %2508 = vmatprep.subr.mxu0 %v39
    %2509 = vmatpush1.msra.mxu0 %v38
    %2510 = vmatprep.subr.mxu0 %v35
    %2511 = vmatpush1.msra.mxu0 %v34
    %2512 = vmatprep.subr.mxu0 0.0
    %2513 = vmatpush2.msra.mxu0 0.0
    %2514 = vmatprep.subr.mxu0 0.0
    %2515 = vmatpush2.msra.mxu0 0.0
    %2516 = vmatprep.subr.mxu0 0.0
    %2517 = vmatpush2.msra.mxu0 0.0
    %2518 = vmatprep.subr.mxu0 0.0
    %2519 = vmatpush2.msra.mxu0 0.0
    %2520 = vmatprep.subr.mxu0 0.0
    %2521 = vmatpush2.msra.mxu0 0.0
    %2522 = vmatprep.subr.mxu0 0.0
    %2523 = vmatpush2.msra.mxu0 0.0
    %2524 = vmatprep.subr.mxu0 0.0
    %2525 = vmatpush2.msra.mxu0 0.0
    %2526 = vmatprep.subr.mxu0 0.0
    %2527 = vmatpush2.msra.mxu0 0.0
    %2528 = vmatprep.subr.mxu0 0.0
    %2529 = vmatpush2.msra.mxu0 0.0
    %2530 = vmatprep.subr.mxu0 0.0
    %2531 = vmatpush2.msra.mxu0 0.0
    %2532 = vmatprep.subr.mxu0 0.0
    %2533 = vmatpush2.msra.mxu0 0.0
    %2534 = vmatprep.subr.mxu0 0.0
    %2535 = vmatpush2.msra.mxu0 0.0
    %2536 = vmatprep.subr.mxu0 0.0
    %2537 = vmatpush2.msra.mxu0 0.0
    %2538 = vmatprep.subr.mxu0 0.0
    %2539 = vmatpush2.msra.mxu0 0.0
    %2540 = vmatprep.subr.mxu0 0.0
    %2541 = vmatpush2.msra.mxu0 0.0
    %2542 = vmatprep.subr.mxu0 0.0
    %2543 = vmatpush2.msra.mxu0 0.0
    %2544 = vmatprep.mubr.f32.mxu0 0.0
    %2545 = vmatmul.mubr.f32.gmra.mxu0 %v2475
    %v2546 = vpop.f32.mrf.mxu0
    %v2547 = vadd.f32 0.0, %v2546
    %v2548 = vpop.f32.mrf.mxu0
    %v2549 = vadd.f32 0.0, %v2548
    %2550 = vdwg.mxu0
    %2551 = vmatprep.subr.mxu0 %v97
    %2552 = vmatpush1.msra.mxu0 %v96
    %2553 = vmatprep.subr.mxu0 %v93
    %2554 = vmatpush1.msra.mxu0 %v92
    %2555 = vmatprep.subr.mxu0 %v89
    %2556 = vmatpush1.msra.mxu0 %v88
    %2557 = vmatprep.subr.mxu0 %v85
    %2558 = vmatpush1.msra.mxu0 %v84
    %2559 = vmatprep.subr.mxu0 %v81
    %2560 = vmatpush1.msra.mxu0 %v80
    %2561 = vmatprep.subr.mxu0 %v77
    %2562 = vmatpush1.msra.mxu0 %v76
    %2563 = vmatprep.subr.mxu0 %v73
    %2564 = vmatpush1.msra.mxu0 %v72
    %2565 = vmatprep.subr.mxu0 %v69
    %2566 = vmatpush1.msra.mxu0 %v68
    %2567 = vmatprep.subr.mxu0 %v65
    %2568 = vmatpush1.msra.mxu0 %v64
    %2569 = vmatprep.subr.mxu0 %v61
    %2570 = vmatpush1.msra.mxu0 %v60
    %2571 = vmatprep.subr.mxu0 %v57
    %2572 = vmatpush1.msra.mxu0 %v56
    %2573 = vmatprep.subr.mxu0 %v53
    %2574 = vmatpush1.msra.mxu0 %v52
    %2575 = vmatprep.subr.mxu0 %v49
    %2576 = vmatpush1.msra.mxu0 %v48
    %2577 = vmatprep.subr.mxu0 %v45
    %2578 = vmatpush1.msra.mxu0 %v44
    %2579 = vmatprep.subr.mxu0 %v41
    %2580 = vmatpush1.msra.mxu0 %v40
    %2581 = vmatprep.subr.mxu0 %v37
    %2582 = vmatpush1.msra.mxu0 %v36
    %2583 = vmatprep.subr.mxu0 0.0
    %2584 = vmatpush2.msra.mxu0 0.0
    %2585 = vmatprep.subr.mxu0 0.0
    %2586 = vmatpush2.msra.mxu0 0.0
    %2587 = vmatprep.subr.mxu0 0.0
    %2588 = vmatpush2.msra.mxu0 0.0
    %2589 = vmatprep.subr.mxu0 0.0
    %2590 = vmatpush2.msra.mxu0 0.0
    %2591 = vmatprep.subr.mxu0 0.0
    %2592 = vmatpush2.msra.mxu0 0.0
    %2593 = vmatprep.subr.mxu0 0.0
    %2594 = vmatpush2.msra.mxu0 0.0
    %2595 = vmatprep.subr.mxu0 0.0
    %2596 = vmatpush2.msra.mxu0 0.0
    %2597 = vmatprep.subr.mxu0 0.0
    %2598 = vmatpush2.msra.mxu0 0.0
    %2599 = vmatprep.subr.mxu0 0.0
    %2600 = vmatpush2.msra.mxu0 0.0
    %2601 = vmatprep.subr.mxu0 0.0
    %2602 = vmatpush2.msra.mxu0 0.0
    %2603 = vmatprep.subr.mxu0 0.0
    %2604 = vmatpush2.msra.mxu0 0.0
    %2605 = vmatprep.subr.mxu0 0.0
    %2606 = vmatpush2.msra.mxu0 0.0
    %2607 = vmatprep.subr.mxu0 0.0
    %2608 = vmatpush2.msra.mxu0 0.0
    %2609 = vmatprep.subr.mxu0 0.0
    %2610 = vmatpush2.msra.mxu0 0.0
    %2611 = vmatprep.subr.mxu0 0.0
    %2612 = vmatpush2.msra.mxu0 0.0
    %2613 = vmatprep.subr.mxu0 0.0
    %2614 = vmatpush2.msra.mxu0 0.0
    %2615 = vmatprep.mubr.f32.mxu0 0.0
    %2616 = vmatmul.mubr.f32.gmra.mxu0 %v2475
    %v2617 = vpop.f32.mrf.mxu0
    %v2618 = vadd.f32 0.0, %v2617
    %v2619 = vpop.f32.mrf.mxu0
    %v2620 = vadd.f32 0.0, %v2619
    %2621 = vdwg.mxu0
    %v2622 = vadd.f32 %v2476, %v2547
    %v2623 = vadd.f32 %v2477, %v2549
    %v2624 = vadd.f32 %v2478, %v2618
    %v2625 = vadd.f32 %v2479, %v2620
    %v2626 = vxor.u32 %v2622, 2147483648
    %v2627 = vmul.f32 %v2626, 1.442695
    %v2628 = vpow.pop %v2627
    %v2629 = vadd.f32 %v2628, 1.0
    %v2630 = vrcp.pop %v2629
    %v2631 = vmul.f32 1.0, %v2630
    %v2632 = vxor.u32 %v2623, 2147483648
    %v2633 = vmul.f32 %v2632, 1.442695
    %v2634 = vpow.pop %v2633
    %v2635 = vadd.f32 %v2634, 1.0
    %v2636 = vrcp.pop %v2635
    %v2637 = vmul.f32 1.0, %v2636
    %v2638 = vtanh.pop %v2624
    %v2639 = vxor.u32 %v2625, 2147483648
    %v2640 = vmul.f32 %v2639, 1.442695
    %v2641 = vpow.pop %v2640
    %v2642 = vadd.f32 %v2641, 1.0
    %v2643 = vrcp.pop %v2642
    %v2644 = vmul.f32 1.0, %v2643
    %v2645 = vmul.f32 %v2637, %v2473
    %v2646 = vmul.f32 %v2631, %v2638
    %v2647 = vadd.f32 %v2645, %v2646
    %v2648 = vtanh.pop %v2647
    %v2649 = vmul.f32 %v2644, %v2648
    %v2650 = vld [vmem:[%s491] sm:$0xff]
    %v2651 = vld [vmem:[%s491 + $0x8] sm:$0xff]
    %v2652 = vld [vmem:[%s491 + $0x10] sm:$0xff]
    %v2653 = vld [vmem:[%s491 + $0x18] sm:$0xff]
    %2654 = vmatprep.subr.mxu0 %v95
    %2655 = vmatpush1.msra.mxu0 %v94
    %2656 = vmatprep.subr.mxu0 %v91
    %2657 = vmatpush1.msra.mxu0 %v90
    %2658 = vmatprep.subr.mxu0 %v87
    %2659 = vmatpush1.msra.mxu0 %v86
    %2660 = vmatprep.subr.mxu0 %v83
    %2661 = vmatpush1.msra.mxu0 %v82
    %2662 = vmatprep.subr.mxu0 %v79
    %2663 = vmatpush1.msra.mxu0 %v78
    %2664 = vmatprep.subr.mxu0 %v75
    %2665 = vmatpush1.msra.mxu0 %v74
    %2666 = vmatprep.subr.mxu0 %v71
    %2667 = vmatpush1.msra.mxu0 %v70
    %2668 = vmatprep.subr.mxu0 %v67
    %2669 = vmatpush1.msra.mxu0 %v66
    %2670 = vmatprep.subr.mxu0 %v63
    %2671 = vmatpush1.msra.mxu0 %v62
    %2672 = vmatprep.subr.mxu0 %v59
    %2673 = vmatpush1.msra.mxu0 %v58
    %2674 = vmatprep.subr.mxu0 %v55
    %2675 = vmatpush1.msra.mxu0 %v54
    %2676 = vmatprep.subr.mxu0 %v51
    %2677 = vmatpush1.msra.mxu0 %v50
    %2678 = vmatprep.subr.mxu0 %v47
    %2679 = vmatpush1.msra.mxu0 %v46
    %2680 = vmatprep.subr.mxu0 %v43
    %2681 = vmatpush1.msra.mxu0 %v42
    %2682 = vmatprep.subr.mxu0 %v39
    %2683 = vmatpush1.msra.mxu0 %v38
    %2684 = vmatprep.subr.mxu0 %v35
    %2685 = vmatpush1.msra.mxu0 %v34
    %2686 = vmatprep.subr.mxu0 0.0
    %2687 = vmatpush2.msra.mxu0 0.0
    %2688 = vmatprep.subr.mxu0 0.0
    %2689 = vmatpush2.msra.mxu0 0.0
    %2690 = vmatprep.subr.mxu0 0.0
    %2691 = vmatpush2.msra.mxu0 0.0
    %2692 = vmatprep.subr.mxu0 0.0
    %2693 = vmatpush2.msra.mxu0 0.0
    %2694 = vmatprep.subr.mxu0 0.0
    %2695 = vmatpush2.msra.mxu0 0.0
    %2696 = vmatprep.subr.mxu0 0.0
    %2697 = vmatpush2.msra.mxu0 0.0
    %2698 = vmatprep.subr.mxu0 0.0
    %2699 = vmatpush2.msra.mxu0 0.0
    %2700 = vmatprep.subr.mxu0 0.0
    %2701 = vmatpush2.msra.mxu0 0.0
    %2702 = vmatprep.subr.mxu0 0.0
    %2703 = vmatpush2.msra.mxu0 0.0
    %2704 = vmatprep.subr.mxu0 0.0
    %2705 = vmatpush2.msra.mxu0 0.0
    %2706 = vmatprep.subr.mxu0 0.0
    %2707 = vmatpush2.msra.mxu0 0.0
    %2708 = vmatprep.subr.mxu0 0.0
    %2709 = vmatpush2.msra.mxu0 0.0
    %2710 = vmatprep.subr.mxu0 0.0
    %2711 = vmatpush2.msra.mxu0 0.0
    %2712 = vmatprep.subr.mxu0 0.0
    %2713 = vmatpush2.msra.mxu0 0.0
    %2714 = vmatprep.subr.mxu0 0.0
    %2715 = vmatpush2.msra.mxu0 0.0
    %2716 = vmatprep.subr.mxu0 0.0
    %2717 = vmatpush2.msra.mxu0 0.0
    %2718 = vmatprep.mubr.f32.mxu0 0.0
    %2719 = vmatmul.mubr.f32.gmra.mxu0 %v2649
    %v2720 = vpop.f32.mrf.mxu0
    %v2721 = vadd.f32 0.0, %v2720
    %v2722 = vpop.f32.mrf.mxu0
    %v2723 = vadd.f32 0.0, %v2722
    %2724 = vdwg.mxu0
    %2725 = vmatprep.subr.mxu0 %v97
    %2726 = vmatpush1.msra.mxu0 %v96
    %2727 = vmatprep.subr.mxu0 %v93
    %2728 = vmatpush1.msra.mxu0 %v92
    %2729 = vmatprep.subr.mxu0 %v89
    %2730 = vmatpush1.msra.mxu0 %v88
    %2731 = vmatprep.subr.mxu0 %v85
    %2732 = vmatpush1.msra.mxu0 %v84
    %2733 = vmatprep.subr.mxu0 %v81
    %2734 = vmatpush1.msra.mxu0 %v80
    %2735 = vmatprep.subr.mxu0 %v77
    %2736 = vmatpush1.msra.mxu0 %v76
    %2737 = vmatprep.subr.mxu0 %v73
    %2738 = vmatpush1.msra.mxu0 %v72
    %2739 = vmatprep.subr.mxu0 %v69
    %2740 = vmatpush1.msra.mxu0 %v68
    %2741 = vmatprep.subr.mxu0 %v65
    %2742 = vmatpush1.msra.mxu0 %v64
    %2743 = vmatprep.subr.mxu0 %v61
    %2744 = vmatpush1.msra.mxu0 %v60
    %2745 = vmatprep.subr.mxu0 %v57
    %2746 = vmatpush1.msra.mxu0 %v56
    %2747 = vmatprep.subr.mxu0 %v53
    %2748 = vmatpush1.msra.mxu0 %v52
    %2749 = vmatprep.subr.mxu0 %v49
    %2750 = vmatpush1.msra.mxu0 %v48
    %2751 = vmatprep.subr.mxu0 %v45
    %2752 = vmatpush1.msra.mxu0 %v44
    %2753 = vmatprep.subr.mxu0 %v41
    %2754 = vmatpush1.msra.mxu0 %v40
    %2755 = vmatprep.subr.mxu0 %v37
    %2756 = vmatpush1.msra.mxu0 %v36
    %2757 = vmatprep.subr.mxu0 0.0
    %2758 = vmatpush2.msra.mxu0 0.0
    %2759 = vmatprep.subr.mxu0 0.0
    %2760 = vmatpush2.msra.mxu0 0.0
    %2761 = vmatprep.subr.mxu0 0.0
    %2762 = vmatpush2.msra.mxu0 0.0
    %2763 = vmatprep.subr.mxu0 0.0
    %2764 = vmatpush2.msra.mxu0 0.0
    %2765 = vmatprep.subr.mxu0 0.0
    %2766 = vmatpush2.msra.mxu0 0.0
    %2767 = vmatprep.subr.mxu0 0.0
    %2768 = vmatpush2.msra.mxu0 0.0
    %2769 = vmatprep.subr.mxu0 0.0
    %2770 = vmatpush2.msra.mxu0 0.0
    %2771 = vmatprep.subr.mxu0 0.0
    %2772 = vmatpush2.msra.mxu0 0.0
    %2773 = vmatprep.subr.mxu0 0.0
    %2774 = vmatpush2.msra.mxu0 0.0
    %2775 = vmatprep.subr.mxu0 0.0
    %2776 = vmatpush2.msra.mxu0 0.0
    %2777 = vmatprep.subr.mxu0 0.0
    %2778 = vmatpush2.msra.mxu0 0.0
    %2779 = vmatprep.subr.mxu0 0.0
    %2780 = vmatpush2.msra.mxu0 0.0
    %2781 = vmatprep.subr.mxu0 0.0
    %2782 = vmatpush2.msra.mxu0 0.0
    %2783 = vmatprep.subr.mxu0 0.0
    %2784 = vmatpush2.msra.mxu0 0.0
    %2785 = vmatprep.subr.mxu0 0.0
    %2786 = vmatpush2.msra.mxu0 0.0
    %2787 = vmatprep.subr.mxu0 0.0
    %2788 = vmatpush2.msra.mxu0 0.0
    %2789 = vmatprep.mubr.f32.mxu0 0.0
    %2790 = vmatmul.mubr.f32.gmra.mxu0 %v2649
    %v2791 = vpop.f32.mrf.mxu0
    %v2792 = vadd.f32 0.0, %v2791
    %v2793 = vpop.f32.mrf.mxu0
    %v2794 = vadd.f32 0.0, %v2793
    %2795 = vdwg.mxu0
    %v2796 = vadd.f32 %v2650, %v2721
    %v2797 = vadd.f32 %v2651, %v2723
    %v2798 = vadd.f32 %v2652, %v2792
    %v2799 = vadd.f32 %v2653, %v2794
    %v2800 = vxor.u32 %v2796, 2147483648
    %v2801 = vmul.f32 %v2800, 1.442695
    %v2802 = vpow.pop %v2801
    %v2803 = vadd.f32 %v2802, 1.0
    %v2804 = vrcp.pop %v2803
    %v2805 = vmul.f32 1.0, %v2804
    %v2806 = vxor.u32 %v2797, 2147483648
    %v2807 = vmul.f32 %v2806, 1.442695
    %v2808 = vpow.pop %v2807
    %v2809 = vadd.f32 %v2808, 1.0
    %v2810 = vrcp.pop %v2809
    %v2811 = vmul.f32 1.0, %v2810
    %v2812 = vtanh.pop %v2798
    %v2813 = vxor.u32 %v2799, 2147483648
    %v2814 = vmul.f32 %v2813, 1.442695
    %v2815 = vpow.pop %v2814
    %v2816 = vadd.f32 %v2815, 1.0
    %v2817 = vrcp.pop %v2816
    %v2818 = vmul.f32 1.0, %v2817
    %v2819 = vmul.f32 %v2811, %v2647
    %v2820 = vmul.f32 %v2805, %v2812
    %v2821 = vadd.f32 %v2819, %v2820
    %v2822 = vtanh.pop %v2821
    %v2823 = vmul.f32 %v2818, %v2822
    %2824 = vst [vmem:[#allocation3] sm:$0xff] %v2823
    // Predicated region
    $region18: #{lstm_sentence_encoder_parallel.1} parent=1 // pred_check
      _
    $region19: #{lstm_sentence_encoder_parallel.1} parent=1 // pred_check_branch
      %2826 = sbr.rel (0) target = $region21
    $region20: #{lstm_sentence_encoder_parallel.1} parent=1 // pred_region
      %s2828 = ssub.s32 128, 128
      %2829 = vsyncadd [#allocation4], %s2828
      %s2831 = sshll.u32 [#allocation3], 4
      %s2832 = int_to_ptr.vmem [resolvable:$true] %s2831
      %2834 = dma.vmem_to_hbm [thread:$0]  %s2832, 128, %s4, [#allocation4]
    $region21: #{lstm_sentence_encoder_parallel.1} parent=1 // pred_fallthru
      _
    // Predicated region
    $region22: #{lstm_sentence_encoder_parallel.1} parent=1 // pred_check
      _
    $region23: #{lstm_sentence_encoder_parallel.1} parent=1 // pred_check_branch
      %2836 = sbr.rel (0) target = $region25
    $region24: #{lstm_sentence_encoder_parallel.1} parent=1 // pred_region
      %2837 = dma.done [#allocation4], 128
    $region25: #{lstm_sentence_encoder_parallel.1} parent=1 // pred_fallthru
      _
    %2838 = vsyncpa [#allocation4], 1

</llo_original>
